<compile_context>
chip_gen: v5e
topology: v5e:2x2
jax: 0.10.0
libtpu: 0.0.40
codegen_flags: <defaults>
</compile_context>

<pallas_src>
import functools

import jax
import jax.numpy as jnp
from jax.experimental import pallas as pl
from jax.experimental.pallas import tpu as pltpu

L, D1, D2 = 1024, 512, 256   # 'small' size config of EDG_SB


def _round_up(x, m):
    return ((x + m - 1) // m) * m


# ---------------------------------------------------------------------------
# Kernel
# ---------------------------------------------------------------------------
def edg_sb_kernel(h_ref, w1_ref, b1_ref, wab_ref, bab_ref, wct_ref, bc_ref,
                  wcls_ref, bcls_ref,
                  logits_ref, yprob_ref, yhat_ref, arow_ref, m_ref,
                  m_s, l_s, macc_s, *, n_valid, tile_n):
    f32 = jnp.float32
    bf16 = jnp.bfloat16
    i = pl.program_id(0)

    @pl.when(i == 0)
    def _init():
        m_s[...] = jnp.full_like(m_s, -jnp.inf)
        l_s[...] = jnp.zeros_like(l_s)
        macc_s[...] = jnp.zeros_like(macc_s)

    # fc + ReLU:  (TN,1024) bf16 @ (1024,512) bf16 -> f32
    h1 = jnp.dot(h_ref[...], w1_ref[...], preferred_element_type=f32) + b1_ref[...]
    h1 = jnp.maximum(h1, 0.0)                                       # (TN, 512) f32

    # Zero-mask rows beyond the valid bag size.  The last (partial) h block has
    # unspecified contents past n_valid; zeroing h1 here guarantees those rows
    # cannot inject NaN/Inf into anything downstream (incl. p @ h1).
    row = i * tile_n + jax.lax.broadcasted_iota(jnp.int32, (h1.shape[0], 1), 0)
    h1 = jnp.where(row < n_valid, h1, 0.0)

    # Single bf16 copy of h1, reused for both the gated-attention matmul and
    # the M accumulation.
    h1b = h1.astype(bf16)                                           # (TN, 512) bf16

    # fused gated attention net: one (TN,512) @ (512,512) bf16 matmul
    ab = jnp.dot(h1b, wab_ref[...], preferred_element_type=f32) + bab_ref[...]
    a = jnp.tanh(ab[:, :D2])                                        # (TN, 256) f32
    b = jax.nn.sigmoid(ab[:, D2:])                                  # (TN, 256) f32
    gated = (a * b).astype(bf16)   # bf16 -> halves the XLU transpose below

    # attention scores, lane-dense row: (1,256) . (TN,256)^T -> (1, TN)
    # (contracts over gated's lane dim; bf16 operands keep XLU traffic low)
    att = jnp.einsum("od,nd->on", wct_ref[...], gated,
                     preferred_element_type=f32) + bc_ref[...]      # (1, TN) f32
    arow_ref[...] = att    # raw A (pre-softmax); padded cols hold bias-only values

    # mask padded instances (cols >= n_valid) for the softmax
    col = i * tile_n + jax.lax.broadcasted_iota(jnp.int32, att.shape, 1)
    att = jnp.where(col < n_valid, att, -jnp.inf)

    # online softmax over the bag dim + M = A^T h1 accumulation (f32 stats)
    m_new = jnp.maximum(m_s[...], jnp.max(att, axis=1, keepdims=True))   # (1,1)
    alpha = jnp.exp(m_s[...] - m_new)
    p = jnp.exp(att - m_new)                                             # (1, TN) f32
    l_s[...] = alpha * l_s[...] + jnp.sum(p, axis=1, keepdims=True)
    macc_s[...] = alpha * macc_s[...] + jnp.dot(p.astype(bf16), h1b,
                                                preferred_element_type=f32)
    m_s[...] = m_new

    # finalize on the last tile
    @pl.when(i == pl.num_programs(0) - 1)
    def _final():
        M = macc_s[...] / l_s[...]                                   # (1, 512)
        m_ref[...] = M
        logits = jnp.dot(M, wcls_ref[...], preferred_element_type=f32) + bcls_ref[...]
        logits_ref[...] = logits                                     # (1, C)

        lmax = jnp.max(logits, axis=1, keepdims=True)
        lexp = jnp.exp(logits - lmax)
        yprob_ref[...] = lexp / jnp.sum(lexp, axis=1, keepdims=True)

        # torch.topk(logits, 1, dim=1)[1] -> first max index (int32 here)
        ncls = logits.shape[1]
        idx = jax.lax.broadcasted_iota(jnp.int32, logits.shape, 1)
        yhat_ref[...] = jnp.min(jnp.where(logits >= lmax, idx, ncls),
                                axis=1, keepdims=True)


# ---------------------------------------------------------------------------
# Wrapper
# ---------------------------------------------------------------------------
@functools.partial(jax.jit, static_argnames=("n_classes", "tile_n"))
def edg_sb_forward(h, kp, n_classes=4, tile_n=512):
    """Returns (logits, Y_prob, Y_hat, A_raw, M) matching the torch module.

    h should be stored in bf16 by the producer (any other dtype is cast once
    here); it is streamed unpadded — the ragged tail is masked in-kernel.
    """
    N = h.shape[0]
    if h.dtype != jnp.bfloat16:
        h = h.astype(jnp.bfloat16)          # no-op when producer already emits bf16

    # Effective tile: big (512 default) but clamped for tiny bags. Multiple of
    # 128 keeps blocks MXU/lane aligned and bf16-tile friendly.
    tile = min(tile_n, _round_up(N, 128))
    n_tiles = pl.cdiv(N, tile)
    n_pad = n_tiles * tile

    const = lambda i: (0, 0)
    in_specs = [
        pl.BlockSpec((tile, L), lambda i: (i, 0)),     # h: streamed / double-buffered
        pl.BlockSpec((L, D1), const),                  # W1 (bf16, VMEM-resident)
        pl.BlockSpec((1, D1), const),                  # b1
        pl.BlockSpec((D1, 2 * D2), const),             # [Wa | Wb] fused (bf16)
        pl.BlockSpec((1, 2 * D2), const),              # [ba | bb]
        pl.BlockSpec((1, D2), const),                  # Wc^T row (bf16)
        pl.BlockSpec((1, 1), const),                   # bc
        pl.BlockSpec((D1, n_classes), const),          # Wcls
        pl.BlockSpec((1, n_classes), const),           # bcls
    ]
    # TODO(synk): mark the constant-index weight specs with
    # pipeline_mode=pl.Buffered(1) to drop their unused second buffer (v7x
    # VMEM headroom) once validated on the target jax version.
    out_shape = (
        jax.ShapeDtypeStruct((1, n_classes), jnp.float32),   # logits
        jax.ShapeDtypeStruct((1, n_classes), jnp.float32),   # Y_prob
        jax.ShapeDtypeStruct((1, 1), jnp.int32),             # Y_hat (int32; torch -> int64)
        jax.ShapeDtypeStruct((1, n_pad), jnp.float32),       # A_raw (lane-dense row)
        jax.ShapeDtypeStruct((1, D1), jnp.float32),          # M
    )
    out_specs = (
        pl.BlockSpec((1, n_classes), const),
        pl.BlockSpec((1, n_classes), const),
        pl.BlockSpec((1, 1), const),
        pl.BlockSpec((1, tile), lambda i: (0, i)),
        pl.BlockSpec((1, D1), const),
    )
    scratch_shapes = [
        pltpu.VMEM((1, 1), jnp.float32),    # running max
        pltpu.VMEM((1, 1), jnp.float32),    # running denominator
        pltpu.VMEM((1, D1), jnp.float32),   # M accumulator
    ]

    flops = 2 * n_pad * (L * D1 + D1 * 2 * D2 + D2 + D1) + 2 * D1 * n_classes
    bytes_accessed = (
        n_pad * L * 2                              # h (bf16, single pass — no pad copy)
        + (L * D1 + D1 * 2 * D2 + D2) * 2          # bf16 weights
        + (D1 + 2 * D2 + 1 + D1 * n_classes + n_classes) * 4   # f32 params
        + (2 * n_classes + 1 + n_pad + D1) * 4     # outputs
    )

    kernel = functools.partial(edg_sb_kernel, n_valid=N, tile_n=tile)
    logits, y_prob, y_hat, a_row, M = pl.pallas_call(
        kernel,
        grid=(n_tiles,),
        in_specs=in_specs,
        out_specs=out_specs,
        out_shape=out_shape,
        scratch_shapes=scratch_shapes,
        compiler_params=pltpu.CompilerParams(
            dimension_semantics=("arbitrary",),    # online-softmax reduction axis
            vmem_limit_bytes=32 << 20,             # TN=512 working set ~12 MiB
        ),
        cost_estimate=pl.CostEstimate(
            flops=flops,
            transcendentals=n_pad * (2 * D2 + 1) + n_classes,
            bytes_accessed=bytes_accessed,
        ),
    )(h, kp["w1"], kp["b1"], kp["wab"], kp["bab"], kp["wct"], kp["bc"],
      kp["wcls"], kp["bcls"])

    return logits, y_prob, y_hat, a_row[:, :N], M
    # TODO(synk): for scoring many bags at once, add a leading "parallel" bag
    # grid axis (per-bag scratch/outputs) — amortizes weight DMA and uses
    # v7x's second TensorCore.


# ---------------------------------------------------------------------------
# Parameter init (xavier_normal_ weights, zero biases) + kernel-layout prep
# ---------------------------------------------------------------------------
def xavier_normal(key, fan_in, fan_out):
    std = (2.0 / (fan_in + fan_out)) ** 0.5
    return jax.random.normal(key, (fan_in, fan_out), jnp.float32) * std


def init_params(key, n_classes=4):
    ks = jax.random.split(key, 5)
    return {
        "w1":   xavier_normal(ks[0], L, D1),   "b1": jnp.zeros((1, D1), jnp.float32),
        "wa":   xavier_normal(ks[1], D1, D2),  "ba": jnp.zeros((1, D2), jnp.float32),
        "wb":   xavier_normal(ks[2], D1, D2),  "bb": jnp.zeros((1, D2), jnp.float32),
        "wc":   xavier_normal(ks[3], D2, 1),   "bc": jnp.zeros((1, 1), jnp.float32),
        "wcls": xavier_normal(ks[4], D1, n_classes),
        "bcls": jnp.zeros((1, n_classes), jnp.float32),
    }


def prepare_params(p):
    """One-time repack: fuse Wa|Wb, cast big weights (and Wc^T) to bf16."""
    return {
        "w1":   p["w1"].astype(jnp.bfloat16),
        "b1":   p["b1"],
        "wab":  jnp.concatenate([p["wa"], p["wb"]], axis=1).astype(jnp.bfloat16),
        "bab":  jnp.concatenate([p["ba"], p["bb"]], axis=1),
        "wct":  p["wc"].T.astype(jnp.bfloat16),      # (1, D2)
        "bc":   p["bc"],
        "wcls": p["wcls"],
        "bcls": p["bcls"],
    }


# ---------------------------------------------------------------------------
# Pure-JAX reference (mirrors the kernel's bf16 storage precision)
# ---------------------------------------------------------------------------
def edg_sb_reference(h_bf16, p):
    hi = jax.lax.Precision.HIGHEST
    f32 = jnp.float32
    bf = lambda x: x.astype(jnp.bfloat16).astype(f32)
    h = h_bf16.astype(f32)
    h1 = jnp.maximum(jnp.dot(h, bf(p["w1"]), precision=hi) + p["b1"], 0.0)
    h1b = bf(h1)
    a = jnp.tanh(jnp.dot(h1b, bf(p["wa"]), precision=hi) + p["ba"])
    b = jax.nn.sigmoid(jnp.dot(h1b, bf(p["wb"]), precision=hi) + p["bb"])
    att = jnp.dot(bf(a * b), bf(p["wc"]), precision=hi) + p["bc"]
    A_raw = att.T
    A = jax.nn.softmax(A_raw, axis=1)
    M = jnp.dot(bf(A), h1b, precision=hi)
    logits = jnp.dot(M, p["wcls"], precision=hi) + p["bcls"]
    return logits, jax.nn.softmax(logits, axis=1), A_raw, M


if __name__ == "__main__":
    key = jax.random.PRNGKey(0)
    k_param, k_x1, k_x2, k_x3 = jax.random.split(key, 4)

    n_classes = 4
    params = init_params(k_param, n_classes=n_classes)
    kparams = prepare_params(params)

    # Bag sizes: tiny (single small block), ragged single block, multi-tile
    # with a ragged tail.  h is produced directly in bf16 (no wrapper pad/cast).
    for N, kx in ((8, k_x1), (333, k_x2), (600, k_x3)):
        h = jax.random.normal(kx, (N, L), jnp.bfloat16)
        outs = edg_sb_forward(h, kparams, n_classes=n_classes)
        jax.block_until_ready(outs)
        logits, y_prob, y_hat, a_raw, M = outs

        r_logits, r_prob, r_araw, r_M = edg_sb_reference(h, params)
        assert a_raw.shape == (1, N)
        assert bool(jnp.all(jnp.isfinite(a_raw)))
        assert jnp.allclose(logits, r_logits, atol=1e-2, rtol=1e-2)
        assert jnp.allclose(y_prob, r_prob, atol=1e-2, rtol=1e-2)
        assert jnp.allclose(a_raw, r_araw, atol=1e-2, rtol=1e-2)
        assert jnp.allclose(M, r_M, atol=1e-2, rtol=1e-2)
        assert int(y_hat[0, 0]) == int(jnp.argmax(logits, axis=1)[0])

    print("KERNEL_OK")
</pallas_src>

<mosaic_0001>
module attributes {stable_mosaic.version = 11 : i64} {
  func.func @edg_sb_kernel(%arg0: i32, %arg1: memref<128x1024xbf16, #tpu.memory_space<vmem>>, %arg2: memref<1024x512xbf16, #tpu.memory_space<vmem>>, %arg3: memref<1x512xf32, #tpu.memory_space<vmem>>, %arg4: memref<512x512xbf16, #tpu.memory_space<vmem>>, %arg5: memref<1x512xf32, #tpu.memory_space<vmem>>, %arg6: memref<1x256xbf16, #tpu.memory_space<vmem>>, %arg7: memref<1x1xf32, #tpu.memory_space<vmem>>, %arg8: memref<512x4xf32, #tpu.memory_space<vmem>>, %arg9: memref<1x4xf32, #tpu.memory_space<vmem>>, %arg10: memref<1x4xf32, #tpu.memory_space<vmem>>, %arg11: memref<1x4xf32, #tpu.memory_space<vmem>>, %arg12: memref<1x1xi32, #tpu.memory_space<vmem>>, %arg13: memref<1x128xf32, #tpu.memory_space<vmem>>, %arg14: memref<1x512xf32, #tpu.memory_space<vmem>>, %arg15: memref<1x1xf32, #tpu.memory_space<vmem>>, %arg16: memref<1x1xf32, #tpu.memory_space<vmem>>, %arg17: memref<1x512xf32, #tpu.memory_space<vmem>>) attributes {dimension_semantics = [#tpu.dimension_semantics<arbitrary>], iteration_bounds = array<i64: 1>, scalar_prefetch = 0 : i64, scratch_operands = 3 : i64, tpu.core_type = #tpu.core_type<tc>, window_params = [{transform_indices = @transform_0, window_bounds = array<i64: 128, 1024>}, {pipeline_mode = #tpu.pipeline_mode<synchronous>, transform_indices = @transform_1, window_bounds = array<i64: 1024, 512>}, {pipeline_mode = #tpu.pipeline_mode<synchronous>, transform_indices = @transform_2, window_bounds = array<i64: 1, 512>}, {pipeline_mode = #tpu.pipeline_mode<synchronous>, transform_indices = @transform_3, window_bounds = array<i64: 512, 512>}, {pipeline_mode = #tpu.pipeline_mode<synchronous>, transform_indices = @transform_4, window_bounds = array<i64: 1, 512>}, {pipeline_mode = #tpu.pipeline_mode<synchronous>, transform_indices = @transform_5, window_bounds = array<i64: 1, 256>}, {pipeline_mode = #tpu.pipeline_mode<synchronous>, transform_indices = @transform_6, window_bounds = array<i64: 1, 1>}, {pipeline_mode = #tpu.pipeline_mode<synchronous>, transform_indices = @transform_7, window_bounds = array<i64: 512, 4>}, {pipeline_mode = #tpu.pipeline_mode<synchronous>, transform_indices = @transform_8, window_bounds = array<i64: 1, 4>}, {pipeline_mode = #tpu.pipeline_mode<synchronous>, transform_indices = @transform_9, window_bounds = array<i64: 1, 4>}, {pipeline_mode = #tpu.pipeline_mode<synchronous>, transform_indices = @transform_10, window_bounds = array<i64: 1, 4>}, {pipeline_mode = #tpu.pipeline_mode<synchronous>, transform_indices = @transform_11, window_bounds = array<i64: 1, 1>}, {transform_indices = @transform_12, window_bounds = array<i64: 1, 128>}, {pipeline_mode = #tpu.pipeline_mode<synchronous>, transform_indices = @transform_13, window_bounds = array<i64: 1, 512>}]} {
    %c0_i32 = arith.constant 0 : i32
    %0 = arith.cmpi eq, %arg0, %c0_i32 : i32
    %1 = arith.extui %0 : i1 to i32
    %c0_i32_0 = arith.constant 0 : i32
    %2 = arith.cmpi ne, %1, %c0_i32_0 : i32
    scf.if %2 {
      %cst_43 = arith.constant 0xFF800000 : f32
      %78 = vector.broadcast %cst_43 : f32 to vector<1x1xf32>
      %c0_44 = arith.constant 0 : index
      %c0_45 = arith.constant 0 : index
      %79 = vector.load %arg15[%c0_44, %c0_45] : memref<1x1xf32, #tpu.memory_space<vmem>>, vector<1x1xf32>
      tpu.vector_store %arg15[%c0_44, %c0_45], %78 {strides = array<i32>} : memref<1x1xf32, #tpu.memory_space<vmem>>, vector<1x1xf32>,
      %cst_46 = arith.constant 0.000000e+00 : f32
      %80 = vector.broadcast %cst_46 : f32 to vector<1x1xf32>
      %c0_47 = arith.constant 0 : index
      %c0_48 = arith.constant 0 : index
      %81 = vector.load %arg16[%c0_47, %c0_48] : memref<1x1xf32, #tpu.memory_space<vmem>>, vector<1x1xf32>
      tpu.vector_store %arg16[%c0_47, %c0_48], %80 {strides = array<i32>} : memref<1x1xf32, #tpu.memory_space<vmem>>, vector<1x1xf32>,
      %cst_49 = arith.constant 0.000000e+00 : f32
      %82 = vector.broadcast %cst_49 : f32 to vector<1x512xf32>
      %c0_50 = arith.constant 0 : index
      %c0_51 = arith.constant 0 : index
      %83 = vector.load %arg17[%c0_50, %c0_51] : memref<1x512xf32, #tpu.memory_space<vmem>>, vector<1x512xf32>
      tpu.vector_store %arg17[%c0_50, %c0_51], %82 {strides = array<i32>} : memref<1x512xf32, #tpu.memory_space<vmem>>, vector<1x512xf32>,
    } else {
    }
    %c0 = arith.constant 0 : index
    %c0_1 = arith.constant 0 : index
    %3 = vector.load %arg1[%c0, %c0_1] : memref<128x1024xbf16, #tpu.memory_space<vmem>>, vector<128x1024xbf16>
    %c0_2 = arith.constant 0 : index
    %c0_3 = arith.constant 0 : index
    %4 = vector.load %arg2[%c0_2, %c0_3] : memref<1024x512xbf16, #tpu.memory_space<vmem>>, vector<1024x512xbf16>
    %cst = arith.constant dense<0.000000e+00> : vector<128x512xf32>
    %5 = tpu.matmul %3, %4, %cst {dimension_numbers = #tpu.dot_dimension_numbers<[1], [0], [0], [1], [0, 0, 1, 1], [], []>} : vector<128x1024xbf16>, vector<1024x512xbf16>, vector<128x512xf32> -> vector<128x512xf32>
    %c0_4 = arith.constant 0 : index
    %c0_5 = arith.constant 0 : index
    %6 = vector.load %arg3[%c0_4, %c0_5] : memref<1x512xf32, #tpu.memory_space<vmem>>, vector<1x512xf32>
    %7 = vector.broadcast %6 : vector<1x512xf32> to vector<128x512xf32>
    %8 = arith.addf %5, %7 : vector<128x512xf32>
    %cst_6 = arith.constant 0.000000e+00 : f32
    %9 = vector.broadcast %cst_6 : f32 to vector<128x512xf32>
    %10 = arith.maximumf %8, %9 : vector<128x512xf32>
    %c128_i32 = arith.constant 128 : i32
    %11 = arith.muli %arg0, %c128_i32 : i32
    %12 = tpu.iota {dimensions = array<i32: 0>} : vector<128x1xi32>
    %13 = vector.broadcast %11 : i32 to vector<128x1xi32>
    %14 = arith.addi %13, %12 : vector<128x1xi32>
    %c8_i32 = arith.constant 8 : i32
    %15 = vector.broadcast %c8_i32 : i32 to vector<128x1xi32>
    %16 = arith.cmpi slt, %14, %15 : vector<128x1xi32>
    %cst_7 = arith.constant 0.000000e+00 : f32
    %17 = vector.shape_cast %16 : vector<128x1xi1> to vector<128x1xi1>
    %18 = vector.broadcast %17 : vector<128x1xi1> to vector<128x512xi1>
    %19 = vector.broadcast %cst_7 : f32 to vector<128x512xf32>
    %20 = arith.select %18, %10, %19 : vector<128x512xi1>, vector<128x512xf32>
    %21 = arith.truncf %20 : vector<128x512xf32> to vector<128x512xbf16>
    %c0_8 = arith.constant 0 : index
    %c0_9 = arith.constant 0 : index
    %22 = vector.load %arg4[%c0_8, %c0_9] : memref<512x512xbf16, #tpu.memory_space<vmem>>, vector<512x512xbf16>
    %cst_10 = arith.constant dense<0.000000e+00> : vector<128x512xf32>
    %23 = tpu.matmul %21, %22, %cst_10 {dimension_numbers = #tpu.dot_dimension_numbers<[1], [0], [0], [1], [0, 0, 1, 1], [], []>} : vector<128x512xbf16>, vector<512x512xbf16>, vector<128x512xf32> -> vector<128x512xf32>
    %c0_11 = arith.constant 0 : index
    %c0_12 = arith.constant 0 : index
    %24 = vector.load %arg5[%c0_11, %c0_12] : memref<1x512xf32, #tpu.memory_space<vmem>>, vector<1x512xf32>
    %25 = vector.broadcast %24 : vector<1x512xf32> to vector<128x512xf32>
    %26 = arith.addf %23, %25 : vector<128x512xf32>
    %27 = vector.extract_strided_slice %26 {offsets = [0, 0], sizes = [128, 256], strides = [1, 1]} : vector<128x512xf32> to vector<128x256xf32>
    %28 = math.tanh %27 : vector<128x256xf32>
    %29 = vector.extract_strided_slice %26 {offsets = [0, 256], sizes = [128, 256], strides = [1, 1]} : vector<128x512xf32> to vector<128x256xf32>
    %30 = arith.negf %29 : vector<128x256xf32>
    %31 = math.exp %30 : vector<128x256xf32>
    %cst_13 = arith.constant 1.000000e+00 : f32
    %32 = vector.broadcast %cst_13 : f32 to vector<128x256xf32>
    %33 = arith.addf %32, %31 : vector<128x256xf32>
    %34 = arith.divf %32, %33 : vector<128x256xf32>
    %35 = arith.mulf %28, %34 : vector<128x256xf32>
    %36 = arith.truncf %35 : vector<128x256xf32> to vector<128x256xbf16>
    %c0_14 = arith.constant 0 : index
    %c0_15 = arith.constant 0 : index
    %37 = vector.load %arg6[%c0_14, %c0_15] : memref<1x256xbf16, #tpu.memory_space<vmem>>, vector<1x256xbf16>
    "tpu.trace_start"() <{level = 10 : i32, message = "od,nd->on"}> : () -> ()
    %cst_16 = arith.constant dense<0.000000e+00> : vector<1x128xf32>
    %38 = tpu.matmul %37, %36, %cst_16 {dimension_numbers = #tpu.dot_dimension_numbers<[1], [1], [0], [0], [0, 0, 1, 0], [], []>} : vector<1x256xbf16>, vector<128x256xbf16>, vector<1x128xf32> -> vector<1x128xf32>
    "tpu.trace_stop"() : () -> ()
    %c0_17 = arith.constant 0 : index
    %c0_18 = arith.constant 0 : index
    %39 = vector.load %arg7[%c0_17, %c0_18] : memref<1x1xf32, #tpu.memory_space<vmem>>, vector<1x1xf32>
    %40 = vector.broadcast %39 : vector<1x1xf32> to vector<1x128xf32>
    %41 = arith.addf %38, %40 : vector<1x128xf32>
    %c0_19 = arith.constant 0 : index
    %c0_20 = arith.constant 0 : index
    %42 = vector.load %arg13[%c0_19, %c0_20] : memref<1x128xf32, #tpu.memory_space<vmem>>, vector<1x128xf32>
    tpu.vector_store %arg13[%c0_19, %c0_20], %41 {strides = array<i32>} : memref<1x128xf32, #tpu.memory_space<vmem>>, vector<1x128xf32>,
    %c128_i32_21 = arith.constant 128 : i32
    %43 = arith.muli %arg0, %c128_i32_21 : i32
    %44 = tpu.iota {dimensions = array<i32: 1>} : vector<1x128xi32>
    %45 = vector.broadcast %43 : i32 to vector<1x128xi32>
    %46 = arith.addi %45, %44 : vector<1x128xi32>
    %c8_i32_22 = arith.constant 8 : i32
    %47 = vector.broadcast %c8_i32_22 : i32 to vector<1x128xi32>
    %48 = arith.cmpi slt, %46, %47 : vector<1x128xi32>
    %cst_23 = arith.constant 0xFF800000 : f32
    %49 = vector.broadcast %cst_23 : f32 to vector<1x128xf32>
    %50 = arith.select %48, %41, %49 : vector<1x128xi1>, vector<1x128xf32>
    %c0_24 = arith.constant 0 : index
    %c0_25 = arith.constant 0 : index
    %51 = vector.load %arg15[%c0_24, %c0_25] : memref<1x1xf32, #tpu.memory_space<vmem>>, vector<1x1xf32>
    %cst_26 = arith.constant dense<0xFF800000> : vector<1xf32>
    %52 = vector.multi_reduction <maximumf>, %50, %cst_26 [1] : vector<1x128xf32> to vector<1xf32>
    %53 = vector.shape_cast %52 : vector<1xf32> to vector<1x1xf32>
    %54 = arith.maximumf %51, %53 : vector<1x1xf32>
    %c0_27 = arith.constant 0 : index
    %c0_28 = arith.constant 0 : index
    %55 = vector.load %arg15[%c0_27, %c0_28] : memref<1x1xf32, #tpu.memory_space<vmem>>, vector<1x1xf32>
    %56 = arith.subf %55, %54 : vector<1x1xf32>
    %57 = math.exp %56 : vector<1x1xf32>
    %58 = vector.broadcast %54 : vector<1x1xf32> to vector<1x128xf32>
    %59 = arith.subf %50, %58 : vector<1x128xf32>
    %60 = math.exp %59 : vector<1x128xf32>
    %c0_29 = arith.constant 0 : index
    %c0_30 = arith.constant 0 : index
    %61 = vector.load %arg16[%c0_29, %c0_30] : memref<1x1xf32, #tpu.memory_space<vmem>>, vector<1x1xf32>
    %62 = arith.mulf %57, %61 : vector<1x1xf32>
    %cst_31 = arith.constant dense<0.000000e+00> : vector<1xf32>
    %63 = vector.multi_reduction <add>, %60, %cst_31 [1] : vector<1x128xf32> to vector<1xf32>
    %64 = vector.shape_cast %63 : vector<1xf32> to vector<1x1xf32>
    %65 = arith.addf %62, %64 : vector<1x1xf32>
    %c0_32 = arith.constant 0 : index
    %c0_33 = arith.constant 0 : index
    %66 = vector.load %arg16[%c0_32, %c0_33] : memref<1x1xf32, #tpu.memory_space<vmem>>, vector<1x1xf32>
    tpu.vector_store %arg16[%c0_32, %c0_33], %65 {strides = array<i32>} : memref<1x1xf32, #tpu.memory_space<vmem>>, vector<1x1xf32>,
    %c0_34 = arith.constant 0 : index
    %c0_35 = arith.constant 0 : index
    %67 = vector.load %arg17[%c0_34, %c0_35] : memref<1x512xf32, #tpu.memory_space<vmem>>, vector<1x512xf32>
    %68 = vector.broadcast %57 : vector<1x1xf32> to vector<1x512xf32>
    %69 = arith.mulf %68, %67 : vector<1x512xf32>
    %70 = arith.truncf %60 : vector<1x128xf32> to vector<1x128xbf16>
    %cst_36 = arith.constant dense<0.000000e+00> : vector<1x512xf32>
    %71 = tpu.matmul %70, %21, %cst_36 {dimension_numbers = #tpu.dot_dimension_numbers<[1], [0], [0], [1], [0, 0, 1, 1], [], []>} : vector<1x128xbf16>, vector<128x512xbf16>, vector<1x512xf32> -> vector<1x512xf32>
    %72 = arith.addf %69, %71 : vector<1x512xf32>
    %c0_37 = arith.constant 0 : index
    %c0_38 = arith.constant 0 : index
    %73 = vector.load %arg17[%c0_37, %c0_38] : memref<1x512xf32, #tpu.memory_space<vmem>>, vector<1x512xf32>
    tpu.vector_store %arg17[%c0_37, %c0_38], %72 {strides = array<i32>} : memref<1x512xf32, #tpu.memory_space<vmem>>, vector<1x512xf32>,
    %c0_39 = arith.constant 0 : index
    %c0_40 = arith.constant 0 : index
    %74 = vector.load %arg15[%c0_39, %c0_40] : memref<1x1xf32, #tpu.memory_space<vmem>>, vector<1x1xf32>
    tpu.vector_store %arg15[%c0_39, %c0_40], %54 {strides = array<i32>} : memref<1x1xf32, #tpu.memory_space<vmem>>, vector<1x1xf32>,
    %c0_i32_41 = arith.constant 0 : i32
    %75 = arith.cmpi eq, %arg0, %c0_i32_41 : i32
    %76 = arith.extui %75 : i1 to i32
    %c0_i32_42 = arith.constant 0 : i32
    %77 = arith.cmpi ne, %76, %c0_i32_42 : i32
    scf.if %77 {
      %c0_43 = arith.constant 0 : index
      %c0_44 = arith.constant 0 : index
      %78 = vector.load %arg17[%c0_43, %c0_44] : memref<1x512xf32, #tpu.memory_space<vmem>>, vector<1x512xf32>
      %c0_45 = arith.constant 0 : index
      %c0_46 = arith.constant 0 : index
      %79 = vector.load %arg16[%c0_45, %c0_46] : memref<1x1xf32, #tpu.memory_space<vmem>>, vector<1x1xf32>
      %80 = vector.broadcast %79 : vector<1x1xf32> to vector<1x512xf32>
      %81 = arith.divf %78, %80 : vector<1x512xf32>
      %c0_47 = arith.constant 0 : index
      %c0_48 = arith.constant 0 : index
      %82 = vector.load %arg14[%c0_47, %c0_48] : memref<1x512xf32, #tpu.memory_space<vmem>>, vector<1x512xf32>
      tpu.vector_store %arg14[%c0_47, %c0_48], %81 {strides = array<i32>} : memref<1x512xf32, #tpu.memory_space<vmem>>, vector<1x512xf32>,
      %c0_49 = arith.constant 0 : index
      %c0_50 = arith.constant 0 : index
      %83 = vector.load %arg8[%c0_49, %c0_50] : memref<512x4xf32, #tpu.memory_space<vmem>>, vector<512x4xf32>
      %cst_51 = arith.constant dense<0.000000e+00> : vector<1x4xf32>
      %84 = tpu.matmul %81, %83, %cst_51 {dimension_numbers = #tpu.dot_dimension_numbers<[1], [0], [0], [1], [0, 0, 1, 1], [], []>} : vector<1x512xf32>, vector<512x4xf32>, vector<1x4xf32> -> vector<1x4xf32>
      %c0_52 = arith.constant 0 : index
      %c0_53 = arith.constant 0 : index
      %85 = vector.load %arg9[%c0_52, %c0_53] : memref<1x4xf32, #tpu.memory_space<vmem>>, vector<1x4xf32>
      %86 = arith.addf %84, %85 : vector<1x4xf32>
      %c0_54 = arith.constant 0 : index
      %c0_55 = arith.constant 0 : index
      %87 = vector.load %arg10[%c0_54, %c0_55] : memref<1x4xf32, #tpu.memory_space<vmem>>, vector<1x4xf32>
      tpu.vector_store %arg10[%c0_54, %c0_55], %86 {strides = array<i32>} : memref<1x4xf32, #tpu.memory_space<vmem>>, vector<1x4xf32>,
      %cst_56 = arith.constant dense<0xFF800000> : vector<1xf32>
      %88 = vector.multi_reduction <maximumf>, %86, %cst_56 [1] : vector<1x4xf32> to vector<1xf32>
      %89 = vector.shape_cast %88 : vector<1xf32> to vector<1x1xf32>
      %90 = vector.broadcast %89 : vector<1x1xf32> to vector<1x4xf32>
      %91 = arith.subf %86, %90 : vector<1x4xf32>
      %92 = math.exp %91 : vector<1x4xf32>
      %cst_57 = arith.constant dense<0.000000e+00> : vector<1xf32>
      %93 = vector.multi_reduction <add>, %92, %cst_57 [1] : vector<1x4xf32> to vector<1xf32>
      %94 = vector.shape_cast %93 : vector<1xf32> to vector<1x1xf32>
      %95 = vector.broadcast %94 : vector<1x1xf32> to vector<1x4xf32>
      %96 = arith.divf %92, %95 : vector<1x4xf32>
      %c0_58 = arith.constant 0 : index
      %c0_59 = arith.constant 0 : index
      %97 = vector.load %arg11[%c0_58, %c0_59] : memref<1x4xf32, #tpu.memory_space<vmem>>, vector<1x4xf32>
      tpu.vector_store %arg11[%c0_58, %c0_59], %96 {strides = array<i32>} : memref<1x4xf32, #tpu.memory_space<vmem>>, vector<1x4xf32>,
      %98 = tpu.iota {dimensions = array<i32: 1>} : vector<1x4xi32>
      %99 = vector.broadcast %89 : vector<1x1xf32> to vector<1x4xf32>
      %100 = arith.cmpf oge, %86, %99 : vector<1x4xf32>
      %c4_i32 = arith.constant 4 : i32
      %101 = vector.broadcast %c4_i32 : i32 to vector<1x4xi32>
      %102 = arith.select %100, %98, %101 : vector<1x4xi1>, vector<1x4xi32>
      %cst_60 = arith.constant dense<2147483647> : vector<1xi32>
      %103 = vector.multi_reduction <minsi>, %102, %cst_60 [1] : vector<1x4xi32> to vector<1xi32>
      %104 = vector.shape_cast %103 : vector<1xi32> to vector<1x1xi32>
      %c0_61 = arith.constant 0 : index
      %c0_62 = arith.constant 0 : index
      %105 = vector.load %arg12[%c0_61, %c0_62] : memref<1x1xi32, #tpu.memory_space<vmem>>, vector<1x1xi32>
      tpu.vector_store %arg12[%c0_61, %c0_62], %104 {strides = array<i32>} : memref<1x1xi32, #tpu.memory_space<vmem>>, vector<1x1xi32>,
    } else {
    }
    return
  }
  func.func @transform_0(%arg0: i32) -> (i32, i32) {
    %c0_i32 = arith.constant 0 : i32
    %c0_i32_0 = arith.constant 0 : i32
    return %arg0, %c0_i32 : i32, i32
  }
  func.func @transform_1(%arg0: i32) -> (i32, i32) {
    %c0_i32 = arith.constant 0 : i32
    %c0_i32_0 = arith.constant 0 : i32
    %c0_i32_1 = arith.constant 0 : i32
    return %c0_i32, %c0_i32_0 : i32, i32
  }
  func.func @transform_2(%arg0: i32) -> (i32, i32) {
    %c0_i32 = arith.constant 0 : i32
    %c0_i32_0 = arith.constant 0 : i32
    %c0_i32_1 = arith.constant 0 : i32
    return %c0_i32, %c0_i32_0 : i32, i32
  }
  func.func @transform_3(%arg0: i32) -> (i32, i32) {
    %c0_i32 = arith.constant 0 : i32
    %c0_i32_0 = arith.constant 0 : i32
    %c0_i32_1 = arith.constant 0 : i32
    return %c0_i32, %c0_i32_0 : i32, i32
  }
  func.func @transform_4(%arg0: i32) -> (i32, i32) {
    %c0_i32 = arith.constant 0 : i32
    %c0_i32_0 = arith.constant 0 : i32
    %c0_i32_1 = arith.constant 0 : i32
    return %c0_i32, %c0_i32_0 : i32, i32
  }
  func.func @transform_5(%arg0: i32) -> (i32, i32) {
    %c0_i32 = arith.constant 0 : i32
    %c0_i32_0 = arith.constant 0 : i32
    %c0_i32_1 = arith.constant 0 : i32
    return %c0_i32, %c0_i32_0 : i32, i32
  }
  func.func @transform_6(%arg0: i32) -> (i32, i32) {
    %c0_i32 = arith.constant 0 : i32
    %c0_i32_0 = arith.constant 0 : i32
    %c0_i32_1 = arith.constant 0 : i32
    return %c0_i32, %c0_i32_0 : i32, i32
  }
  func.func @transform_7(%arg0: i32) -> (i32, i32) {
    %c0_i32 = arith.constant 0 : i32
    %c0_i32_0 = arith.constant 0 : i32
    %c0_i32_1 = arith.constant 0 : i32
    return %c0_i32, %c0_i32_0 : i32, i32
  }
  func.func @transform_8(%arg0: i32) -> (i32, i32) {
    %c0_i32 = arith.constant 0 : i32
    %c0_i32_0 = arith.constant 0 : i32
    %c0_i32_1 = arith.constant 0 : i32
    return %c0_i32, %c0_i32_0 : i32, i32
  }
  func.func @transform_9(%arg0: i32) -> (i32, i32) {
    %c0_i32 = arith.constant 0 : i32
    %c0_i32_0 = arith.constant 0 : i32
    %c0_i32_1 = arith.constant 0 : i32
    return %c0_i32, %c0_i32_0 : i32, i32
  }
  func.func @transform_10(%arg0: i32) -> (i32, i32) {
    %c0_i32 = arith.constant 0 : i32
    %c0_i32_0 = arith.constant 0 : i32
    %c0_i32_1 = arith.constant 0 : i32
    return %c0_i32, %c0_i32_0 : i32, i32
  }
  func.func @transform_11(%arg0: i32) -> (i32, i32) {
    %c0_i32 = arith.constant 0 : i32
    %c0_i32_0 = arith.constant 0 : i32
    %c0_i32_1 = arith.constant 0 : i32
    return %c0_i32, %c0_i32_0 : i32, i32
  }
  func.func @transform_12(%arg0: i32) -> (i32, i32) {
    %c0_i32 = arith.constant 0 : i32
    %c0_i32_0 = arith.constant 0 : i32
    return %c0_i32, %arg0 : i32, i32
  }
  func.func @transform_13(%arg0: i32) -> (i32, i32) {
    %c0_i32 = arith.constant 0 : i32
    %c0_i32_0 = arith.constant 0 : i32
    %c0_i32_1 = arith.constant 0 : i32
    return %c0_i32, %c0_i32_0 : i32, i32
  }
}

</mosaic_0001>

<llo_original>
// kernel: edg_sb_forward.1
$region0: #{edg_sb_forward.1}
  #allocation0 [shape = 'u32[]', space=smem, size = 0x4, offset = 0x4, fixed_abs, tag = 'smem constant byte address 0x4 - core index']
  #allocation1 [shape = 'u32[72,128]{1,0:T(1,128)}', space=vmem, size = 0x9000, scoped, tag = 'internal scratch']
  #allocation2 [shape = 'f32[1,1]{1,0:T(1,128)}', space=vmem, size = 0x200, scoped, tag = 'scratch operand']
  #allocation3 [shape = 'f32[1,1]{1,0:T(1,128)}', space=vmem, size = 0x200, scoped, tag = 'scratch operand']
  #allocation4 [shape = 'f32[1,512]{1,0:T(1,128)}', space=vmem, size = 0x800, scoped, tag = 'scratch operand']
  #allocation5 [shape = 'f32[1,1]{1,0:T(1,128)S(1)}', space=vmem, size = 0x200, scoped, tag = 'scoped memory for edg_sb_forward.1']
  %s0 = inlined_call_operand.vmem [shape: bf16[8,1024], index: 0, kind: input, shape index: {}]
  %s1 = inlined_call_operand.hbm [shape: bf16[1024,512], index: 1, kind: input, shape index: {}]
  %s2 = inlined_call_operand.vmem [shape: f32[1,512], index: 2, kind: input, shape index: {}]
  %s3 = inlined_call_operand.hbm [shape: bf16[512,512], index: 3, kind: input, shape index: {}]
  %s4 = inlined_call_operand.vmem [shape: f32[1,512], index: 4, kind: input, shape index: {}]
  %s5 = inlined_call_operand.vmem [shape: bf16[1,256], index: 5, kind: input, shape index: {}]
  %s6 = inlined_call_operand.<no memory space> [shape: f32[1,1], index: 6, kind: input, shape index: {}]
  %s7 = inlined_call_operand.vmem [shape: f32[512,4], index: 7, kind: input, shape index: {}]
  %s8 = inlined_call_operand.vmem [shape: f32[1,4], index: 8, kind: input, shape index: {}]
  %s9 = inlined_call_operand.hbm [shape: f32[1,4], index: 9, kind: output, shape index: {0}]
  %s10 = inlined_call_operand.hbm [shape: f32[1,4], index: 10, kind: output, shape index: {1}]
  %s11 = inlined_call_operand.hbm [shape: s32[1,1], index: 11, kind: output, shape index: {2}]
  %s12 = inlined_call_operand.hbm [shape: f32[1,128], index: 12, kind: output, shape index: {3}]
  %s13 = inlined_call_operand.hbm [shape: f32[1,512], index: 13, kind: output, shape index: {4}]
  %14 = xla_tuple %s9, %s10, %s11, %s12, %s13
  %s15 = sld [smem:[#allocation0]]
  $region94: #{edg_sb_forward.1} parent=0
    _
  %s17 = ssub.s32 1, %s15
  %s18 = scalar_select 0, %s17, %s15
  %v19 = vstv %s6
  %20 = vst [vmem:[#allocation5] sm:$0x1] %v19
  $region1: #{edg_sb_forward.1} parent=0
    #allocation6 [shape = 'u8[1048576]{0}', space=vmem, size = 0x100000, scoped, tag = 'input window, operand 1, single buffered']
    #allocation7 [shape = 's32[1]{0}', space=sflag, size = 0x4, scoped, tag = 'scoped memory for edg_sb_forward.1']
    #allocation8 [shape = 's32[1]{0}', space=sflag, size = 0x4, scoped, tag = 'scoped memory for edg_sb_forward.1']
    #allocation9 [shape = 'u8[524288]{0}', space=vmem, size = 0x80000, scoped, tag = 'input window, operand 3, single buffered']
    #allocation10 [shape = 's32[1]{0}', space=sflag, size = 0x4, scoped, tag = 'scoped memory for edg_sb_forward.1']
    #allocation11 [shape = 'u8[512]{0}', space=vmem, size = 0x400, scoped, tag = 'output window, operand 0, single buffered']
    #allocation12 [shape = 'u8[512]{0}', space=vmem, size = 0x400, scoped, tag = 'output window, operand 1, single buffered']
    #allocation13 [shape = 's32[1]{0}', space=sflag, size = 0x4, scoped, tag = 'scoped memory for edg_sb_forward.1']
    #allocation14 [shape = 'u8[512]{0}', space=vmem, size = 0x400, scoped, tag = 'output window, operand 2, single buffered']
    #allocation15 [shape = 'u8[512]{0}', space=vmem, size = 0x400, scoped, tag = 'output window, operand 3, single buffered']
    #allocation16 [shape = 's32[1]{0}', space=sflag, size = 0x4, scoped, tag = 'scoped memory for edg_sb_forward.1']
    #allocation17 [shape = 'u8[2048]{0}', space=vmem, size = 0x800, scoped, tag = 'output window, operand 4, single buffered']
    %21 = vsyncpa [#allocation7], 0
    %22 = vsyncpa [#allocation10], 0
    %23 = vsyncpa [#allocation8], 0
    %24 = vsyncpa [#allocation13], 0
    %25 = vsyncpa [#allocation16], 0
    // Predicated region
    $region2: #{edg_sb_forward.1} parent=1 // pred_check
      _
    $region3: #{edg_sb_forward.1} parent=1 // pred_check_branch
      %27 = sbr.rel (0) target = $region5
    $region4: #{edg_sb_forward.1} parent=1 // pred_region
      _
    $region5: #{edg_sb_forward.1} parent=1 // pred_fallthru
      _
    // Predicated region
    $region6: #{edg_sb_forward.1} parent=1 // pred_check
      _
    $region7: #{edg_sb_forward.1} parent=1 // pred_check_branch
      %29 = sbr.rel (0) target = $region9
    $region8: #{edg_sb_forward.1} parent=1 // pred_region
      %31 = vsyncadd [#allocation7], 0
      %s32 = sshll.u32 %s1, 4
      %s33 = int_to_ptr.hbm [resolvable:$true] %s32
      %s34 = sshll.u32 [#allocation6], 4
      %s35 = int_to_ptr.vmem [resolvable:$true] %s34
      %40 = dma.hbm_to_vmem [thread:$0]  %s33, 32768, %s35, [#allocation7], 256, 256, 16
    $region9: #{edg_sb_forward.1} parent=1 // pred_fallthru
      _
    // Predicated region
    $region10: #{edg_sb_forward.1} parent=1 // pred_check
      _
    $region11: #{edg_sb_forward.1} parent=1 // pred_check_branch
      %42 = sbr.rel (0) target = $region13
    $region12: #{edg_sb_forward.1} parent=1 // pred_region
      _
    $region13: #{edg_sb_forward.1} parent=1 // pred_fallthru
      _
    // Predicated region
    $region14: #{edg_sb_forward.1} parent=1 // pred_check
      _
    $region15: #{edg_sb_forward.1} parent=1 // pred_check_branch
      %44 = sbr.rel (0) target = $region17
    $region16: #{edg_sb_forward.1} parent=1 // pred_region
      %46 = vsyncadd [#allocation10], 0
      %s47 = sshll.u32 %s3, 4
      %s48 = int_to_ptr.hbm [resolvable:$true] %s47
      %s49 = sshll.u32 [#allocation9], 4
      %s50 = int_to_ptr.vmem [resolvable:$true] %s49
      %55 = dma.hbm_to_vmem [thread:$0]  %s48, 16384, %s50, [#allocation10], 256, 256, 16
    $region17: #{edg_sb_forward.1} parent=1 // pred_fallthru
      _
    // Predicated region
    $region18: #{edg_sb_forward.1} parent=1 // pred_check
      _
    $region19: #{edg_sb_forward.1} parent=1 // pred_check_branch
      %57 = sbr.rel (0) target = $region21
    $region20: #{edg_sb_forward.1} parent=1 // pred_region
      _
    $region21: #{edg_sb_forward.1} parent=1 // pred_fallthru
      _
    // Predicated region
    $region22: #{edg_sb_forward.1} parent=1 // pred_check
      _
    $region23: #{edg_sb_forward.1} parent=1 // pred_check_branch
      %59 = sbr.rel (0) target = $region25
    $region24: #{edg_sb_forward.1} parent=1 // pred_region
      _
    $region25: #{edg_sb_forward.1} parent=1 // pred_fallthru
      _
    // Predicated region
    $region26: #{edg_sb_forward.1} parent=1 // pred_check
      _
    $region27: #{edg_sb_forward.1} parent=1 // pred_check_branch
      %61 = sbr.rel (0) target = $region29
    $region28: #{edg_sb_forward.1} parent=1 // pred_region
      _
    $region29: #{edg_sb_forward.1} parent=1 // pred_fallthru
      _
    // Predicated region
    $region30: #{edg_sb_forward.1} parent=1 // pred_check
      _
    $region31: #{edg_sb_forward.1} parent=1 // pred_check_branch
      %63 = sbr.rel (0) target = $region33
    $region32: #{edg_sb_forward.1} parent=1 // pred_region
      _
    $region33: #{edg_sb_forward.1} parent=1 // pred_fallthru
      _
    // Predicated region
    $region34: #{edg_sb_forward.1} parent=1 // pred_check
      _
    $region35: #{edg_sb_forward.1} parent=1 // pred_check_branch
      %65 = sbr.rel (0) target = $region37
    $region36: #{edg_sb_forward.1} parent=1 // pred_region
      _
    $region37: #{edg_sb_forward.1} parent=1 // pred_fallthru
      _
    // Predicated region
    $region38: #{edg_sb_forward.1} parent=1 // pred_check
      _
    $region39: #{edg_sb_forward.1} parent=1 // pred_check_branch
      %67 = sbr.rel (0) target = $region41
    $region40: #{edg_sb_forward.1} parent=1 // pred_region
      %69 = dma.done [#allocation7], 32768
    $region41: #{edg_sb_forward.1} parent=1 // pred_fallthru
      _
    // Predicated region
    $region42: #{edg_sb_forward.1} parent=1 // pred_check
      _
    $region43: #{edg_sb_forward.1} parent=1 // pred_check_branch
      %71 = sbr.rel (0) target = $region45
    $region44: #{edg_sb_forward.1} parent=1 // pred_region
      %73 = dma.done [#allocation10], 16384
    $region45: #{edg_sb_forward.1} parent=1 // pred_fallthru
      _
    %p74 = scmp.eq.s32.totalorder 0, 0
    // Predicated region
    $region46: #{edg_sb_forward.1} parent=1 // pred_check
      %p75 = pneg %p74
    $region47: #{edg_sb_forward.1} parent=1 // pred_check_branch
      %77 = sbr.rel (%p75) target = $region49
    $region48: #{edg_sb_forward.1} parent=1 // pred_region
      %vm78 = vcmask 0
      %79 = vst.msk [vmem:[#allocation2] sm:$0x1] %vm78, -inf
      %80 = vst.msk [vmem:[#allocation3] sm:$0x1] %vm78, 0.0
      %v81 = vlaneseq
      %vm82 = vcmp.ge.s32.totalorder %v81, 0
      %vm83 = vcmp.lt.s32.totalorder %v81, 512
      %vm84 = vmand %vm82, %vm83
      %85 = vst.msk [vmem:[#allocation4] sm:$0xf] %vm84, 0.0
    $region49: #{edg_sb_forward.1} parent=1 // pred_fallthru
      _
    %v86 = vld [vmem:[%s0] sm:$0xff]
    %v87 = vld [vmem:[%s0 + $0x8] sm:$0xff]
    %v88 = vld [vmem:[%s0 + $0x10] sm:$0xff]
    %v89 = vld [vmem:[%s0 + $0x18] sm:$0xff]
    %v90 = vld [vmem:[%s0 + $0x20] sm:$0xff]
    %v91 = vld [vmem:[%s0 + $0x28] sm:$0xff]
    %v92 = vld [vmem:[%s0 + $0x30] sm:$0xff]
    %v93 = vld [vmem:[%s0 + $0x38] sm:$0xff]
    %v94 = vld [vmem:[%s0 + $0x40] sm:$0xff]
    %v95 = vld [vmem:[%s0 + $0x48] sm:$0xff]
    %v96 = vld [vmem:[%s0 + $0x50] sm:$0xff]
    %v97 = vld [vmem:[%s0 + $0x58] sm:$0xff]
    %v98 = vld [vmem:[%s0 + $0x60] sm:$0xff]
    %v99 = vld [vmem:[%s0 + $0x68] sm:$0xff]
    %v100 = vld [vmem:[%s0 + $0x70] sm:$0xff]
    %v101 = vld [vmem:[%s0 + $0x78] sm:$0xff]
    %v102 = vld [vmem:[%s0 + $0x80] sm:$0xff]
    %v103 = vld [vmem:[%s0 + $0x88] sm:$0xff]
    %v104 = vld [vmem:[%s0 + $0x90] sm:$0xff]
    %v105 = vld [vmem:[%s0 + $0x98] sm:$0xff]
    %v106 = vld [vmem:[%s0 + $0xa0] sm:$0xff]
    %v107 = vld [vmem:[%s0 + $0xa8] sm:$0xff]
    %v108 = vld [vmem:[%s0 + $0xb0] sm:$0xff]
    %v109 = vld [vmem:[%s0 + $0xb8] sm:$0xff]
    %v110 = vld [vmem:[%s0 + $0xc0] sm:$0xff]
    %v111 = vld [vmem:[%s0 + $0xc8] sm:$0xff]
    %v112 = vld [vmem:[%s0 + $0xd0] sm:$0xff]
    %v113 = vld [vmem:[%s0 + $0xd8] sm:$0xff]
    %v114 = vld [vmem:[%s0 + $0xe0] sm:$0xff]
    %v115 = vld [vmem:[%s0 + $0xe8] sm:$0xff]
    %v116 = vld [vmem:[%s0 + $0xf0] sm:$0xff]
    %v117 = vld [vmem:[%s0 + $0xf8] sm:$0xff]
    %v118 = vld [vmem:[%s0 + $0x100] sm:$0xff]
    %v119 = vld [vmem:[%s0 + $0x108] sm:$0xff]
    %v120 = vld [vmem:[%s0 + $0x110] sm:$0xff]
    %v121 = vld [vmem:[%s0 + $0x118] sm:$0xff]
    %v122 = vld [vmem:[%s0 + $0x120] sm:$0xff]
    %v123 = vld [vmem:[%s0 + $0x128] sm:$0xff]
    %v124 = vld [vmem:[%s0 + $0x130] sm:$0xff]
    %v125 = vld [vmem:[%s0 + $0x138] sm:$0xff]
    %v126 = vld [vmem:[%s0 + $0x140] sm:$0xff]
    %v127 = vld [vmem:[%s0 + $0x148] sm:$0xff]
    %v128 = vld [vmem:[%s0 + $0x150] sm:$0xff]
    %v129 = vld [vmem:[%s0 + $0x158] sm:$0xff]
    %v130 = vld [vmem:[%s0 + $0x160] sm:$0xff]
    %v131 = vld [vmem:[%s0 + $0x168] sm:$0xff]
    %v132 = vld [vmem:[%s0 + $0x170] sm:$0xff]
    %v133 = vld [vmem:[%s0 + $0x178] sm:$0xff]
    %v134 = vld [vmem:[%s0 + $0x180] sm:$0xff]
    %v135 = vld [vmem:[%s0 + $0x188] sm:$0xff]
    %v136 = vld [vmem:[%s0 + $0x190] sm:$0xff]
    %v137 = vld [vmem:[%s0 + $0x198] sm:$0xff]
    %v138 = vld [vmem:[%s0 + $0x1a0] sm:$0xff]
    %v139 = vld [vmem:[%s0 + $0x1a8] sm:$0xff]
    %v140 = vld [vmem:[%s0 + $0x1b0] sm:$0xff]
    %v141 = vld [vmem:[%s0 + $0x1b8] sm:$0xff]
    %v142 = vld [vmem:[%s0 + $0x1c0] sm:$0xff]
    %v143 = vld [vmem:[%s0 + $0x1c8] sm:$0xff]
    %v144 = vld [vmem:[%s0 + $0x1d0] sm:$0xff]
    %v145 = vld [vmem:[%s0 + $0x1d8] sm:$0xff]
    %v146 = vld [vmem:[%s0 + $0x1e0] sm:$0xff]
    %v147 = vld [vmem:[%s0 + $0x1e8] sm:$0xff]
    %v148 = vld [vmem:[%s0 + $0x1f0] sm:$0xff]
    %v149 = vld [vmem:[%s0 + $0x1f8] sm:$0xff]
    %v150 = vld [vmem:[#allocation6] sm:$0xff]
    %v151 = vld [vmem:[#allocation6 + $0x8] sm:$0xff]
    %v152 = vld [vmem:[#allocation6 + $0x10] sm:$0xff]
    %v153 = vld [vmem:[#allocation6 + $0x18] sm:$0xff]
    %v154 = vld [vmem:[#allocation6 + $0x20] sm:$0xff]
    %v155 = vld [vmem:[#allocation6 + $0x28] sm:$0xff]
    %v156 = vld [vmem:[#allocation6 + $0x30] sm:$0xff]
    %v157 = vld [vmem:[#allocation6 + $0x38] sm:$0xff]
    %v158 = vld [vmem:[#allocation6 + $0x40] sm:$0xff]
    %v159 = vld [vmem:[#allocation6 + $0x48] sm:$0xff]
    %v160 = vld [vmem:[#allocation6 + $0x50] sm:$0xff]
    %v161 = vld [vmem:[#allocation6 + $0x58] sm:$0xff]
    %v162 = vld [vmem:[#allocation6 + $0x60] sm:$0xff]
    %v163 = vld [vmem:[#allocation6 + $0x68] sm:$0xff]
    %v164 = vld [vmem:[#allocation6 + $0x70] sm:$0xff]
    %v165 = vld [vmem:[#allocation6 + $0x78] sm:$0xff]
    %v166 = vld [vmem:[#allocation6 + $0x80] sm:$0xff]
    %v167 = vld [vmem:[#allocation6 + $0x88] sm:$0xff]
    %v168 = vld [vmem:[#allocation6 + $0x90] sm:$0xff]
    %v169 = vld [vmem:[#allocation6 + $0x98] sm:$0xff]
    %v170 = vld [vmem:[#allocation6 + $0xa0] sm:$0xff]
    %v171 = vld [vmem:[#allocation6 + $0xa8] sm:$0xff]
    %v172 = vld [vmem:[#allocation6 + $0xb0] sm:$0xff]
    %v173 = vld [vmem:[#allocation6 + $0xb8] sm:$0xff]
    %v174 = vld [vmem:[#allocation6 + $0xc0] sm:$0xff]
    %v175 = vld [vmem:[#allocation6 + $0xc8] sm:$0xff]
    %v176 = vld [vmem:[#allocation6 + $0xd0] sm:$0xff]
    %v177 = vld [vmem:[#allocation6 + $0xd8] sm:$0xff]
    %v178 = vld [vmem:[#allocation6 + $0xe0] sm:$0xff]
    %v179 = vld [vmem:[#allocation6 + $0xe8] sm:$0xff]
    %v180 = vld [vmem:[#allocation6 + $0xf0] sm:$0xff]
    %v181 = vld [vmem:[#allocation6 + $0xf8] sm:$0xff]
    %v182 = vld [vmem:[#allocation6 + $0x100] sm:$0xff]
    %v183 = vld [vmem:[#allocation6 + $0x108] sm:$0xff]
    %v184 = vld [vmem:[#allocation6 + $0x110] sm:$0xff]
    %v185 = vld [vmem:[#allocation6 + $0x118] sm:$0xff]
    %v186 = vld [vmem:[#allocation6 + $0x120] sm:$0xff]
    %v187 = vld [vmem:[#allocation6 + $0x128] sm:$0xff]
    %v188 = vld [vmem:[#allocation6 + $0x130] sm:$0xff]
    %v189 = vld [vmem:[#allocation6 + $0x138] sm:$0xff]
    %v190 = vld [vmem:[#allocation6 + $0x140] sm:$0xff]
    %v191 = vld [vmem:[#allocation6 + $0x148] sm:$0xff]
    %v192 = vld [vmem:[#allocation6 + $0x150] sm:$0xff]
    %v193 = vld [vmem:[#allocation6 + $0x158] sm:$0xff]
    %v194 = vld [vmem:[#allocation6 + $0x160] sm:$0xff]
    %v195 = vld [vmem:[#allocation6 + $0x168] sm:$0xff]
    %v196 = vld [vmem:[#allocation6 + $0x170] sm:$0xff]
    %v197 = vld [vmem:[#allocation6 + $0x178] sm:$0xff]
    %v198 = vld [vmem:[#allocation6 + $0x180] sm:$0xff]
    %v199 = vld [vmem:[#allocation6 + $0x188] sm:$0xff]
    %v200 = vld [vmem:[#allocation6 + $0x190] sm:$0xff]
    %v201 = vld [vmem:[#allocation6 + $0x198] sm:$0xff]
    %v202 = vld [vmem:[#allocation6 + $0x1a0] sm:$0xff]
    %v203 = vld [vmem:[#allocation6 + $0x1a8] sm:$0xff]
    %v204 = vld [vmem:[#allocation6 + $0x1b0] sm:$0xff]
    %v205 = vld [vmem:[#allocation6 + $0x1b8] sm:$0xff]
    %v206 = vld [vmem:[#allocation6 + $0x1c0] sm:$0xff]
    %v207 = vld [vmem:[#allocation6 + $0x1c8] sm:$0xff]
    %v208 = vld [vmem:[#allocation6 + $0x1d0] sm:$0xff]
    %v209 = vld [vmem:[#allocation6 + $0x1d8] sm:$0xff]
    %v210 = vld [vmem:[#allocation6 + $0x1e0] sm:$0xff]
    %v211 = vld [vmem:[#allocation6 + $0x1e8] sm:$0xff]
    %v212 = vld [vmem:[#allocation6 + $0x1f0] sm:$0xff]
    %v213 = vld [vmem:[#allocation6 + $0x1f8] sm:$0xff]
    %v214 = vld [vmem:[#allocation6 + $0x200] sm:$0xff]
    %v215 = vld [vmem:[#allocation6 + $0x208] sm:$0xff]
    %v216 = vld [vmem:[#allocation6 + $0x210] sm:$0xff]
    %v217 = vld [vmem:[#allocation6 + $0x218] sm:$0xff]
    %v218 = vld [vmem:[#allocation6 + $0x220] sm:$0xff]
    %v219 = vld [vmem:[#allocation6 + $0x228] sm:$0xff]
    %v220 = vld [vmem:[#allocation6 + $0x230] sm:$0xff]
    %v221 = vld [vmem:[#allocation6 + $0x238] sm:$0xff]
    %v222 = vld [vmem:[#allocation6 + $0x240] sm:$0xff]
    %v223 = vld [vmem:[#allocation6 + $0x248] sm:$0xff]
    %v224 = vld [vmem:[#allocation6 + $0x250] sm:$0xff]
    %v225 = vld [vmem:[#allocation6 + $0x258] sm:$0xff]
    %v226 = vld [vmem:[#allocation6 + $0x260] sm:$0xff]
    %v227 = vld [vmem:[#allocation6 + $0x268] sm:$0xff]
    %v228 = vld [vmem:[#allocation6 + $0x270] sm:$0xff]
    %v229 = vld [vmem:[#allocation6 + $0x278] sm:$0xff]
    %v230 = vld [vmem:[#allocation6 + $0x280] sm:$0xff]
    %v231 = vld [vmem:[#allocation6 + $0x288] sm:$0xff]
    %v232 = vld [vmem:[#allocation6 + $0x290] sm:$0xff]
    %v233 = vld [vmem:[#allocation6 + $0x298] sm:$0xff]
    %v234 = vld [vmem:[#allocation6 + $0x2a0] sm:$0xff]
    %v235 = vld [vmem:[#allocation6 + $0x2a8] sm:$0xff]
    %v236 = vld [vmem:[#allocation6 + $0x2b0] sm:$0xff]
    %v237 = vld [vmem:[#allocation6 + $0x2b8] sm:$0xff]
    %v238 = vld [vmem:[#allocation6 + $0x2c0] sm:$0xff]
    %v239 = vld [vmem:[#allocation6 + $0x2c8] sm:$0xff]
    %v240 = vld [vmem:[#allocation6 + $0x2d0] sm:$0xff]
    %v241 = vld [vmem:[#allocation6 + $0x2d8] sm:$0xff]
    %v242 = vld [vmem:[#allocation6 + $0x2e0] sm:$0xff]
    %v243 = vld [vmem:[#allocation6 + $0x2e8] sm:$0xff]
    %v244 = vld [vmem:[#allocation6 + $0x2f0] sm:$0xff]
    %v245 = vld [vmem:[#allocation6 + $0x2f8] sm:$0xff]
    %v246 = vld [vmem:[#allocation6 + $0x300] sm:$0xff]
    %v247 = vld [vmem:[#allocation6 + $0x308] sm:$0xff]
    %v248 = vld [vmem:[#allocation6 + $0x310] sm:$0xff]
    %v249 = vld [vmem:[#allocation6 + $0x318] sm:$0xff]
    %v250 = vld [vmem:[#allocation6 + $0x320] sm:$0xff]
    %v251 = vld [vmem:[#allocation6 + $0x328] sm:$0xff]
    %v252 = vld [vmem:[#allocation6 + $0x330] sm:$0xff]
    %v253 = vld [vmem:[#allocation6 + $0x338] sm:$0xff]
    %v254 = vld [vmem:[#allocation6 + $0x340] sm:$0xff]
    %v255 = vld [vmem:[#allocation6 + $0x348] sm:$0xff]
    %v256 = vld [vmem:[#allocation6 + $0x350] sm:$0xff]
    %v257 = vld [vmem:[#allocation6 + $0x358] sm:$0xff]
    %v258 = vld [vmem:[#allocation6 + $0x360] sm:$0xff]
    %v259 = vld [vmem:[#allocation6 + $0x368] sm:$0xff]
    %v260 = vld [vmem:[#allocation6 + $0x370] sm:$0xff]
    %v261 = vld [vmem:[#allocation6 + $0x378] sm:$0xff]
    %v262 = vld [vmem:[#allocation6 + $0x380] sm:$0xff]
    %v263 = vld [vmem:[#allocation6 + $0x388] sm:$0xff]
    %v264 = vld [vmem:[#allocation6 + $0x390] sm:$0xff]
    %v265 = vld [vmem:[#allocation6 + $0x398] sm:$0xff]
    %v266 = vld [vmem:[#allocation6 + $0x3a0] sm:$0xff]
    %v267 = vld [vmem:[#allocation6 + $0x3a8] sm:$0xff]
    %v268 = vld [vmem:[#allocation6 + $0x3b0] sm:$0xff]
    %v269 = vld [vmem:[#allocation6 + $0x3b8] sm:$0xff]
    %v270 = vld [vmem:[#allocation6 + $0x3c0] sm:$0xff]
    %v271 = vld [vmem:[#allocation6 + $0x3c8] sm:$0xff]
    %v272 = vld [vmem:[#allocation6 + $0x3d0] sm:$0xff]
    %v273 = vld [vmem:[#allocation6 + $0x3d8] sm:$0xff]
    %v274 = vld [vmem:[#allocation6 + $0x3e0] sm:$0xff]
    %v275 = vld [vmem:[#allocation6 + $0x3e8] sm:$0xff]
    %v276 = vld [vmem:[#allocation6 + $0x3f0] sm:$0xff]
    %v277 = vld [vmem:[#allocation6 + $0x3f8] sm:$0xff]
    %v278 = vld [vmem:[#allocation6 + $0x400] sm:$0xff]
    %v279 = vld [vmem:[#allocation6 + $0x408] sm:$0xff]
    %v280 = vld [vmem:[#allocation6 + $0x410] sm:$0xff]
    %v281 = vld [vmem:[#allocation6 + $0x418] sm:$0xff]
    %v282 = vld [vmem:[#allocation6 + $0x420] sm:$0xff]
    %v283 = vld [vmem:[#allocation6 + $0x428] sm:$0xff]
    %v284 = vld [vmem:[#allocation6 + $0x430] sm:$0xff]
    %v285 = vld [vmem:[#allocation6 + $0x438] sm:$0xff]
    %v286 = vld [vmem:[#allocation6 + $0x440] sm:$0xff]
    %v287 = vld [vmem:[#allocation6 + $0x448] sm:$0xff]
    %v288 = vld [vmem:[#allocation6 + $0x450] sm:$0xff]
    %v289 = vld [vmem:[#allocation6 + $0x458] sm:$0xff]
    %v290 = vld [vmem:[#allocation6 + $0x460] sm:$0xff]
    %v291 = vld [vmem:[#allocation6 + $0x468] sm:$0xff]
    %v292 = vld [vmem:[#allocation6 + $0x470] sm:$0xff]
    %v293 = vld [vmem:[#allocation6 + $0x478] sm:$0xff]
    %v294 = vld [vmem:[#allocation6 + $0x480] sm:$0xff]
    %v295 = vld [vmem:[#allocation6 + $0x488] sm:$0xff]
    %v296 = vld [vmem:[#allocation6 + $0x490] sm:$0xff]
    %v297 = vld [vmem:[#allocation6 + $0x498] sm:$0xff]
    %v298 = vld [vmem:[#allocation6 + $0x4a0] sm:$0xff]
    %v299 = vld [vmem:[#allocation6 + $0x4a8] sm:$0xff]
    %v300 = vld [vmem:[#allocation6 + $0x4b0] sm:$0xff]
    %v301 = vld [vmem:[#allocation6 + $0x4b8] sm:$0xff]
    %v302 = vld [vmem:[#allocation6 + $0x4c0] sm:$0xff]
    %v303 = vld [vmem:[#allocation6 + $0x4c8] sm:$0xff]
    %v304 = vld [vmem:[#allocation6 + $0x4d0] sm:$0xff]
    %v305 = vld [vmem:[#allocation6 + $0x4d8] sm:$0xff]
    %v306 = vld [vmem:[#allocation6 + $0x4e0] sm:$0xff]
    %v307 = vld [vmem:[#allocation6 + $0x4e8] sm:$0xff]
    %v308 = vld [vmem:[#allocation6 + $0x4f0] sm:$0xff]
    %v309 = vld [vmem:[#allocation6 + $0x4f8] sm:$0xff]
    %v310 = vld [vmem:[#allocation6 + $0x500] sm:$0xff]
    %v311 = vld [vmem:[#allocation6 + $0x508] sm:$0xff]
    %v312 = vld [vmem:[#allocation6 + $0x510] sm:$0xff]
    %v313 = vld [vmem:[#allocation6 + $0x518] sm:$0xff]
    %v314 = vld [vmem:[#allocation6 + $0x520] sm:$0xff]
    %v315 = vld [vmem:[#allocation6 + $0x528] sm:$0xff]
    %v316 = vld [vmem:[#allocation6 + $0x530] sm:$0xff]
    %v317 = vld [vmem:[#allocation6 + $0x538] sm:$0xff]
    %v318 = vld [vmem:[#allocation6 + $0x540] sm:$0xff]
    %v319 = vld [vmem:[#allocation6 + $0x548] sm:$0xff]
    %v320 = vld [vmem:[#allocation6 + $0x550] sm:$0xff]
    %v321 = vld [vmem:[#allocation6 + $0x558] sm:$0xff]
    %v322 = vld [vmem:[#allocation6 + $0x560] sm:$0xff]
    %v323 = vld [vmem:[#allocation6 + $0x568] sm:$0xff]
    %v324 = vld [vmem:[#allocation6 + $0x570] sm:$0xff]
    %v325 = vld [vmem:[#allocation6 + $0x578] sm:$0xff]
    %v326 = vld [vmem:[#allocation6 + $0x580] sm:$0xff]
    %v327 = vld [vmem:[#allocation6 + $0x588] sm:$0xff]
    %v328 = vld [vmem:[#allocation6 + $0x590] sm:$0xff]
    %v329 = vld [vmem:[#allocation6 + $0x598] sm:$0xff]
    %v330 = vld [vmem:[#allocation6 + $0x5a0] sm:$0xff]
    %v331 = vld [vmem:[#allocation6 + $0x5a8] sm:$0xff]
    %v332 = vld [vmem:[#allocation6 + $0x5b0] sm:$0xff]
    %v333 = vld [vmem:[#allocation6 + $0x5b8] sm:$0xff]
    %v334 = vld [vmem:[#allocation6 + $0x5c0] sm:$0xff]
    %v335 = vld [vmem:[#allocation6 + $0x5c8] sm:$0xff]
    %v336 = vld [vmem:[#allocation6 + $0x5d0] sm:$0xff]
    %v337 = vld [vmem:[#allocation6 + $0x5d8] sm:$0xff]
    %v338 = vld [vmem:[#allocation6 + $0x5e0] sm:$0xff]
    %v339 = vld [vmem:[#allocation6 + $0x5e8] sm:$0xff]
    %v340 = vld [vmem:[#allocation6 + $0x5f0] sm:$0xff]
    %v341 = vld [vmem:[#allocation6 + $0x5f8] sm:$0xff]
    %v342 = vld [vmem:[#allocation6 + $0x600] sm:$0xff]
    %v343 = vld [vmem:[#allocation6 + $0x608] sm:$0xff]
    %v344 = vld [vmem:[#allocation6 + $0x610] sm:$0xff]
    %v345 = vld [vmem:[#allocation6 + $0x618] sm:$0xff]
    %v346 = vld [vmem:[#allocation6 + $0x620] sm:$0xff]
    %v347 = vld [vmem:[#allocation6 + $0x628] sm:$0xff]
    %v348 = vld [vmem:[#allocation6 + $0x630] sm:$0xff]
    %v349 = vld [vmem:[#allocation6 + $0x638] sm:$0xff]
    %v350 = vld [vmem:[#allocation6 + $0x640] sm:$0xff]
    %v351 = vld [vmem:[#allocation6 + $0x648] sm:$0xff]
    %v352 = vld [vmem:[#allocation6 + $0x650] sm:$0xff]
    %v353 = vld [vmem:[#allocation6 + $0x658] sm:$0xff]
    %v354 = vld [vmem:[#allocation6 + $0x660] sm:$0xff]
    %v355 = vld [vmem:[#allocation6 + $0x668] sm:$0xff]
    %v356 = vld [vmem:[#allocation6 + $0x670] sm:$0xff]
    %v357 = vld [vmem:[#allocation6 + $0x678] sm:$0xff]
    %v358 = vld [vmem:[#allocation6 + $0x680] sm:$0xff]
    %v359 = vld [vmem:[#allocation6 + $0x688] sm:$0xff]
    %v360 = vld [vmem:[#allocation6 + $0x690] sm:$0xff]
    %v361 = vld [vmem:[#allocation6 + $0x698] sm:$0xff]
    %v362 = vld [vmem:[#allocation6 + $0x6a0] sm:$0xff]
    %v363 = vld [vmem:[#allocation6 + $0x6a8] sm:$0xff]
    %v364 = vld [vmem:[#allocation6 + $0x6b0] sm:$0xff]
    %v365 = vld [vmem:[#allocation6 + $0x6b8] sm:$0xff]
    %v366 = vld [vmem:[#allocation6 + $0x6c0] sm:$0xff]
    %v367 = vld [vmem:[#allocation6 + $0x6c8] sm:$0xff]
    %v368 = vld [vmem:[#allocation6 + $0x6d0] sm:$0xff]
    %v369 = vld [vmem:[#allocation6 + $0x6d8] sm:$0xff]
    %v370 = vld [vmem:[#allocation6 + $0x6e0] sm:$0xff]
    %v371 = vld [vmem:[#allocation6 + $0x6e8] sm:$0xff]
    %v372 = vld [vmem:[#allocation6 + $0x6f0] sm:$0xff]
    %v373 = vld [vmem:[#allocation6 + $0x6f8] sm:$0xff]
    %v374 = vld [vmem:[#allocation6 + $0x700] sm:$0xff]
    %v375 = vld [vmem:[#allocation6 + $0x708] sm:$0xff]
    %v376 = vld [vmem:[#allocation6 + $0x710] sm:$0xff]
    %v377 = vld [vmem:[#allocation6 + $0x718] sm:$0xff]
    %v378 = vld [vmem:[#allocation6 + $0x720] sm:$0xff]
    %v379 = vld [vmem:[#allocation6 + $0x728] sm:$0xff]
    %v380 = vld [vmem:[#allocation6 + $0x730] sm:$0xff]
    %v381 = vld [vmem:[#allocation6 + $0x738] sm:$0xff]
    %v382 = vld [vmem:[#allocation6 + $0x740] sm:$0xff]
    %v383 = vld [vmem:[#allocation6 + $0x748] sm:$0xff]
    %v384 = vld [vmem:[#allocation6 + $0x750] sm:$0xff]
    %v385 = vld [vmem:[#allocation6 + $0x758] sm:$0xff]
    %v386 = vld [vmem:[#allocation6 + $0x760] sm:$0xff]
    %v387 = vld [vmem:[#allocation6 + $0x768] sm:$0xff]
    %v388 = vld [vmem:[#allocation6 + $0x770] sm:$0xff]
    %v389 = vld [vmem:[#allocation6 + $0x778] sm:$0xff]
    %v390 = vld [vmem:[#allocation6 + $0x780] sm:$0xff]
    %v391 = vld [vmem:[#allocation6 + $0x788] sm:$0xff]
    %v392 = vld [vmem:[#allocation6 + $0x790] sm:$0xff]
    %v393 = vld [vmem:[#allocation6 + $0x798] sm:$0xff]
    %v394 = vld [vmem:[#allocation6 + $0x7a0] sm:$0xff]
    %v395 = vld [vmem:[#allocation6 + $0x7a8] sm:$0xff]
    %v396 = vld [vmem:[#allocation6 + $0x7b0] sm:$0xff]
    %v397 = vld [vmem:[#allocation6 + $0x7b8] sm:$0xff]
    %v398 = vld [vmem:[#allocation6 + $0x7c0] sm:$0xff]
    %v399 = vld [vmem:[#allocation6 + $0x7c8] sm:$0xff]
    %v400 = vld [vmem:[#allocation6 + $0x7d0] sm:$0xff]
    %v401 = vld [vmem:[#allocation6 + $0x7d8] sm:$0xff]
    %v402 = vld [vmem:[#allocation6 + $0x7e0] sm:$0xff]
    %v403 = vld [vmem:[#allocation6 + $0x7e8] sm:$0xff]
    %v404 = vld [vmem:[#allocation6 + $0x7f0] sm:$0xff]
    %v405 = vld [vmem:[#allocation6 + $0x7f8] sm:$0xff]
    %v406 = vld [vmem:[%s2] sm:$0xf]
    %v408 = vperm.slane %v406, 0
    %v409 = vperm.slane %v406, 1
    %v410 = vperm.slane %v406, 2
    %v411 = vperm.slane %v406, 3
    %v480 = vunpack.c.l.b16 %v86
    %v481 = vunpack.c.h.b16 %v86
    %v482 = vunpack.c.l.b16 %v87
    %v483 = vunpack.c.h.b16 %v87
    %v484 = vunpack.c.l.b16 %v88
    %v485 = vunpack.c.h.b16 %v88
    %v486 = vunpack.c.l.b16 %v89
    %v487 = vunpack.c.h.b16 %v89
    %v488 = vunpack.c.l.b16 %v90
    %v489 = vunpack.c.h.b16 %v90
    %v490 = vunpack.c.l.b16 %v91
    %v491 = vunpack.c.h.b16 %v91
    %v492 = vunpack.c.l.b16 %v92
    %v493 = vunpack.c.h.b16 %v92
    %v494 = vunpack.c.l.b16 %v93
    %v495 = vunpack.c.h.b16 %v93
    %v496 = vunpack.c.l.b16 %v94
    %v497 = vunpack.c.h.b16 %v94
    %v498 = vunpack.c.l.b16 %v95
    %v499 = vunpack.c.h.b16 %v95
    %v500 = vunpack.c.l.b16 %v96
    %v501 = vunpack.c.h.b16 %v96
    %v502 = vunpack.c.l.b16 %v97
    %v503 = vunpack.c.h.b16 %v97
    %v504 = vunpack.c.l.b16 %v98
    %v505 = vunpack.c.h.b16 %v98
    %v506 = vunpack.c.l.b16 %v99
    %v507 = vunpack.c.h.b16 %v99
    %v508 = vunpack.c.l.b16 %v100
    %v509 = vunpack.c.h.b16 %v100
    %v510 = vunpack.c.l.b16 %v101
    %v511 = vunpack.c.h.b16 %v101
    %v512 = vunpack.c.l.b16 %v102
    %v513 = vunpack.c.h.b16 %v102
    %v514 = vunpack.c.l.b16 %v103
    %v515 = vunpack.c.h.b16 %v103
    %v516 = vunpack.c.l.b16 %v104
    %v517 = vunpack.c.h.b16 %v104
    %v518 = vunpack.c.l.b16 %v105
    %v519 = vunpack.c.h.b16 %v105
    %v520 = vunpack.c.l.b16 %v106
    %v521 = vunpack.c.h.b16 %v106
    %v522 = vunpack.c.l.b16 %v107
    %v523 = vunpack.c.h.b16 %v107
    %v524 = vunpack.c.l.b16 %v108
    %v525 = vunpack.c.h.b16 %v108
    %v526 = vunpack.c.l.b16 %v109
    %v527 = vunpack.c.h.b16 %v109
    %v528 = vunpack.c.l.b16 %v110
    %v529 = vunpack.c.h.b16 %v110
    %v530 = vunpack.c.l.b16 %v111
    %v531 = vunpack.c.h.b16 %v111
    %v532 = vunpack.c.l.b16 %v112
    %v533 = vunpack.c.h.b16 %v112
    %v534 = vunpack.c.l.b16 %v113
    %v535 = vunpack.c.h.b16 %v113
    %v536 = vunpack.c.l.b16 %v114
    %v537 = vunpack.c.h.b16 %v114
    %v538 = vunpack.c.l.b16 %v115
    %v539 = vunpack.c.h.b16 %v115
    %v540 = vunpack.c.l.b16 %v116
    %v541 = vunpack.c.h.b16 %v116
    %v542 = vunpack.c.l.b16 %v117
    %v543 = vunpack.c.h.b16 %v117
    %v544 = vunpack.c.l.b16 %v118
    %v545 = vunpack.c.h.b16 %v118
    %v546 = vunpack.c.l.b16 %v119
    %v547 = vunpack.c.h.b16 %v119
    %v548 = vunpack.c.l.b16 %v120
    %v549 = vunpack.c.h.b16 %v120
    %v550 = vunpack.c.l.b16 %v121
    %v551 = vunpack.c.h.b16 %v121
    %v552 = vunpack.c.l.b16 %v122
    %v553 = vunpack.c.h.b16 %v122
    %v554 = vunpack.c.l.b16 %v123
    %v555 = vunpack.c.h.b16 %v123
    %v556 = vunpack.c.l.b16 %v124
    %v557 = vunpack.c.h.b16 %v124
    %v558 = vunpack.c.l.b16 %v125
    %v559 = vunpack.c.h.b16 %v125
    %v560 = vunpack.c.l.b16 %v126
    %v561 = vunpack.c.h.b16 %v126
    %v562 = vunpack.c.l.b16 %v127
    %v563 = vunpack.c.h.b16 %v127
    %v564 = vunpack.c.l.b16 %v128
    %v565 = vunpack.c.h.b16 %v128
    %v566 = vunpack.c.l.b16 %v129
    %v567 = vunpack.c.h.b16 %v129
    %v568 = vunpack.c.l.b16 %v130
    %v569 = vunpack.c.h.b16 %v130
    %v570 = vunpack.c.l.b16 %v131
    %v571 = vunpack.c.h.b16 %v131
    %v572 = vunpack.c.l.b16 %v132
    %v573 = vunpack.c.h.b16 %v132
    %v574 = vunpack.c.l.b16 %v133
    %v575 = vunpack.c.h.b16 %v133
    %v576 = vunpack.c.l.b16 %v134
    %v577 = vunpack.c.h.b16 %v134
    %v578 = vunpack.c.l.b16 %v135
    %v579 = vunpack.c.h.b16 %v135
    %v580 = vunpack.c.l.b16 %v136
    %v581 = vunpack.c.h.b16 %v136
    %v582 = vunpack.c.l.b16 %v137
    %v583 = vunpack.c.h.b16 %v137
    %v584 = vunpack.c.l.b16 %v138
    %v585 = vunpack.c.h.b16 %v138
    %v586 = vunpack.c.l.b16 %v139
    %v587 = vunpack.c.h.b16 %v139
    %v588 = vunpack.c.l.b16 %v140
    %v589 = vunpack.c.h.b16 %v140
    %v590 = vunpack.c.l.b16 %v141
    %v591 = vunpack.c.h.b16 %v141
    %v592 = vunpack.c.l.b16 %v142
    %v593 = vunpack.c.h.b16 %v142
    %v594 = vunpack.c.l.b16 %v143
    %v595 = vunpack.c.h.b16 %v143
    %v596 = vunpack.c.l.b16 %v144
    %v597 = vunpack.c.h.b16 %v144
    %v598 = vunpack.c.l.b16 %v145
    %v599 = vunpack.c.h.b16 %v145
    %v600 = vunpack.c.l.b16 %v146
    %v601 = vunpack.c.h.b16 %v146
    %v602 = vunpack.c.l.b16 %v147
    %v603 = vunpack.c.h.b16 %v147
    %v604 = vunpack.c.l.b16 %v148
    %v605 = vunpack.c.h.b16 %v148
    %v606 = vunpack.c.l.b16 %v149
    %v607 = vunpack.c.h.b16 %v149
    %v608 = vpack.c.b16 %v488, %v480
    %v609 = vpack.c.b16 %v489, %v481
    %v610 = vpack.c.b16 %v490, %v482
    %v611 = vpack.c.b16 %v491, %v483
    %v612 = vpack.c.b16 %v492, %v484
    %v613 = vpack.c.b16 %v493, %v485
    %v614 = vpack.c.b16 %v494, %v486
    %v615 = vpack.c.b16 %v495, %v487
    %v616 = vpack.c.b16 %v504, %v496
    %v617 = vpack.c.b16 %v505, %v497
    %v618 = vpack.c.b16 %v506, %v498
    %v619 = vpack.c.b16 %v507, %v499
    %v620 = vpack.c.b16 %v508, %v500
    %v621 = vpack.c.b16 %v509, %v501
    %v622 = vpack.c.b16 %v510, %v502
    %v623 = vpack.c.b16 %v511, %v503
    %v624 = vpack.c.b16 %v520, %v512
    %v625 = vpack.c.b16 %v521, %v513
    %v626 = vpack.c.b16 %v522, %v514
    %v627 = vpack.c.b16 %v523, %v515
    %v628 = vpack.c.b16 %v524, %v516
    %v629 = vpack.c.b16 %v525, %v517
    %v630 = vpack.c.b16 %v526, %v518
    %v631 = vpack.c.b16 %v527, %v519
    %v632 = vpack.c.b16 %v536, %v528
    %v633 = vpack.c.b16 %v537, %v529
    %v634 = vpack.c.b16 %v538, %v530
    %v635 = vpack.c.b16 %v539, %v531
    %v636 = vpack.c.b16 %v540, %v532
    %v637 = vpack.c.b16 %v541, %v533
    %v638 = vpack.c.b16 %v542, %v534
    %v639 = vpack.c.b16 %v543, %v535
    %v640 = vpack.c.b16 %v552, %v544
    %v641 = vpack.c.b16 %v553, %v545
    %v642 = vpack.c.b16 %v554, %v546
    %v643 = vpack.c.b16 %v555, %v547
    %v644 = vpack.c.b16 %v556, %v548
    %v645 = vpack.c.b16 %v557, %v549
    %v646 = vpack.c.b16 %v558, %v550
    %v647 = vpack.c.b16 %v559, %v551
    %v648 = vpack.c.b16 %v568, %v560
    %v649 = vpack.c.b16 %v569, %v561
    %v650 = vpack.c.b16 %v570, %v562
    %v651 = vpack.c.b16 %v571, %v563
    %v652 = vpack.c.b16 %v572, %v564
    %v653 = vpack.c.b16 %v573, %v565
    %v654 = vpack.c.b16 %v574, %v566
    %v655 = vpack.c.b16 %v575, %v567
    %v656 = vpack.c.b16 %v584, %v576
    %v657 = vpack.c.b16 %v585, %v577
    %v658 = vpack.c.b16 %v586, %v578
    %v659 = vpack.c.b16 %v587, %v579
    %v660 = vpack.c.b16 %v588, %v580
    %v661 = vpack.c.b16 %v589, %v581
    %v662 = vpack.c.b16 %v590, %v582
    %v663 = vpack.c.b16 %v591, %v583
    %v664 = vpack.c.b16 %v600, %v592
    %v665 = vpack.c.b16 %v601, %v593
    %v666 = vpack.c.b16 %v602, %v594
    %v667 = vpack.c.b16 %v603, %v595
    %v668 = vpack.c.b16 %v604, %v596
    %v669 = vpack.c.b16 %v605, %v597
    %v670 = vpack.c.b16 %v606, %v598
    %v671 = vpack.c.b16 %v607, %v599
    %v992 = vunpack.c.l.b16 %v150
    %v993 = vunpack.c.h.b16 %v150
    %v994 = vunpack.c.l.b16 %v151
    %v995 = vunpack.c.h.b16 %v151
    %v996 = vunpack.c.l.b16 %v152
    %v997 = vunpack.c.h.b16 %v152
    %v998 = vunpack.c.l.b16 %v153
    %v999 = vunpack.c.h.b16 %v153
    %v1000 = vunpack.c.l.b16 %v154
    %v1001 = vunpack.c.h.b16 %v154
    %v1002 = vunpack.c.l.b16 %v155
    %v1003 = vunpack.c.h.b16 %v155
    %v1004 = vunpack.c.l.b16 %v156
    %v1005 = vunpack.c.h.b16 %v156
    %v1006 = vunpack.c.l.b16 %v157
    %v1007 = vunpack.c.h.b16 %v157
    %v1008 = vunpack.c.l.b16 %v158
    %v1009 = vunpack.c.h.b16 %v158
    %v1010 = vunpack.c.l.b16 %v159
    %v1011 = vunpack.c.h.b16 %v159
    %v1012 = vunpack.c.l.b16 %v160
    %v1013 = vunpack.c.h.b16 %v160
    %v1014 = vunpack.c.l.b16 %v161
    %v1015 = vunpack.c.h.b16 %v161
    %v1016 = vunpack.c.l.b16 %v162
    %v1017 = vunpack.c.h.b16 %v162
    %v1018 = vunpack.c.l.b16 %v163
    %v1019 = vunpack.c.h.b16 %v163
    %v1020 = vunpack.c.l.b16 %v164
    %v1021 = vunpack.c.h.b16 %v164
    %v1022 = vunpack.c.l.b16 %v165
    %v1023 = vunpack.c.h.b16 %v165
    %v1024 = vunpack.c.l.b16 %v166
    %v1025 = vunpack.c.h.b16 %v166
    %v1026 = vunpack.c.l.b16 %v167
    %v1027 = vunpack.c.h.b16 %v167
    %v1028 = vunpack.c.l.b16 %v168
    %v1029 = vunpack.c.h.b16 %v168
    %v1030 = vunpack.c.l.b16 %v169
    %v1031 = vunpack.c.h.b16 %v169
    %v1032 = vunpack.c.l.b16 %v170
    %v1033 = vunpack.c.h.b16 %v170
    %v1034 = vunpack.c.l.b16 %v171
    %v1035 = vunpack.c.h.b16 %v171
    %v1036 = vunpack.c.l.b16 %v172
    %v1037 = vunpack.c.h.b16 %v172
    %v1038 = vunpack.c.l.b16 %v173
    %v1039 = vunpack.c.h.b16 %v173
    %v1040 = vunpack.c.l.b16 %v174
    %v1041 = vunpack.c.h.b16 %v174
    %v1042 = vunpack.c.l.b16 %v175
    %v1043 = vunpack.c.h.b16 %v175
    %v1044 = vunpack.c.l.b16 %v176
    %v1045 = vunpack.c.h.b16 %v176
    %v1046 = vunpack.c.l.b16 %v177
    %v1047 = vunpack.c.h.b16 %v177
    %v1048 = vunpack.c.l.b16 %v178
    %v1049 = vunpack.c.h.b16 %v178
    %v1050 = vunpack.c.l.b16 %v179
    %v1051 = vunpack.c.h.b16 %v179
    %v1052 = vunpack.c.l.b16 %v180
    %v1053 = vunpack.c.h.b16 %v180
    %v1054 = vunpack.c.l.b16 %v181
    %v1055 = vunpack.c.h.b16 %v181
    %v1056 = vunpack.c.l.b16 %v182
    %v1057 = vunpack.c.h.b16 %v182
    %v1058 = vunpack.c.l.b16 %v183
    %v1059 = vunpack.c.h.b16 %v183
    %v1060 = vunpack.c.l.b16 %v184
    %v1061 = vunpack.c.h.b16 %v184
    %v1062 = vunpack.c.l.b16 %v185
    %v1063 = vunpack.c.h.b16 %v185
    %v1064 = vunpack.c.l.b16 %v186
    %v1065 = vunpack.c.h.b16 %v186
    %v1066 = vunpack.c.l.b16 %v187
    %v1067 = vunpack.c.h.b16 %v187
    %v1068 = vunpack.c.l.b16 %v188
    %v1069 = vunpack.c.h.b16 %v188
    %v1070 = vunpack.c.l.b16 %v189
    %v1071 = vunpack.c.h.b16 %v189
    %v1072 = vunpack.c.l.b16 %v190
    %v1073 = vunpack.c.h.b16 %v190
    %v1074 = vunpack.c.l.b16 %v191
    %v1075 = vunpack.c.h.b16 %v191
    %v1076 = vunpack.c.l.b16 %v192
    %v1077 = vunpack.c.h.b16 %v192
    %v1078 = vunpack.c.l.b16 %v193
    %v1079 = vunpack.c.h.b16 %v193
    %v1080 = vunpack.c.l.b16 %v194
    %v1081 = vunpack.c.h.b16 %v194
    %v1082 = vunpack.c.l.b16 %v195
    %v1083 = vunpack.c.h.b16 %v195
    %v1084 = vunpack.c.l.b16 %v196
    %v1085 = vunpack.c.h.b16 %v196
    %v1086 = vunpack.c.l.b16 %v197
    %v1087 = vunpack.c.h.b16 %v197
    %v1088 = vunpack.c.l.b16 %v198
    %v1089 = vunpack.c.h.b16 %v198
    %v1090 = vunpack.c.l.b16 %v199
    %v1091 = vunpack.c.h.b16 %v199
    %v1092 = vunpack.c.l.b16 %v200
    %v1093 = vunpack.c.h.b16 %v200
    %v1094 = vunpack.c.l.b16 %v201
    %v1095 = vunpack.c.h.b16 %v201
    %v1096 = vunpack.c.l.b16 %v202
    %v1097 = vunpack.c.h.b16 %v202
    %v1098 = vunpack.c.l.b16 %v203
    %v1099 = vunpack.c.h.b16 %v203
    %v1100 = vunpack.c.l.b16 %v204
    %v1101 = vunpack.c.h.b16 %v204
    %v1102 = vunpack.c.l.b16 %v205
    %v1103 = vunpack.c.h.b16 %v205
    %v1104 = vunpack.c.l.b16 %v206
    %v1105 = vunpack.c.h.b16 %v206
    %v1106 = vunpack.c.l.b16 %v207
    %v1107 = vunpack.c.h.b16 %v207
    %v1108 = vunpack.c.l.b16 %v208
    %v1109 = vunpack.c.h.b16 %v208
    %v1110 = vunpack.c.l.b16 %v209
    %v1111 = vunpack.c.h.b16 %v209
    %v1112 = vunpack.c.l.b16 %v210
    %v1113 = vunpack.c.h.b16 %v210
    %v1114 = vunpack.c.l.b16 %v211
    %v1115 = vunpack.c.h.b16 %v211
    %v1116 = vunpack.c.l.b16 %v212
    %v1117 = vunpack.c.h.b16 %v212
    %v1118 = vunpack.c.l.b16 %v213
    %v1119 = vunpack.c.h.b16 %v213
    %v1120 = vunpack.c.l.b16 %v214
    %v1121 = vunpack.c.h.b16 %v214
    %v1122 = vunpack.c.l.b16 %v215
    %v1123 = vunpack.c.h.b16 %v215
    %v1124 = vunpack.c.l.b16 %v216
    %v1125 = vunpack.c.h.b16 %v216
    %v1126 = vunpack.c.l.b16 %v217
    %v1127 = vunpack.c.h.b16 %v217
    %v1128 = vunpack.c.l.b16 %v218
    %v1129 = vunpack.c.h.b16 %v218
    %v1130 = vunpack.c.l.b16 %v219
    %v1131 = vunpack.c.h.b16 %v219
    %v1132 = vunpack.c.l.b16 %v220
    %v1133 = vunpack.c.h.b16 %v220
    %v1134 = vunpack.c.l.b16 %v221
    %v1135 = vunpack.c.h.b16 %v221
    %v1136 = vunpack.c.l.b16 %v222
    %v1137 = vunpack.c.h.b16 %v222
    %v1138 = vunpack.c.l.b16 %v223
    %v1139 = vunpack.c.h.b16 %v223
    %v1140 = vunpack.c.l.b16 %v224
    %v1141 = vunpack.c.h.b16 %v224
    %v1142 = vunpack.c.l.b16 %v225
    %v1143 = vunpack.c.h.b16 %v225
    %v1144 = vunpack.c.l.b16 %v226
    %v1145 = vunpack.c.h.b16 %v226
    %v1146 = vunpack.c.l.b16 %v227
    %v1147 = vunpack.c.h.b16 %v227
    %v1148 = vunpack.c.l.b16 %v228
    %v1149 = vunpack.c.h.b16 %v228
    %v1150 = vunpack.c.l.b16 %v229
    %v1151 = vunpack.c.h.b16 %v229
    %v1152 = vunpack.c.l.b16 %v230
    %v1153 = vunpack.c.h.b16 %v230
    %v1154 = vunpack.c.l.b16 %v231
    %v1155 = vunpack.c.h.b16 %v231
    %v1156 = vunpack.c.l.b16 %v232
    %v1157 = vunpack.c.h.b16 %v232
    %v1158 = vunpack.c.l.b16 %v233
    %v1159 = vunpack.c.h.b16 %v233
    %v1160 = vunpack.c.l.b16 %v234
    %v1161 = vunpack.c.h.b16 %v234
    %v1162 = vunpack.c.l.b16 %v235
    %v1163 = vunpack.c.h.b16 %v235
    %v1164 = vunpack.c.l.b16 %v236
    %v1165 = vunpack.c.h.b16 %v236
    %v1166 = vunpack.c.l.b16 %v237
    %v1167 = vunpack.c.h.b16 %v237
    %v1168 = vunpack.c.l.b16 %v238
    %v1169 = vunpack.c.h.b16 %v238
    %v1170 = vunpack.c.l.b16 %v239
    %v1171 = vunpack.c.h.b16 %v239
    %v1172 = vunpack.c.l.b16 %v240
    %v1173 = vunpack.c.h.b16 %v240
    %v1174 = vunpack.c.l.b16 %v241
    %v1175 = vunpack.c.h.b16 %v241
    %v1176 = vunpack.c.l.b16 %v242
    %v1177 = vunpack.c.h.b16 %v242
    %v1178 = vunpack.c.l.b16 %v243
    %v1179 = vunpack.c.h.b16 %v243
    %v1180 = vunpack.c.l.b16 %v244
    %v1181 = vunpack.c.h.b16 %v244
    %v1182 = vunpack.c.l.b16 %v245
    %v1183 = vunpack.c.h.b16 %v245
    %v1184 = vunpack.c.l.b16 %v246
    %v1185 = vunpack.c.h.b16 %v246
    %v1186 = vunpack.c.l.b16 %v247
    %v1187 = vunpack.c.h.b16 %v247
    %v1188 = vunpack.c.l.b16 %v248
    %v1189 = vunpack.c.h.b16 %v248
    %v1190 = vunpack.c.l.b16 %v249
    %v1191 = vunpack.c.h.b16 %v249
    %v1192 = vunpack.c.l.b16 %v250
    %v1193 = vunpack.c.h.b16 %v250
    %v1194 = vunpack.c.l.b16 %v251
    %v1195 = vunpack.c.h.b16 %v251
    %v1196 = vunpack.c.l.b16 %v252
    %v1197 = vunpack.c.h.b16 %v252
    %v1198 = vunpack.c.l.b16 %v253
    %v1199 = vunpack.c.h.b16 %v253
    %v1200 = vunpack.c.l.b16 %v254
    %v1201 = vunpack.c.h.b16 %v254
    %v1202 = vunpack.c.l.b16 %v255
    %v1203 = vunpack.c.h.b16 %v255
    %v1204 = vunpack.c.l.b16 %v256
    %v1205 = vunpack.c.h.b16 %v256
    %v1206 = vunpack.c.l.b16 %v257
    %v1207 = vunpack.c.h.b16 %v257
    %v1208 = vunpack.c.l.b16 %v258
    %v1209 = vunpack.c.h.b16 %v258
    %v1210 = vunpack.c.l.b16 %v259
    %v1211 = vunpack.c.h.b16 %v259
    %v1212 = vunpack.c.l.b16 %v260
    %v1213 = vunpack.c.h.b16 %v260
    %v1214 = vunpack.c.l.b16 %v261
    %v1215 = vunpack.c.h.b16 %v261
    %v1216 = vunpack.c.l.b16 %v262
    %v1217 = vunpack.c.h.b16 %v262
    %v1218 = vunpack.c.l.b16 %v263
    %v1219 = vunpack.c.h.b16 %v263
    %v1220 = vunpack.c.l.b16 %v264
    %v1221 = vunpack.c.h.b16 %v264
    %v1222 = vunpack.c.l.b16 %v265
    %v1223 = vunpack.c.h.b16 %v265
    %v1224 = vunpack.c.l.b16 %v266
    %v1225 = vunpack.c.h.b16 %v266
    %v1226 = vunpack.c.l.b16 %v267
    %v1227 = vunpack.c.h.b16 %v267
    %v1228 = vunpack.c.l.b16 %v268
    %v1229 = vunpack.c.h.b16 %v268
    %v1230 = vunpack.c.l.b16 %v269
    %v1231 = vunpack.c.h.b16 %v269
    %v1232 = vunpack.c.l.b16 %v270
    %v1233 = vunpack.c.h.b16 %v270
    %v1234 = vunpack.c.l.b16 %v271
    %v1235 = vunpack.c.h.b16 %v271
    %v1236 = vunpack.c.l.b16 %v272
    %v1237 = vunpack.c.h.b16 %v272
    %v1238 = vunpack.c.l.b16 %v273
    %v1239 = vunpack.c.h.b16 %v273
    %v1240 = vunpack.c.l.b16 %v274
    %v1241 = vunpack.c.h.b16 %v274
    %v1242 = vunpack.c.l.b16 %v275
    %v1243 = vunpack.c.h.b16 %v275
    %v1244 = vunpack.c.l.b16 %v276
    %v1245 = vunpack.c.h.b16 %v276
    %v1246 = vunpack.c.l.b16 %v277
    %v1247 = vunpack.c.h.b16 %v277
    %v1248 = vunpack.c.l.b16 %v278
    %v1249 = vunpack.c.h.b16 %v278
    %v1250 = vunpack.c.l.b16 %v279
    %v1251 = vunpack.c.h.b16 %v279
    %v1252 = vunpack.c.l.b16 %v280
    %v1253 = vunpack.c.h.b16 %v280
    %v1254 = vunpack.c.l.b16 %v281
    %v1255 = vunpack.c.h.b16 %v281
    %v1256 = vunpack.c.l.b16 %v282
    %v1257 = vunpack.c.h.b16 %v282
    %v1258 = vunpack.c.l.b16 %v283
    %v1259 = vunpack.c.h.b16 %v283
    %v1260 = vunpack.c.l.b16 %v284
    %v1261 = vunpack.c.h.b16 %v284
    %v1262 = vunpack.c.l.b16 %v285
    %v1263 = vunpack.c.h.b16 %v285
    %v1264 = vunpack.c.l.b16 %v286
    %v1265 = vunpack.c.h.b16 %v286
    %v1266 = vunpack.c.l.b16 %v287
    %v1267 = vunpack.c.h.b16 %v287
    %v1268 = vunpack.c.l.b16 %v288
    %v1269 = vunpack.c.h.b16 %v288
    %v1270 = vunpack.c.l.b16 %v289
    %v1271 = vunpack.c.h.b16 %v289
    %v1272 = vunpack.c.l.b16 %v290
    %v1273 = vunpack.c.h.b16 %v290
    %v1274 = vunpack.c.l.b16 %v291
    %v1275 = vunpack.c.h.b16 %v291
    %v1276 = vunpack.c.l.b16 %v292
    %v1277 = vunpack.c.h.b16 %v292
    %v1278 = vunpack.c.l.b16 %v293
    %v1279 = vunpack.c.h.b16 %v293
    %v1280 = vunpack.c.l.b16 %v294
    %v1281 = vunpack.c.h.b16 %v294
    %v1282 = vunpack.c.l.b16 %v295
    %v1283 = vunpack.c.h.b16 %v295
    %v1284 = vunpack.c.l.b16 %v296
    %v1285 = vunpack.c.h.b16 %v296
    %v1286 = vunpack.c.l.b16 %v297
    %v1287 = vunpack.c.h.b16 %v297
    %v1288 = vunpack.c.l.b16 %v298
    %v1289 = vunpack.c.h.b16 %v298
    %v1290 = vunpack.c.l.b16 %v299
    %v1291 = vunpack.c.h.b16 %v299
    %v1292 = vunpack.c.l.b16 %v300
    %v1293 = vunpack.c.h.b16 %v300
    %v1294 = vunpack.c.l.b16 %v301
    %v1295 = vunpack.c.h.b16 %v301
    %v1296 = vunpack.c.l.b16 %v302
    %v1297 = vunpack.c.h.b16 %v302
    %v1298 = vunpack.c.l.b16 %v303
    %v1299 = vunpack.c.h.b16 %v303
    %v1300 = vunpack.c.l.b16 %v304
    %v1301 = vunpack.c.h.b16 %v304
    %v1302 = vunpack.c.l.b16 %v305
    %v1303 = vunpack.c.h.b16 %v305
    %v1304 = vunpack.c.l.b16 %v306
    %v1305 = vunpack.c.h.b16 %v306
    %v1306 = vunpack.c.l.b16 %v307
    %v1307 = vunpack.c.h.b16 %v307
    %v1308 = vunpack.c.l.b16 %v308
    %v1309 = vunpack.c.h.b16 %v308
    %v1310 = vunpack.c.l.b16 %v309
    %v1311 = vunpack.c.h.b16 %v309
    %v1312 = vunpack.c.l.b16 %v310
    %v1313 = vunpack.c.h.b16 %v310
    %v1314 = vunpack.c.l.b16 %v311
    %v1315 = vunpack.c.h.b16 %v311
    %v1316 = vunpack.c.l.b16 %v312
    %v1317 = vunpack.c.h.b16 %v312
    %v1318 = vunpack.c.l.b16 %v313
    %v1319 = vunpack.c.h.b16 %v313
    %v1320 = vunpack.c.l.b16 %v314
    %v1321 = vunpack.c.h.b16 %v314
    %v1322 = vunpack.c.l.b16 %v315
    %v1323 = vunpack.c.h.b16 %v315
    %v1324 = vunpack.c.l.b16 %v316
    %v1325 = vunpack.c.h.b16 %v316
    %v1326 = vunpack.c.l.b16 %v317
    %v1327 = vunpack.c.h.b16 %v317
    %v1328 = vunpack.c.l.b16 %v318
    %v1329 = vunpack.c.h.b16 %v318
    %v1330 = vunpack.c.l.b16 %v319
    %v1331 = vunpack.c.h.b16 %v319
    %v1332 = vunpack.c.l.b16 %v320
    %v1333 = vunpack.c.h.b16 %v320
    %v1334 = vunpack.c.l.b16 %v321
    %v1335 = vunpack.c.h.b16 %v321
    %v1336 = vunpack.c.l.b16 %v322
    %v1337 = vunpack.c.h.b16 %v322
    %v1338 = vunpack.c.l.b16 %v323
    %v1339 = vunpack.c.h.b16 %v323
    %v1340 = vunpack.c.l.b16 %v324
    %v1341 = vunpack.c.h.b16 %v324
    %v1342 = vunpack.c.l.b16 %v325
    %v1343 = vunpack.c.h.b16 %v325
    %v1344 = vunpack.c.l.b16 %v326
    %v1345 = vunpack.c.h.b16 %v326
    %v1346 = vunpack.c.l.b16 %v327
    %v1347 = vunpack.c.h.b16 %v327
    %v1348 = vunpack.c.l.b16 %v328
    %v1349 = vunpack.c.h.b16 %v328
    %v1350 = vunpack.c.l.b16 %v329
    %v1351 = vunpack.c.h.b16 %v329
    %v1352 = vunpack.c.l.b16 %v330
    %v1353 = vunpack.c.h.b16 %v330
    %v1354 = vunpack.c.l.b16 %v331
    %v1355 = vunpack.c.h.b16 %v331
    %v1356 = vunpack.c.l.b16 %v332
    %v1357 = vunpack.c.h.b16 %v332
    %v1358 = vunpack.c.l.b16 %v333
    %v1359 = vunpack.c.h.b16 %v333
    %v1360 = vunpack.c.l.b16 %v334
    %v1361 = vunpack.c.h.b16 %v334
    %v1362 = vunpack.c.l.b16 %v335
    %v1363 = vunpack.c.h.b16 %v335
    %v1364 = vunpack.c.l.b16 %v336
    %v1365 = vunpack.c.h.b16 %v336
    %v1366 = vunpack.c.l.b16 %v337
    %v1367 = vunpack.c.h.b16 %v337
    %v1368 = vunpack.c.l.b16 %v338
    %v1369 = vunpack.c.h.b16 %v338
    %v1370 = vunpack.c.l.b16 %v339
    %v1371 = vunpack.c.h.b16 %v339
    %v1372 = vunpack.c.l.b16 %v340
    %v1373 = vunpack.c.h.b16 %v340
    %v1374 = vunpack.c.l.b16 %v341
    %v1375 = vunpack.c.h.b16 %v341
    %v1376 = vunpack.c.l.b16 %v342
    %v1377 = vunpack.c.h.b16 %v342
    %v1378 = vunpack.c.l.b16 %v343
    %v1379 = vunpack.c.h.b16 %v343
    %v1380 = vunpack.c.l.b16 %v344
    %v1381 = vunpack.c.h.b16 %v344
    %v1382 = vunpack.c.l.b16 %v345
    %v1383 = vunpack.c.h.b16 %v345
    %v1384 = vunpack.c.l.b16 %v346
    %v1385 = vunpack.c.h.b16 %v346
    %v1386 = vunpack.c.l.b16 %v347
    %v1387 = vunpack.c.h.b16 %v347
    %v1388 = vunpack.c.l.b16 %v348
    %v1389 = vunpack.c.h.b16 %v348
    %v1390 = vunpack.c.l.b16 %v349
    %v1391 = vunpack.c.h.b16 %v349
    %v1392 = vunpack.c.l.b16 %v350
    %v1393 = vunpack.c.h.b16 %v350
    %v1394 = vunpack.c.l.b16 %v351
    %v1395 = vunpack.c.h.b16 %v351
    %v1396 = vunpack.c.l.b16 %v352
    %v1397 = vunpack.c.h.b16 %v352
    %v1398 = vunpack.c.l.b16 %v353
    %v1399 = vunpack.c.h.b16 %v353
    %v1400 = vunpack.c.l.b16 %v354
    %v1401 = vunpack.c.h.b16 %v354
    %v1402 = vunpack.c.l.b16 %v355
    %v1403 = vunpack.c.h.b16 %v355
    %v1404 = vunpack.c.l.b16 %v356
    %v1405 = vunpack.c.h.b16 %v356
    %v1406 = vunpack.c.l.b16 %v357
    %v1407 = vunpack.c.h.b16 %v357
    %v1408 = vunpack.c.l.b16 %v358
    %v1409 = vunpack.c.h.b16 %v358
    %v1410 = vunpack.c.l.b16 %v359
    %v1411 = vunpack.c.h.b16 %v359
    %v1412 = vunpack.c.l.b16 %v360
    %v1413 = vunpack.c.h.b16 %v360
    %v1414 = vunpack.c.l.b16 %v361
    %v1415 = vunpack.c.h.b16 %v361
    %v1416 = vunpack.c.l.b16 %v362
    %v1417 = vunpack.c.h.b16 %v362
    %v1418 = vunpack.c.l.b16 %v363
    %v1419 = vunpack.c.h.b16 %v363
    %v1420 = vunpack.c.l.b16 %v364
    %v1421 = vunpack.c.h.b16 %v364
    %v1422 = vunpack.c.l.b16 %v365
    %v1423 = vunpack.c.h.b16 %v365
    %v1424 = vunpack.c.l.b16 %v366
    %v1425 = vunpack.c.h.b16 %v366
    %v1426 = vunpack.c.l.b16 %v367
    %v1427 = vunpack.c.h.b16 %v367
    %v1428 = vunpack.c.l.b16 %v368
    %v1429 = vunpack.c.h.b16 %v368
    %v1430 = vunpack.c.l.b16 %v369
    %v1431 = vunpack.c.h.b16 %v369
    %v1432 = vunpack.c.l.b16 %v370
    %v1433 = vunpack.c.h.b16 %v370
    %v1434 = vunpack.c.l.b16 %v371
    %v1435 = vunpack.c.h.b16 %v371
    %v1436 = vunpack.c.l.b16 %v372
    %v1437 = vunpack.c.h.b16 %v372
    %v1438 = vunpack.c.l.b16 %v373
    %v1439 = vunpack.c.h.b16 %v373
    %v1440 = vunpack.c.l.b16 %v374
    %v1441 = vunpack.c.h.b16 %v374
    %v1442 = vunpack.c.l.b16 %v375
    %v1443 = vunpack.c.h.b16 %v375
    %v1444 = vunpack.c.l.b16 %v376
    %v1445 = vunpack.c.h.b16 %v376
    %v1446 = vunpack.c.l.b16 %v377
    %v1447 = vunpack.c.h.b16 %v377
    %v1448 = vunpack.c.l.b16 %v378
    %v1449 = vunpack.c.h.b16 %v378
    %v1450 = vunpack.c.l.b16 %v379
    %v1451 = vunpack.c.h.b16 %v379
    %v1452 = vunpack.c.l.b16 %v380
    %v1453 = vunpack.c.h.b16 %v380
    %v1454 = vunpack.c.l.b16 %v381
    %v1455 = vunpack.c.h.b16 %v381
    %v1456 = vunpack.c.l.b16 %v382
    %v1457 = vunpack.c.h.b16 %v382
    %v1458 = vunpack.c.l.b16 %v383
    %v1459 = vunpack.c.h.b16 %v383
    %v1460 = vunpack.c.l.b16 %v384
    %v1461 = vunpack.c.h.b16 %v384
    %v1462 = vunpack.c.l.b16 %v385
    %v1463 = vunpack.c.h.b16 %v385
    %v1464 = vunpack.c.l.b16 %v386
    %v1465 = vunpack.c.h.b16 %v386
    %v1466 = vunpack.c.l.b16 %v387
    %v1467 = vunpack.c.h.b16 %v387
    %v1468 = vunpack.c.l.b16 %v388
    %v1469 = vunpack.c.h.b16 %v388
    %v1470 = vunpack.c.l.b16 %v389
    %v1471 = vunpack.c.h.b16 %v389
    %v1472 = vunpack.c.l.b16 %v390
    %v1473 = vunpack.c.h.b16 %v390
    %v1474 = vunpack.c.l.b16 %v391
    %v1475 = vunpack.c.h.b16 %v391
    %v1476 = vunpack.c.l.b16 %v392
    %v1477 = vunpack.c.h.b16 %v392
    %v1478 = vunpack.c.l.b16 %v393
    %v1479 = vunpack.c.h.b16 %v393
    %v1480 = vunpack.c.l.b16 %v394
    %v1481 = vunpack.c.h.b16 %v394
    %v1482 = vunpack.c.l.b16 %v395
    %v1483 = vunpack.c.h.b16 %v395
    %v1484 = vunpack.c.l.b16 %v396
    %v1485 = vunpack.c.h.b16 %v396
    %v1486 = vunpack.c.l.b16 %v397
    %v1487 = vunpack.c.h.b16 %v397
    %v1488 = vunpack.c.l.b16 %v398
    %v1489 = vunpack.c.h.b16 %v398
    %v1490 = vunpack.c.l.b16 %v399
    %v1491 = vunpack.c.h.b16 %v399
    %v1492 = vunpack.c.l.b16 %v400
    %v1493 = vunpack.c.h.b16 %v400
    %v1494 = vunpack.c.l.b16 %v401
    %v1495 = vunpack.c.h.b16 %v401
    %v1496 = vunpack.c.l.b16 %v402
    %v1497 = vunpack.c.h.b16 %v402
    %v1498 = vunpack.c.l.b16 %v403
    %v1499 = vunpack.c.h.b16 %v403
    %v1500 = vunpack.c.l.b16 %v404
    %v1501 = vunpack.c.h.b16 %v404
    %v1502 = vunpack.c.l.b16 %v405
    %v1503 = vunpack.c.h.b16 %v405
    %v1504 = vpack.c.b16 %v996, %v992
    %v1505 = vpack.c.b16 %v997, %v993
    %v1506 = vpack.c.b16 %v998, %v994
    %v1507 = vpack.c.b16 %v999, %v995
    %v1508 = vpack.c.b16 %v1004, %v1000
    %v1509 = vpack.c.b16 %v1005, %v1001
    %v1510 = vpack.c.b16 %v1006, %v1002
    %v1511 = vpack.c.b16 %v1007, %v1003
    %v1512 = vpack.c.b16 %v1012, %v1008
    %v1513 = vpack.c.b16 %v1013, %v1009
    %v1514 = vpack.c.b16 %v1014, %v1010
    %v1515 = vpack.c.b16 %v1015, %v1011
    %v1516 = vpack.c.b16 %v1020, %v1016
    %v1517 = vpack.c.b16 %v1021, %v1017
    %v1518 = vpack.c.b16 %v1022, %v1018
    %v1519 = vpack.c.b16 %v1023, %v1019
    %v1520 = vpack.c.b16 %v1028, %v1024
    %v1521 = vpack.c.b16 %v1029, %v1025
    %v1522 = vpack.c.b16 %v1030, %v1026
    %v1523 = vpack.c.b16 %v1031, %v1027
    %v1524 = vpack.c.b16 %v1036, %v1032
    %v1525 = vpack.c.b16 %v1037, %v1033
    %v1526 = vpack.c.b16 %v1038, %v1034
    %v1527 = vpack.c.b16 %v1039, %v1035
    %v1528 = vpack.c.b16 %v1044, %v1040
    %v1529 = vpack.c.b16 %v1045, %v1041
    %v1530 = vpack.c.b16 %v1046, %v1042
    %v1531 = vpack.c.b16 %v1047, %v1043
    %v1532 = vpack.c.b16 %v1052, %v1048
    %v1533 = vpack.c.b16 %v1053, %v1049
    %v1534 = vpack.c.b16 %v1054, %v1050
    %v1535 = vpack.c.b16 %v1055, %v1051
    %v1536 = vpack.c.b16 %v1060, %v1056
    %v1537 = vpack.c.b16 %v1061, %v1057
    %v1538 = vpack.c.b16 %v1062, %v1058
    %v1539 = vpack.c.b16 %v1063, %v1059
    %v1540 = vpack.c.b16 %v1068, %v1064
    %v1541 = vpack.c.b16 %v1069, %v1065
    %v1542 = vpack.c.b16 %v1070, %v1066
    %v1543 = vpack.c.b16 %v1071, %v1067
    %v1544 = vpack.c.b16 %v1076, %v1072
    %v1545 = vpack.c.b16 %v1077, %v1073
    %v1546 = vpack.c.b16 %v1078, %v1074
    %v1547 = vpack.c.b16 %v1079, %v1075
    %v1548 = vpack.c.b16 %v1084, %v1080
    %v1549 = vpack.c.b16 %v1085, %v1081
    %v1550 = vpack.c.b16 %v1086, %v1082
    %v1551 = vpack.c.b16 %v1087, %v1083
    %v1552 = vpack.c.b16 %v1092, %v1088
    %v1553 = vpack.c.b16 %v1093, %v1089
    %v1554 = vpack.c.b16 %v1094, %v1090
    %v1555 = vpack.c.b16 %v1095, %v1091
    %v1556 = vpack.c.b16 %v1100, %v1096
    %v1557 = vpack.c.b16 %v1101, %v1097
    %v1558 = vpack.c.b16 %v1102, %v1098
    %v1559 = vpack.c.b16 %v1103, %v1099
    %v1560 = vpack.c.b16 %v1108, %v1104
    %v1561 = vpack.c.b16 %v1109, %v1105
    %v1562 = vpack.c.b16 %v1110, %v1106
    %v1563 = vpack.c.b16 %v1111, %v1107
    %v1564 = vpack.c.b16 %v1116, %v1112
    %v1565 = vpack.c.b16 %v1117, %v1113
    %v1566 = vpack.c.b16 %v1118, %v1114
    %v1567 = vpack.c.b16 %v1119, %v1115
    %v1568 = vpack.c.b16 %v1124, %v1120
    %v1569 = vpack.c.b16 %v1125, %v1121
    %v1570 = vpack.c.b16 %v1126, %v1122
    %v1571 = vpack.c.b16 %v1127, %v1123
    %v1572 = vpack.c.b16 %v1132, %v1128
    %v1573 = vpack.c.b16 %v1133, %v1129
    %v1574 = vpack.c.b16 %v1134, %v1130
    %v1575 = vpack.c.b16 %v1135, %v1131
    %v1576 = vpack.c.b16 %v1140, %v1136
    %v1577 = vpack.c.b16 %v1141, %v1137
    %v1578 = vpack.c.b16 %v1142, %v1138
    %v1579 = vpack.c.b16 %v1143, %v1139
    %v1580 = vpack.c.b16 %v1148, %v1144
    %v1581 = vpack.c.b16 %v1149, %v1145
    %v1582 = vpack.c.b16 %v1150, %v1146
    %v1583 = vpack.c.b16 %v1151, %v1147
    %v1584 = vpack.c.b16 %v1156, %v1152
    %v1585 = vpack.c.b16 %v1157, %v1153
    %v1586 = vpack.c.b16 %v1158, %v1154
    %v1587 = vpack.c.b16 %v1159, %v1155
    %v1588 = vpack.c.b16 %v1164, %v1160
    %v1589 = vpack.c.b16 %v1165, %v1161
    %v1590 = vpack.c.b16 %v1166, %v1162
    %v1591 = vpack.c.b16 %v1167, %v1163
    %v1592 = vpack.c.b16 %v1172, %v1168
    %v1593 = vpack.c.b16 %v1173, %v1169
    %v1594 = vpack.c.b16 %v1174, %v1170
    %v1595 = vpack.c.b16 %v1175, %v1171
    %v1596 = vpack.c.b16 %v1180, %v1176
    %v1597 = vpack.c.b16 %v1181, %v1177
    %v1598 = vpack.c.b16 %v1182, %v1178
    %v1599 = vpack.c.b16 %v1183, %v1179
    %v1600 = vpack.c.b16 %v1188, %v1184
    %v1601 = vpack.c.b16 %v1189, %v1185
    %v1602 = vpack.c.b16 %v1190, %v1186
    %v1603 = vpack.c.b16 %v1191, %v1187
    %v1604 = vpack.c.b16 %v1196, %v1192
    %v1605 = vpack.c.b16 %v1197, %v1193
    %v1606 = vpack.c.b16 %v1198, %v1194
    %v1607 = vpack.c.b16 %v1199, %v1195
    %v1608 = vpack.c.b16 %v1204, %v1200
    %v1609 = vpack.c.b16 %v1205, %v1201
    %v1610 = vpack.c.b16 %v1206, %v1202
    %v1611 = vpack.c.b16 %v1207, %v1203
    %v1612 = vpack.c.b16 %v1212, %v1208
    %v1613 = vpack.c.b16 %v1213, %v1209
    %v1614 = vpack.c.b16 %v1214, %v1210
    %v1615 = vpack.c.b16 %v1215, %v1211
    %v1616 = vpack.c.b16 %v1220, %v1216
    %v1617 = vpack.c.b16 %v1221, %v1217
    %v1618 = vpack.c.b16 %v1222, %v1218
    %v1619 = vpack.c.b16 %v1223, %v1219
    %v1620 = vpack.c.b16 %v1228, %v1224
    %v1621 = vpack.c.b16 %v1229, %v1225
    %v1622 = vpack.c.b16 %v1230, %v1226
    %v1623 = vpack.c.b16 %v1231, %v1227
    %v1624 = vpack.c.b16 %v1236, %v1232
    %v1625 = vpack.c.b16 %v1237, %v1233
    %v1626 = vpack.c.b16 %v1238, %v1234
    %v1627 = vpack.c.b16 %v1239, %v1235
    %v1628 = vpack.c.b16 %v1244, %v1240
    %v1629 = vpack.c.b16 %v1245, %v1241
    %v1630 = vpack.c.b16 %v1246, %v1242
    %v1631 = vpack.c.b16 %v1247, %v1243
    %v1632 = vpack.c.b16 %v1252, %v1248
    %v1633 = vpack.c.b16 %v1253, %v1249
    %v1634 = vpack.c.b16 %v1254, %v1250
    %v1635 = vpack.c.b16 %v1255, %v1251
    %v1636 = vpack.c.b16 %v1260, %v1256
    %v1637 = vpack.c.b16 %v1261, %v1257
    %v1638 = vpack.c.b16 %v1262, %v1258
    %v1639 = vpack.c.b16 %v1263, %v1259
    %v1640 = vpack.c.b16 %v1268, %v1264
    %v1641 = vpack.c.b16 %v1269, %v1265
    %v1642 = vpack.c.b16 %v1270, %v1266
    %v1643 = vpack.c.b16 %v1271, %v1267
    %v1644 = vpack.c.b16 %v1276, %v1272
    %v1645 = vpack.c.b16 %v1277, %v1273
    %v1646 = vpack.c.b16 %v1278, %v1274
    %v1647 = vpack.c.b16 %v1279, %v1275
    %v1648 = vpack.c.b16 %v1284, %v1280
    %v1649 = vpack.c.b16 %v1285, %v1281
    %v1650 = vpack.c.b16 %v1286, %v1282
    %v1651 = vpack.c.b16 %v1287, %v1283
    %v1652 = vpack.c.b16 %v1292, %v1288
    %v1653 = vpack.c.b16 %v1293, %v1289
    %v1654 = vpack.c.b16 %v1294, %v1290
    %v1655 = vpack.c.b16 %v1295, %v1291
    %v1656 = vpack.c.b16 %v1300, %v1296
    %v1657 = vpack.c.b16 %v1301, %v1297
    %v1658 = vpack.c.b16 %v1302, %v1298
    %v1659 = vpack.c.b16 %v1303, %v1299
    %v1660 = vpack.c.b16 %v1308, %v1304
    %v1661 = vpack.c.b16 %v1309, %v1305
    %v1662 = vpack.c.b16 %v1310, %v1306
    %v1663 = vpack.c.b16 %v1311, %v1307
    %v1664 = vpack.c.b16 %v1316, %v1312
    %v1665 = vpack.c.b16 %v1317, %v1313
    %v1666 = vpack.c.b16 %v1318, %v1314
    %v1667 = vpack.c.b16 %v1319, %v1315
    %v1668 = vpack.c.b16 %v1324, %v1320
    %v1669 = vpack.c.b16 %v1325, %v1321
    %v1670 = vpack.c.b16 %v1326, %v1322
    %v1671 = vpack.c.b16 %v1327, %v1323
    %v1672 = vpack.c.b16 %v1332, %v1328
    %v1673 = vpack.c.b16 %v1333, %v1329
    %v1674 = vpack.c.b16 %v1334, %v1330
    %v1675 = vpack.c.b16 %v1335, %v1331
    %v1676 = vpack.c.b16 %v1340, %v1336
    %v1677 = vpack.c.b16 %v1341, %v1337
    %v1678 = vpack.c.b16 %v1342, %v1338
    %v1679 = vpack.c.b16 %v1343, %v1339
    %v1680 = vpack.c.b16 %v1348, %v1344
    %v1681 = vpack.c.b16 %v1349, %v1345
    %v1682 = vpack.c.b16 %v1350, %v1346
    %v1683 = vpack.c.b16 %v1351, %v1347
    %v1684 = vpack.c.b16 %v1356, %v1352
    %v1685 = vpack.c.b16 %v1357, %v1353
    %v1686 = vpack.c.b16 %v1358, %v1354
    %v1687 = vpack.c.b16 %v1359, %v1355
    %v1688 = vpack.c.b16 %v1364, %v1360
    %v1689 = vpack.c.b16 %v1365, %v1361
    %v1690 = vpack.c.b16 %v1366, %v1362
    %v1691 = vpack.c.b16 %v1367, %v1363
    %v1692 = vpack.c.b16 %v1372, %v1368
    %v1693 = vpack.c.b16 %v1373, %v1369
    %v1694 = vpack.c.b16 %v1374, %v1370
    %v1695 = vpack.c.b16 %v1375, %v1371
    %v1696 = vpack.c.b16 %v1380, %v1376
    %v1697 = vpack.c.b16 %v1381, %v1377
    %v1698 = vpack.c.b16 %v1382, %v1378
    %v1699 = vpack.c.b16 %v1383, %v1379
    %v1700 = vpack.c.b16 %v1388, %v1384
    %v1701 = vpack.c.b16 %v1389, %v1385
    %v1702 = vpack.c.b16 %v1390, %v1386
    %v1703 = vpack.c.b16 %v1391, %v1387
    %v1704 = vpack.c.b16 %v1396, %v1392
    %v1705 = vpack.c.b16 %v1397, %v1393
    %v1706 = vpack.c.b16 %v1398, %v1394
    %v1707 = vpack.c.b16 %v1399, %v1395
    %v1708 = vpack.c.b16 %v1404, %v1400
    %v1709 = vpack.c.b16 %v1405, %v1401
    %v1710 = vpack.c.b16 %v1406, %v1402
    %v1711 = vpack.c.b16 %v1407, %v1403
    %v1712 = vpack.c.b16 %v1412, %v1408
    %v1713 = vpack.c.b16 %v1413, %v1409
    %v1714 = vpack.c.b16 %v1414, %v1410
    %v1715 = vpack.c.b16 %v1415, %v1411
    %v1716 = vpack.c.b16 %v1420, %v1416
    %v1717 = vpack.c.b16 %v1421, %v1417
    %v1718 = vpack.c.b16 %v1422, %v1418
    %v1719 = vpack.c.b16 %v1423, %v1419
    %v1720 = vpack.c.b16 %v1428, %v1424
    %v1721 = vpack.c.b16 %v1429, %v1425
    %v1722 = vpack.c.b16 %v1430, %v1426
    %v1723 = vpack.c.b16 %v1431, %v1427
    %v1724 = vpack.c.b16 %v1436, %v1432
    %v1725 = vpack.c.b16 %v1437, %v1433
    %v1726 = vpack.c.b16 %v1438, %v1434
    %v1727 = vpack.c.b16 %v1439, %v1435
    %v1728 = vpack.c.b16 %v1444, %v1440
    %v1729 = vpack.c.b16 %v1445, %v1441
    %v1730 = vpack.c.b16 %v1446, %v1442
    %v1731 = vpack.c.b16 %v1447, %v1443
    %v1732 = vpack.c.b16 %v1452, %v1448
    %v1733 = vpack.c.b16 %v1453, %v1449
    %v1734 = vpack.c.b16 %v1454, %v1450
    %v1735 = vpack.c.b16 %v1455, %v1451
    %v1736 = vpack.c.b16 %v1460, %v1456
    %v1737 = vpack.c.b16 %v1461, %v1457
    %v1738 = vpack.c.b16 %v1462, %v1458
    %v1739 = vpack.c.b16 %v1463, %v1459
    %v1740 = vpack.c.b16 %v1468, %v1464
    %v1741 = vpack.c.b16 %v1469, %v1465
    %v1742 = vpack.c.b16 %v1470, %v1466
    %v1743 = vpack.c.b16 %v1471, %v1467
    %v1744 = vpack.c.b16 %v1476, %v1472
    %v1745 = vpack.c.b16 %v1477, %v1473
    %v1746 = vpack.c.b16 %v1478, %v1474
    %v1747 = vpack.c.b16 %v1479, %v1475
    %v1748 = vpack.c.b16 %v1484, %v1480
    %v1749 = vpack.c.b16 %v1485, %v1481
    %v1750 = vpack.c.b16 %v1486, %v1482
    %v1751 = vpack.c.b16 %v1487, %v1483
    %v1752 = vpack.c.b16 %v1492, %v1488
    %v1753 = vpack.c.b16 %v1493, %v1489
    %v1754 = vpack.c.b16 %v1494, %v1490
    %v1755 = vpack.c.b16 %v1495, %v1491
    %v1756 = vpack.c.b16 %v1500, %v1496
    %v1757 = vpack.c.b16 %v1501, %v1497
    %v1758 = vpack.c.b16 %v1502, %v1498
    %v1759 = vpack.c.b16 %v1503, %v1499
    %2016 = vmatpush.bf16.msra.mxu0 %v1532
    %2017 = vmatpush.bf16.msra.mxu0 %v1528
    %2018 = vmatpush.bf16.msra.mxu0 %v1524
    %2019 = vmatpush.bf16.msra.mxu0 %v1520
    %2020 = vmatpush.bf16.msra.mxu0 %v1516
    %2021 = vmatpush.bf16.msra.mxu0 %v1512
    %2022 = vmatpush.bf16.msra.mxu0 %v1508
    %2023 = vmatpush.bf16.msra.mxu0 %v1504
    %2024 = vmatmul.bf16.gmra.mxu0 %v608
    %v2025 = vpop.f32.mrf.mxu0
    %v2026 = vadd.f32 %v408, %v2025
    %v2027 = vpop.f32.mrf.mxu0
    %v2028 = vadd.f32 %v408, %v2027
    %2029 = vmatmul.bf16.gmra.mxu0 %v616
    %v2030 = vpop.f32.mrf.mxu0
    %v2031 = vadd.f32 %v408, %v2030
    %v2032 = vpop.f32.mrf.mxu0
    %v2033 = vadd.f32 %v408, %v2032
    %2034 = vmatmul.bf16.gmra.mxu0 %v624
    %v2035 = vpop.f32.mrf.mxu0
    %v2036 = vadd.f32 %v408, %v2035
    %v2037 = vpop.f32.mrf.mxu0
    %v2038 = vadd.f32 %v408, %v2037
    %2039 = vmatmul.bf16.gmra.mxu0 %v632
    %v2040 = vpop.f32.mrf.mxu0
    %v2041 = vadd.f32 %v408, %v2040
    %v2042 = vpop.f32.mrf.mxu0
    %v2043 = vadd.f32 %v408, %v2042
    %2044 = vmatmul.bf16.gmra.mxu0 %v640
    %v2045 = vpop.f32.mrf.mxu0
    %v2046 = vadd.f32 %v408, %v2045
    %v2047 = vpop.f32.mrf.mxu0
    %v2048 = vadd.f32 %v408, %v2047
    %2049 = vmatmul.bf16.gmra.mxu0 %v648
    %v2050 = vpop.f32.mrf.mxu0
    %v2051 = vadd.f32 %v408, %v2050
    %v2052 = vpop.f32.mrf.mxu0
    %v2053 = vadd.f32 %v408, %v2052
    %2054 = vmatmul.bf16.gmra.mxu0 %v656
    %v2055 = vpop.f32.mrf.mxu0
    %v2056 = vadd.f32 %v408, %v2055
    %v2057 = vpop.f32.mrf.mxu0
    %v2058 = vadd.f32 %v408, %v2057
    %2059 = vmatmul.bf16.gmra.mxu0 %v664
    %v2060 = vpop.f32.mrf.mxu0
    %v2061 = vadd.f32 %v408, %v2060
    %v2062 = vpop.f32.mrf.mxu0
    %v2063 = vadd.f32 %v408, %v2062
    %2064 = vdwg.mxu0
    %2065 = vmatpush.bf16.msra.mxu0 %v1564
    %2066 = vmatpush.bf16.msra.mxu0 %v1560
    %2067 = vmatpush.bf16.msra.mxu0 %v1556
    %2068 = vmatpush.bf16.msra.mxu0 %v1552
    %2069 = vmatpush.bf16.msra.mxu0 %v1548
    %2070 = vmatpush.bf16.msra.mxu0 %v1544
    %2071 = vmatpush.bf16.msra.mxu0 %v1540
    %2072 = vmatpush.bf16.msra.mxu0 %v1536
    %2073 = vmatmul.bf16.gmra.mxu0 %v609
    %v2074 = vpop.f32.mrf.mxu0
    %v2075 = vadd.f32 %v2026, %v2074
    %v2076 = vpop.f32.mrf.mxu0
    %v2077 = vadd.f32 %v2028, %v2076
    %2078 = vmatmul.bf16.gmra.mxu0 %v617
    %v2079 = vpop.f32.mrf.mxu0
    %v2080 = vadd.f32 %v2031, %v2079
    %v2081 = vpop.f32.mrf.mxu0
    %v2082 = vadd.f32 %v2033, %v2081
    %2083 = vmatmul.bf16.gmra.mxu0 %v625
    %v2084 = vpop.f32.mrf.mxu0
    %v2085 = vadd.f32 %v2036, %v2084
    %v2086 = vpop.f32.mrf.mxu0
    %v2087 = vadd.f32 %v2038, %v2086
    %2088 = vmatmul.bf16.gmra.mxu0 %v633
    %v2089 = vpop.f32.mrf.mxu0
    %v2090 = vadd.f32 %v2041, %v2089
    %v2091 = vpop.f32.mrf.mxu0
    %v2092 = vadd.f32 %v2043, %v2091
    %2093 = vmatmul.bf16.gmra.mxu0 %v641
    %v2094 = vpop.f32.mrf.mxu0
    %v2095 = vadd.f32 %v2046, %v2094
    %v2096 = vpop.f32.mrf.mxu0
    %v2097 = vadd.f32 %v2048, %v2096
    %2098 = vmatmul.bf16.gmra.mxu0 %v649
    %v2099 = vpop.f32.mrf.mxu0
    %v2100 = vadd.f32 %v2051, %v2099
    %v2101 = vpop.f32.mrf.mxu0
    %v2102 = vadd.f32 %v2053, %v2101
    %2103 = vmatmul.bf16.gmra.mxu0 %v657
    %v2104 = vpop.f32.mrf.mxu0
    %v2105 = vadd.f32 %v2056, %v2104
    %v2106 = vpop.f32.mrf.mxu0
    %v2107 = vadd.f32 %v2058, %v2106
    %2108 = vmatmul.bf16.gmra.mxu0 %v665
    %v2109 = vpop.f32.mrf.mxu0
    %v2110 = vadd.f32 %v2061, %v2109
    %v2111 = vpop.f32.mrf.mxu0
    %v2112 = vadd.f32 %v2063, %v2111
    %2113 = vdwg.mxu0
    %2114 = vmatpush.bf16.msra.mxu0 %v1596
    %2115 = vmatpush.bf16.msra.mxu0 %v1592
    %2116 = vmatpush.bf16.msra.mxu0 %v1588
    %2117 = vmatpush.bf16.msra.mxu0 %v1584
    %2118 = vmatpush.bf16.msra.mxu0 %v1580
    %2119 = vmatpush.bf16.msra.mxu0 %v1576
    %2120 = vmatpush.bf16.msra.mxu0 %v1572
    %2121 = vmatpush.bf16.msra.mxu0 %v1568
    %2122 = vmatmul.bf16.gmra.mxu0 %v610
    %v2123 = vpop.f32.mrf.mxu0
    %v2124 = vadd.f32 %v2075, %v2123
    %v2125 = vpop.f32.mrf.mxu0
    %v2126 = vadd.f32 %v2077, %v2125
    %2127 = vmatmul.bf16.gmra.mxu0 %v618
    %v2128 = vpop.f32.mrf.mxu0
    %v2129 = vadd.f32 %v2080, %v2128
    %v2130 = vpop.f32.mrf.mxu0
    %v2131 = vadd.f32 %v2082, %v2130
    %2132 = vmatmul.bf16.gmra.mxu0 %v626
    %v2133 = vpop.f32.mrf.mxu0
    %v2134 = vadd.f32 %v2085, %v2133
    %v2135 = vpop.f32.mrf.mxu0
    %v2136 = vadd.f32 %v2087, %v2135
    %2137 = vmatmul.bf16.gmra.mxu0 %v634
    %v2138 = vpop.f32.mrf.mxu0
    %v2139 = vadd.f32 %v2090, %v2138
    %v2140 = vpop.f32.mrf.mxu0
    %v2141 = vadd.f32 %v2092, %v2140
    %2142 = vmatmul.bf16.gmra.mxu0 %v642
    %v2143 = vpop.f32.mrf.mxu0
    %v2144 = vadd.f32 %v2095, %v2143
    %v2145 = vpop.f32.mrf.mxu0
    %v2146 = vadd.f32 %v2097, %v2145
    %2147 = vmatmul.bf16.gmra.mxu0 %v650
    %v2148 = vpop.f32.mrf.mxu0
    %v2149 = vadd.f32 %v2100, %v2148
    %v2150 = vpop.f32.mrf.mxu0
    %v2151 = vadd.f32 %v2102, %v2150
    %2152 = vmatmul.bf16.gmra.mxu0 %v658
    %v2153 = vpop.f32.mrf.mxu0
    %v2154 = vadd.f32 %v2105, %v2153
    %v2155 = vpop.f32.mrf.mxu0
    %v2156 = vadd.f32 %v2107, %v2155
    %2157 = vmatmul.bf16.gmra.mxu0 %v666
    %v2158 = vpop.f32.mrf.mxu0
    %v2159 = vadd.f32 %v2110, %v2158
    %v2160 = vpop.f32.mrf.mxu0
    %v2161 = vadd.f32 %v2112, %v2160
    %2162 = vdwg.mxu0
    %2163 = vmatpush.bf16.msra.mxu0 %v1628
    %2164 = vmatpush.bf16.msra.mxu0 %v1624
    %2165 = vmatpush.bf16.msra.mxu0 %v1620
    %2166 = vmatpush.bf16.msra.mxu0 %v1616
    %2167 = vmatpush.bf16.msra.mxu0 %v1612
    %2168 = vmatpush.bf16.msra.mxu0 %v1608
    %2169 = vmatpush.bf16.msra.mxu0 %v1604
    %2170 = vmatpush.bf16.msra.mxu0 %v1600
    %2171 = vmatmul.bf16.gmra.mxu0 %v611
    %v2172 = vpop.f32.mrf.mxu0
    %v2173 = vadd.f32 %v2124, %v2172
    %v2174 = vpop.f32.mrf.mxu0
    %v2175 = vadd.f32 %v2126, %v2174
    %2176 = vmatmul.bf16.gmra.mxu0 %v619
    %v2177 = vpop.f32.mrf.mxu0
    %v2178 = vadd.f32 %v2129, %v2177
    %v2179 = vpop.f32.mrf.mxu0
    %v2180 = vadd.f32 %v2131, %v2179
    %2181 = vmatmul.bf16.gmra.mxu0 %v627
    %v2182 = vpop.f32.mrf.mxu0
    %v2183 = vadd.f32 %v2134, %v2182
    %v2184 = vpop.f32.mrf.mxu0
    %v2185 = vadd.f32 %v2136, %v2184
    %2186 = vmatmul.bf16.gmra.mxu0 %v635
    %v2187 = vpop.f32.mrf.mxu0
    %v2188 = vadd.f32 %v2139, %v2187
    %v2189 = vpop.f32.mrf.mxu0
    %v2190 = vadd.f32 %v2141, %v2189
    %2191 = vmatmul.bf16.gmra.mxu0 %v643
    %v2192 = vpop.f32.mrf.mxu0
    %v2193 = vadd.f32 %v2144, %v2192
    %v2194 = vpop.f32.mrf.mxu0
    %v2195 = vadd.f32 %v2146, %v2194
    %2196 = vmatmul.bf16.gmra.mxu0 %v651
    %v2197 = vpop.f32.mrf.mxu0
    %v2198 = vadd.f32 %v2149, %v2197
    %v2199 = vpop.f32.mrf.mxu0
    %v2200 = vadd.f32 %v2151, %v2199
    %2201 = vmatmul.bf16.gmra.mxu0 %v659
    %v2202 = vpop.f32.mrf.mxu0
    %v2203 = vadd.f32 %v2154, %v2202
    %v2204 = vpop.f32.mrf.mxu0
    %v2205 = vadd.f32 %v2156, %v2204
    %2206 = vmatmul.bf16.gmra.mxu0 %v667
    %v2207 = vpop.f32.mrf.mxu0
    %v2208 = vadd.f32 %v2159, %v2207
    %v2209 = vpop.f32.mrf.mxu0
    %v2210 = vadd.f32 %v2161, %v2209
    %2211 = vdwg.mxu0
    %2212 = vmatpush.bf16.msra.mxu0 %v1660
    %2213 = vmatpush.bf16.msra.mxu0 %v1656
    %2214 = vmatpush.bf16.msra.mxu0 %v1652
    %2215 = vmatpush.bf16.msra.mxu0 %v1648
    %2216 = vmatpush.bf16.msra.mxu0 %v1644
    %2217 = vmatpush.bf16.msra.mxu0 %v1640
    %2218 = vmatpush.bf16.msra.mxu0 %v1636
    %2219 = vmatpush.bf16.msra.mxu0 %v1632
    %2220 = vmatmul.bf16.gmra.mxu0 %v612
    %v2221 = vpop.f32.mrf.mxu0
    %v2222 = vadd.f32 %v2173, %v2221
    %v2223 = vpop.f32.mrf.mxu0
    %v2224 = vadd.f32 %v2175, %v2223
    %2225 = vmatmul.bf16.gmra.mxu0 %v620
    %v2226 = vpop.f32.mrf.mxu0
    %v2227 = vadd.f32 %v2178, %v2226
    %v2228 = vpop.f32.mrf.mxu0
    %v2229 = vadd.f32 %v2180, %v2228
    %2230 = vmatmul.bf16.gmra.mxu0 %v628
    %v2231 = vpop.f32.mrf.mxu0
    %v2232 = vadd.f32 %v2183, %v2231
    %v2233 = vpop.f32.mrf.mxu0
    %v2234 = vadd.f32 %v2185, %v2233
    %2235 = vmatmul.bf16.gmra.mxu0 %v636
    %v2236 = vpop.f32.mrf.mxu0
    %v2237 = vadd.f32 %v2188, %v2236
    %v2238 = vpop.f32.mrf.mxu0
    %v2239 = vadd.f32 %v2190, %v2238
    %2240 = vmatmul.bf16.gmra.mxu0 %v644
    %v2241 = vpop.f32.mrf.mxu0
    %v2242 = vadd.f32 %v2193, %v2241
    %v2243 = vpop.f32.mrf.mxu0
    %v2244 = vadd.f32 %v2195, %v2243
    %2245 = vmatmul.bf16.gmra.mxu0 %v652
    %v2246 = vpop.f32.mrf.mxu0
    %v2247 = vadd.f32 %v2198, %v2246
    %v2248 = vpop.f32.mrf.mxu0
    %v2249 = vadd.f32 %v2200, %v2248
    %2250 = vmatmul.bf16.gmra.mxu0 %v660
    %v2251 = vpop.f32.mrf.mxu0
    %v2252 = vadd.f32 %v2203, %v2251
    %v2253 = vpop.f32.mrf.mxu0
    %v2254 = vadd.f32 %v2205, %v2253
    %2255 = vmatmul.bf16.gmra.mxu0 %v668
    %v2256 = vpop.f32.mrf.mxu0
    %v2257 = vadd.f32 %v2208, %v2256
    %v2258 = vpop.f32.mrf.mxu0
    %v2259 = vadd.f32 %v2210, %v2258
    %2260 = vdwg.mxu0
    %2261 = vmatpush.bf16.msra.mxu0 %v1692
    %2262 = vmatpush.bf16.msra.mxu0 %v1688
    %2263 = vmatpush.bf16.msra.mxu0 %v1684
    %2264 = vmatpush.bf16.msra.mxu0 %v1680
    %2265 = vmatpush.bf16.msra.mxu0 %v1676
    %2266 = vmatpush.bf16.msra.mxu0 %v1672
    %2267 = vmatpush.bf16.msra.mxu0 %v1668
    %2268 = vmatpush.bf16.msra.mxu0 %v1664
    %2269 = vmatmul.bf16.gmra.mxu0 %v613
    %v2270 = vpop.f32.mrf.mxu0
    %v2271 = vadd.f32 %v2222, %v2270
    %v2272 = vpop.f32.mrf.mxu0
    %v2273 = vadd.f32 %v2224, %v2272
    %2274 = vmatmul.bf16.gmra.mxu0 %v621
    %v2275 = vpop.f32.mrf.mxu0
    %v2276 = vadd.f32 %v2227, %v2275
    %v2277 = vpop.f32.mrf.mxu0
    %v2278 = vadd.f32 %v2229, %v2277
    %2279 = vmatmul.bf16.gmra.mxu0 %v629
    %v2280 = vpop.f32.mrf.mxu0
    %v2281 = vadd.f32 %v2232, %v2280
    %v2282 = vpop.f32.mrf.mxu0
    %v2283 = vadd.f32 %v2234, %v2282
    %2284 = vmatmul.bf16.gmra.mxu0 %v637
    %v2285 = vpop.f32.mrf.mxu0
    %v2286 = vadd.f32 %v2237, %v2285
    %v2287 = vpop.f32.mrf.mxu0
    %v2288 = vadd.f32 %v2239, %v2287
    %2289 = vmatmul.bf16.gmra.mxu0 %v645
    %v2290 = vpop.f32.mrf.mxu0
    %v2291 = vadd.f32 %v2242, %v2290
    %v2292 = vpop.f32.mrf.mxu0
    %v2293 = vadd.f32 %v2244, %v2292
    %2294 = vmatmul.bf16.gmra.mxu0 %v653
    %v2295 = vpop.f32.mrf.mxu0
    %v2296 = vadd.f32 %v2247, %v2295
    %v2297 = vpop.f32.mrf.mxu0
    %v2298 = vadd.f32 %v2249, %v2297
    %2299 = vmatmul.bf16.gmra.mxu0 %v661
    %v2300 = vpop.f32.mrf.mxu0
    %v2301 = vadd.f32 %v2252, %v2300
    %v2302 = vpop.f32.mrf.mxu0
    %v2303 = vadd.f32 %v2254, %v2302
    %2304 = vmatmul.bf16.gmra.mxu0 %v669
    %v2305 = vpop.f32.mrf.mxu0
    %v2306 = vadd.f32 %v2257, %v2305
    %v2307 = vpop.f32.mrf.mxu0
    %v2308 = vadd.f32 %v2259, %v2307
    %2309 = vdwg.mxu0
    %2310 = vmatpush.bf16.msra.mxu0 %v1724
    %2311 = vmatpush.bf16.msra.mxu0 %v1720
    %2312 = vmatpush.bf16.msra.mxu0 %v1716
    %2313 = vmatpush.bf16.msra.mxu0 %v1712
    %2314 = vmatpush.bf16.msra.mxu0 %v1708
    %2315 = vmatpush.bf16.msra.mxu0 %v1704
    %2316 = vmatpush.bf16.msra.mxu0 %v1700
    %2317 = vmatpush.bf16.msra.mxu0 %v1696
    %2318 = vmatmul.bf16.gmra.mxu0 %v614
    %v2319 = vpop.f32.mrf.mxu0
    %v2320 = vadd.f32 %v2271, %v2319
    %v2321 = vpop.f32.mrf.mxu0
    %v2322 = vadd.f32 %v2273, %v2321
    %2323 = vmatmul.bf16.gmra.mxu0 %v622
    %v2324 = vpop.f32.mrf.mxu0
    %v2325 = vadd.f32 %v2276, %v2324
    %v2326 = vpop.f32.mrf.mxu0
    %v2327 = vadd.f32 %v2278, %v2326
    %2328 = vmatmul.bf16.gmra.mxu0 %v630
    %v2329 = vpop.f32.mrf.mxu0
    %v2330 = vadd.f32 %v2281, %v2329
    %v2331 = vpop.f32.mrf.mxu0
    %v2332 = vadd.f32 %v2283, %v2331
    %2333 = vmatmul.bf16.gmra.mxu0 %v638
    %v2334 = vpop.f32.mrf.mxu0
    %v2335 = vadd.f32 %v2286, %v2334
    %v2336 = vpop.f32.mrf.mxu0
    %v2337 = vadd.f32 %v2288, %v2336
    %2338 = vmatmul.bf16.gmra.mxu0 %v646
    %v2339 = vpop.f32.mrf.mxu0
    %v2340 = vadd.f32 %v2291, %v2339
    %v2341 = vpop.f32.mrf.mxu0
    %v2342 = vadd.f32 %v2293, %v2341
    %2343 = vmatmul.bf16.gmra.mxu0 %v654
    %v2344 = vpop.f32.mrf.mxu0
    %v2345 = vadd.f32 %v2296, %v2344
    %v2346 = vpop.f32.mrf.mxu0
    %v2347 = vadd.f32 %v2298, %v2346
    %2348 = vmatmul.bf16.gmra.mxu0 %v662
    %v2349 = vpop.f32.mrf.mxu0
    %v2350 = vadd.f32 %v2301, %v2349
    %v2351 = vpop.f32.mrf.mxu0
    %v2352 = vadd.f32 %v2303, %v2351
    %2353 = vmatmul.bf16.gmra.mxu0 %v670
    %v2354 = vpop.f32.mrf.mxu0
    %v2355 = vadd.f32 %v2306, %v2354
    %v2356 = vpop.f32.mrf.mxu0
    %v2357 = vadd.f32 %v2308, %v2356
    %2358 = vdwg.mxu0
    %2359 = vmatpush.bf16.msra.mxu0 %v1756
    %2360 = vmatpush.bf16.msra.mxu0 %v1752
    %2361 = vmatpush.bf16.msra.mxu0 %v1748
    %2362 = vmatpush.bf16.msra.mxu0 %v1744
    %2363 = vmatpush.bf16.msra.mxu0 %v1740
    %2364 = vmatpush.bf16.msra.mxu0 %v1736
    %2365 = vmatpush.bf16.msra.mxu0 %v1732
    %2366 = vmatpush.bf16.msra.mxu0 %v1728
    %2367 = vmatmul.bf16.gmra.mxu0 %v615
    %v2368 = vpop.f32.mrf.mxu0
    %v2369 = vadd.f32 %v2320, %v2368
    %v2370 = vpop.f32.mrf.mxu0
    %v2371 = vadd.f32 %v2322, %v2370
    %2372 = vmatmul.bf16.gmra.mxu0 %v623
    %v2373 = vpop.f32.mrf.mxu0
    %v2374 = vadd.f32 %v2325, %v2373
    %v2375 = vpop.f32.mrf.mxu0
    %v2376 = vadd.f32 %v2327, %v2375
    %2377 = vmatmul.bf16.gmra.mxu0 %v631
    %v2378 = vpop.f32.mrf.mxu0
    %v2379 = vadd.f32 %v2330, %v2378
    %v2380 = vpop.f32.mrf.mxu0
    %v2381 = vadd.f32 %v2332, %v2380
    %2382 = vmatmul.bf16.gmra.mxu0 %v639
    %v2383 = vpop.f32.mrf.mxu0
    %v2384 = vadd.f32 %v2335, %v2383
    %v2385 = vpop.f32.mrf.mxu0
    %v2386 = vadd.f32 %v2337, %v2385
    %2387 = vmatmul.bf16.gmra.mxu0 %v647
    %v2388 = vpop.f32.mrf.mxu0
    %v2389 = vadd.f32 %v2340, %v2388
    %v2390 = vpop.f32.mrf.mxu0
    %v2391 = vadd.f32 %v2342, %v2390
    %2392 = vmatmul.bf16.gmra.mxu0 %v655
    %v2393 = vpop.f32.mrf.mxu0
    %v2394 = vadd.f32 %v2345, %v2393
    %v2395 = vpop.f32.mrf.mxu0
    %v2396 = vadd.f32 %v2347, %v2395
    %2397 = vmatmul.bf16.gmra.mxu0 %v663
    %v2398 = vpop.f32.mrf.mxu0
    %v2399 = vadd.f32 %v2350, %v2398
    %v2400 = vpop.f32.mrf.mxu0
    %v2401 = vadd.f32 %v2352, %v2400
    %2402 = vmatmul.bf16.gmra.mxu0 %v671
    %v2403 = vpop.f32.mrf.mxu0
    %v2404 = vadd.f32 %v2355, %v2403
    %v2405 = vpop.f32.mrf.mxu0
    %v2406 = vadd.f32 %v2357, %v2405
    %2407 = vdwg.mxu0
    %2408 = vmatpush.bf16.msra.mxu0 %v1533
    %2409 = vmatpush.bf16.msra.mxu0 %v1529
    %2410 = vmatpush.bf16.msra.mxu0 %v1525
    %2411 = vmatpush.bf16.msra.mxu0 %v1521
    %2412 = vmatpush.bf16.msra.mxu0 %v1517
    %2413 = vmatpush.bf16.msra.mxu0 %v1513
    %2414 = vmatpush.bf16.msra.mxu0 %v1509
    %2415 = vmatpush.bf16.msra.mxu0 %v1505
    %2416 = vmatmul.bf16.gmra.mxu0 %v608
    %v2417 = vpop.f32.mrf.mxu0
    %v2418 = vadd.f32 %v409, %v2417
    %v2419 = vpop.f32.mrf.mxu0
    %v2420 = vadd.f32 %v409, %v2419
    %2421 = vmatmul.bf16.gmra.mxu0 %v616
    %v2422 = vpop.f32.mrf.mxu0
    %v2423 = vadd.f32 %v409, %v2422
    %v2424 = vpop.f32.mrf.mxu0
    %v2425 = vadd.f32 %v409, %v2424
    %2426 = vmatmul.bf16.gmra.mxu0 %v624
    %v2427 = vpop.f32.mrf.mxu0
    %v2428 = vadd.f32 %v409, %v2427
    %v2429 = vpop.f32.mrf.mxu0
    %v2430 = vadd.f32 %v409, %v2429
    %2431 = vmatmul.bf16.gmra.mxu0 %v632
    %v2432 = vpop.f32.mrf.mxu0
    %v2433 = vadd.f32 %v409, %v2432
    %v2434 = vpop.f32.mrf.mxu0
    %v2435 = vadd.f32 %v409, %v2434
    %2436 = vmatmul.bf16.gmra.mxu0 %v640
    %v2437 = vpop.f32.mrf.mxu0
    %v2438 = vadd.f32 %v409, %v2437
    %v2439 = vpop.f32.mrf.mxu0
    %v2440 = vadd.f32 %v409, %v2439
    %2441 = vmatmul.bf16.gmra.mxu0 %v648
    %v2442 = vpop.f32.mrf.mxu0
    %v2443 = vadd.f32 %v409, %v2442
    %v2444 = vpop.f32.mrf.mxu0
    %v2445 = vadd.f32 %v409, %v2444
    %2446 = vmatmul.bf16.gmra.mxu0 %v656
    %v2447 = vpop.f32.mrf.mxu0
    %v2448 = vadd.f32 %v409, %v2447
    %v2449 = vpop.f32.mrf.mxu0
    %v2450 = vadd.f32 %v409, %v2449
    %2451 = vmatmul.bf16.gmra.mxu0 %v664
    %v2452 = vpop.f32.mrf.mxu0
    %v2453 = vadd.f32 %v409, %v2452
    %v2454 = vpop.f32.mrf.mxu0
    %v2455 = vadd.f32 %v409, %v2454
    %2456 = vdwg.mxu0
    %2457 = vmatpush.bf16.msra.mxu0 %v1565
    %2458 = vmatpush.bf16.msra.mxu0 %v1561
    %2459 = vmatpush.bf16.msra.mxu0 %v1557
    %2460 = vmatpush.bf16.msra.mxu0 %v1553
    %2461 = vmatpush.bf16.msra.mxu0 %v1549
    %2462 = vmatpush.bf16.msra.mxu0 %v1545
    %2463 = vmatpush.bf16.msra.mxu0 %v1541
    %2464 = vmatpush.bf16.msra.mxu0 %v1537
    %2465 = vmatmul.bf16.gmra.mxu0 %v609
    %v2466 = vpop.f32.mrf.mxu0
    %v2467 = vadd.f32 %v2418, %v2466
    %v2468 = vpop.f32.mrf.mxu0
    %v2469 = vadd.f32 %v2420, %v2468
    %2470 = vmatmul.bf16.gmra.mxu0 %v617
    %v2471 = vpop.f32.mrf.mxu0
    %v2472 = vadd.f32 %v2423, %v2471
    %v2473 = vpop.f32.mrf.mxu0
    %v2474 = vadd.f32 %v2425, %v2473
    %2475 = vmatmul.bf16.gmra.mxu0 %v625
    %v2476 = vpop.f32.mrf.mxu0
    %v2477 = vadd.f32 %v2428, %v2476
    %v2478 = vpop.f32.mrf.mxu0
    %v2479 = vadd.f32 %v2430, %v2478
    %2480 = vmatmul.bf16.gmra.mxu0 %v633
    %v2481 = vpop.f32.mrf.mxu0
    %v2482 = vadd.f32 %v2433, %v2481
    %v2483 = vpop.f32.mrf.mxu0
    %v2484 = vadd.f32 %v2435, %v2483
    %2485 = vmatmul.bf16.gmra.mxu0 %v641
    %v2486 = vpop.f32.mrf.mxu0
    %v2487 = vadd.f32 %v2438, %v2486
    %v2488 = vpop.f32.mrf.mxu0
    %v2489 = vadd.f32 %v2440, %v2488
    %2490 = vmatmul.bf16.gmra.mxu0 %v649
    %v2491 = vpop.f32.mrf.mxu0
    %v2492 = vadd.f32 %v2443, %v2491
    %v2493 = vpop.f32.mrf.mxu0
    %v2494 = vadd.f32 %v2445, %v2493
    %2495 = vmatmul.bf16.gmra.mxu0 %v657
    %v2496 = vpop.f32.mrf.mxu0
    %v2497 = vadd.f32 %v2448, %v2496
    %v2498 = vpop.f32.mrf.mxu0
    %v2499 = vadd.f32 %v2450, %v2498
    %2500 = vmatmul.bf16.gmra.mxu0 %v665
    %v2501 = vpop.f32.mrf.mxu0
    %v2502 = vadd.f32 %v2453, %v2501
    %v2503 = vpop.f32.mrf.mxu0
    %v2504 = vadd.f32 %v2455, %v2503
    %2505 = vdwg.mxu0
    %2506 = vmatpush.bf16.msra.mxu0 %v1597
    %2507 = vmatpush.bf16.msra.mxu0 %v1593
    %2508 = vmatpush.bf16.msra.mxu0 %v1589
    %2509 = vmatpush.bf16.msra.mxu0 %v1585
    %2510 = vmatpush.bf16.msra.mxu0 %v1581
    %2511 = vmatpush.bf16.msra.mxu0 %v1577
    %2512 = vmatpush.bf16.msra.mxu0 %v1573
    %2513 = vmatpush.bf16.msra.mxu0 %v1569
    %2514 = vmatmul.bf16.gmra.mxu0 %v610
    %v2515 = vpop.f32.mrf.mxu0
    %v2516 = vadd.f32 %v2467, %v2515
    %v2517 = vpop.f32.mrf.mxu0
    %v2518 = vadd.f32 %v2469, %v2517
    %2519 = vmatmul.bf16.gmra.mxu0 %v618
    %v2520 = vpop.f32.mrf.mxu0
    %v2521 = vadd.f32 %v2472, %v2520
    %v2522 = vpop.f32.mrf.mxu0
    %v2523 = vadd.f32 %v2474, %v2522
    %2524 = vmatmul.bf16.gmra.mxu0 %v626
    %v2525 = vpop.f32.mrf.mxu0
    %v2526 = vadd.f32 %v2477, %v2525
    %v2527 = vpop.f32.mrf.mxu0
    %v2528 = vadd.f32 %v2479, %v2527
    %2529 = vmatmul.bf16.gmra.mxu0 %v634
    %v2530 = vpop.f32.mrf.mxu0
    %v2531 = vadd.f32 %v2482, %v2530
    %v2532 = vpop.f32.mrf.mxu0
    %v2533 = vadd.f32 %v2484, %v2532
    %2534 = vmatmul.bf16.gmra.mxu0 %v642
    %v2535 = vpop.f32.mrf.mxu0
    %v2536 = vadd.f32 %v2487, %v2535
    %v2537 = vpop.f32.mrf.mxu0
    %v2538 = vadd.f32 %v2489, %v2537
    %2539 = vmatmul.bf16.gmra.mxu0 %v650
    %v2540 = vpop.f32.mrf.mxu0
    %v2541 = vadd.f32 %v2492, %v2540
    %v2542 = vpop.f32.mrf.mxu0
    %v2543 = vadd.f32 %v2494, %v2542
    %2544 = vmatmul.bf16.gmra.mxu0 %v658
    %v2545 = vpop.f32.mrf.mxu0
    %v2546 = vadd.f32 %v2497, %v2545
    %v2547 = vpop.f32.mrf.mxu0
    %v2548 = vadd.f32 %v2499, %v2547
    %2549 = vmatmul.bf16.gmra.mxu0 %v666
    %v2550 = vpop.f32.mrf.mxu0
    %v2551 = vadd.f32 %v2502, %v2550
    %v2552 = vpop.f32.mrf.mxu0
    %v2553 = vadd.f32 %v2504, %v2552
    %2554 = vdwg.mxu0
    %2555 = vmatpush.bf16.msra.mxu0 %v1629
    %2556 = vmatpush.bf16.msra.mxu0 %v1625
    %2557 = vmatpush.bf16.msra.mxu0 %v1621
    %2558 = vmatpush.bf16.msra.mxu0 %v1617
    %2559 = vmatpush.bf16.msra.mxu0 %v1613
    %2560 = vmatpush.bf16.msra.mxu0 %v1609
    %2561 = vmatpush.bf16.msra.mxu0 %v1605
    %2562 = vmatpush.bf16.msra.mxu0 %v1601
    %2563 = vmatmul.bf16.gmra.mxu0 %v611
    %v2564 = vpop.f32.mrf.mxu0
    %v2565 = vadd.f32 %v2516, %v2564
    %v2566 = vpop.f32.mrf.mxu0
    %v2567 = vadd.f32 %v2518, %v2566
    %2568 = vmatmul.bf16.gmra.mxu0 %v619
    %v2569 = vpop.f32.mrf.mxu0
    %v2570 = vadd.f32 %v2521, %v2569
    %v2571 = vpop.f32.mrf.mxu0
    %v2572 = vadd.f32 %v2523, %v2571
    %2573 = vmatmul.bf16.gmra.mxu0 %v627
    %v2574 = vpop.f32.mrf.mxu0
    %v2575 = vadd.f32 %v2526, %v2574
    %v2576 = vpop.f32.mrf.mxu0
    %v2577 = vadd.f32 %v2528, %v2576
    %2578 = vmatmul.bf16.gmra.mxu0 %v635
    %v2579 = vpop.f32.mrf.mxu0
    %v2580 = vadd.f32 %v2531, %v2579
    %v2581 = vpop.f32.mrf.mxu0
    %v2582 = vadd.f32 %v2533, %v2581
    %2583 = vmatmul.bf16.gmra.mxu0 %v643
    %v2584 = vpop.f32.mrf.mxu0
    %v2585 = vadd.f32 %v2536, %v2584
    %v2586 = vpop.f32.mrf.mxu0
    %v2587 = vadd.f32 %v2538, %v2586
    %2588 = vmatmul.bf16.gmra.mxu0 %v651
    %v2589 = vpop.f32.mrf.mxu0
    %v2590 = vadd.f32 %v2541, %v2589
    %v2591 = vpop.f32.mrf.mxu0
    %v2592 = vadd.f32 %v2543, %v2591
    %2593 = vmatmul.bf16.gmra.mxu0 %v659
    %v2594 = vpop.f32.mrf.mxu0
    %v2595 = vadd.f32 %v2546, %v2594
    %v2596 = vpop.f32.mrf.mxu0
    %v2597 = vadd.f32 %v2548, %v2596
    %2598 = vmatmul.bf16.gmra.mxu0 %v667
    %v2599 = vpop.f32.mrf.mxu0
    %v2600 = vadd.f32 %v2551, %v2599
    %v2601 = vpop.f32.mrf.mxu0
    %v2602 = vadd.f32 %v2553, %v2601
    %2603 = vdwg.mxu0
    %2604 = vmatpush.bf16.msra.mxu0 %v1661
    %2605 = vmatpush.bf16.msra.mxu0 %v1657
    %2606 = vmatpush.bf16.msra.mxu0 %v1653
    %2607 = vmatpush.bf16.msra.mxu0 %v1649
    %2608 = vmatpush.bf16.msra.mxu0 %v1645
    %2609 = vmatpush.bf16.msra.mxu0 %v1641
    %2610 = vmatpush.bf16.msra.mxu0 %v1637
    %2611 = vmatpush.bf16.msra.mxu0 %v1633
    %2612 = vmatmul.bf16.gmra.mxu0 %v612
    %v2613 = vpop.f32.mrf.mxu0
    %v2614 = vadd.f32 %v2565, %v2613
    %v2615 = vpop.f32.mrf.mxu0
    %v2616 = vadd.f32 %v2567, %v2615
    %2617 = vmatmul.bf16.gmra.mxu0 %v620
    %v2618 = vpop.f32.mrf.mxu0
    %v2619 = vadd.f32 %v2570, %v2618
    %v2620 = vpop.f32.mrf.mxu0
    %v2621 = vadd.f32 %v2572, %v2620
    %2622 = vmatmul.bf16.gmra.mxu0 %v628
    %v2623 = vpop.f32.mrf.mxu0
    %v2624 = vadd.f32 %v2575, %v2623
    %v2625 = vpop.f32.mrf.mxu0
    %v2626 = vadd.f32 %v2577, %v2625
    %2627 = vmatmul.bf16.gmra.mxu0 %v636
    %v2628 = vpop.f32.mrf.mxu0
    %v2629 = vadd.f32 %v2580, %v2628
    %v2630 = vpop.f32.mrf.mxu0
    %v2631 = vadd.f32 %v2582, %v2630
    %2632 = vmatmul.bf16.gmra.mxu0 %v644
    %v2633 = vpop.f32.mrf.mxu0
    %v2634 = vadd.f32 %v2585, %v2633
    %v2635 = vpop.f32.mrf.mxu0
    %v2636 = vadd.f32 %v2587, %v2635
    %2637 = vmatmul.bf16.gmra.mxu0 %v652
    %v2638 = vpop.f32.mrf.mxu0
    %v2639 = vadd.f32 %v2590, %v2638
    %v2640 = vpop.f32.mrf.mxu0
    %v2641 = vadd.f32 %v2592, %v2640
    %2642 = vmatmul.bf16.gmra.mxu0 %v660
    %v2643 = vpop.f32.mrf.mxu0
    %v2644 = vadd.f32 %v2595, %v2643
    %v2645 = vpop.f32.mrf.mxu0
    %v2646 = vadd.f32 %v2597, %v2645
    %2647 = vmatmul.bf16.gmra.mxu0 %v668
    %v2648 = vpop.f32.mrf.mxu0
    %v2649 = vadd.f32 %v2600, %v2648
    %v2650 = vpop.f32.mrf.mxu0
    %v2651 = vadd.f32 %v2602, %v2650
    %2652 = vdwg.mxu0
    %2653 = vmatpush.bf16.msra.mxu0 %v1693
    %2654 = vmatpush.bf16.msra.mxu0 %v1689
    %2655 = vmatpush.bf16.msra.mxu0 %v1685
    %2656 = vmatpush.bf16.msra.mxu0 %v1681
    %2657 = vmatpush.bf16.msra.mxu0 %v1677
    %2658 = vmatpush.bf16.msra.mxu0 %v1673
    %2659 = vmatpush.bf16.msra.mxu0 %v1669
    %2660 = vmatpush.bf16.msra.mxu0 %v1665
    %2661 = vmatmul.bf16.gmra.mxu0 %v613
    %v2662 = vpop.f32.mrf.mxu0
    %v2663 = vadd.f32 %v2614, %v2662
    %v2664 = vpop.f32.mrf.mxu0
    %v2665 = vadd.f32 %v2616, %v2664
    %2666 = vmatmul.bf16.gmra.mxu0 %v621
    %v2667 = vpop.f32.mrf.mxu0
    %v2668 = vadd.f32 %v2619, %v2667
    %v2669 = vpop.f32.mrf.mxu0
    %v2670 = vadd.f32 %v2621, %v2669
    %2671 = vmatmul.bf16.gmra.mxu0 %v629
    %v2672 = vpop.f32.mrf.mxu0
    %v2673 = vadd.f32 %v2624, %v2672
    %v2674 = vpop.f32.mrf.mxu0
    %v2675 = vadd.f32 %v2626, %v2674
    %2676 = vmatmul.bf16.gmra.mxu0 %v637
    %v2677 = vpop.f32.mrf.mxu0
    %v2678 = vadd.f32 %v2629, %v2677
    %v2679 = vpop.f32.mrf.mxu0
    %v2680 = vadd.f32 %v2631, %v2679
    %2681 = vmatmul.bf16.gmra.mxu0 %v645
    %v2682 = vpop.f32.mrf.mxu0
    %v2683 = vadd.f32 %v2634, %v2682
    %v2684 = vpop.f32.mrf.mxu0
    %v2685 = vadd.f32 %v2636, %v2684
    %2686 = vmatmul.bf16.gmra.mxu0 %v653
    %v2687 = vpop.f32.mrf.mxu0
    %v2688 = vadd.f32 %v2639, %v2687
    %v2689 = vpop.f32.mrf.mxu0
    %v2690 = vadd.f32 %v2641, %v2689
    %2691 = vmatmul.bf16.gmra.mxu0 %v661
    %v2692 = vpop.f32.mrf.mxu0
    %v2693 = vadd.f32 %v2644, %v2692
    %v2694 = vpop.f32.mrf.mxu0
    %v2695 = vadd.f32 %v2646, %v2694
    %2696 = vmatmul.bf16.gmra.mxu0 %v669
    %v2697 = vpop.f32.mrf.mxu0
    %v2698 = vadd.f32 %v2649, %v2697
    %v2699 = vpop.f32.mrf.mxu0
    %v2700 = vadd.f32 %v2651, %v2699
    %2701 = vdwg.mxu0
    %2702 = vmatpush.bf16.msra.mxu0 %v1725
    %2703 = vmatpush.bf16.msra.mxu0 %v1721
    %2704 = vmatpush.bf16.msra.mxu0 %v1717
    %2705 = vmatpush.bf16.msra.mxu0 %v1713
    %2706 = vmatpush.bf16.msra.mxu0 %v1709
    %2707 = vmatpush.bf16.msra.mxu0 %v1705
    %2708 = vmatpush.bf16.msra.mxu0 %v1701
    %2709 = vmatpush.bf16.msra.mxu0 %v1697
    %2710 = vmatmul.bf16.gmra.mxu0 %v614
    %v2711 = vpop.f32.mrf.mxu0
    %v2712 = vadd.f32 %v2663, %v2711
    %v2713 = vpop.f32.mrf.mxu0
    %v2714 = vadd.f32 %v2665, %v2713
    %2715 = vmatmul.bf16.gmra.mxu0 %v622
    %v2716 = vpop.f32.mrf.mxu0
    %v2717 = vadd.f32 %v2668, %v2716
    %v2718 = vpop.f32.mrf.mxu0
    %v2719 = vadd.f32 %v2670, %v2718
    %2720 = vmatmul.bf16.gmra.mxu0 %v630
    %v2721 = vpop.f32.mrf.mxu0
    %v2722 = vadd.f32 %v2673, %v2721
    %v2723 = vpop.f32.mrf.mxu0
    %v2724 = vadd.f32 %v2675, %v2723
    %2725 = vmatmul.bf16.gmra.mxu0 %v638
    %v2726 = vpop.f32.mrf.mxu0
    %v2727 = vadd.f32 %v2678, %v2726
    %v2728 = vpop.f32.mrf.mxu0
    %v2729 = vadd.f32 %v2680, %v2728
    %2730 = vmatmul.bf16.gmra.mxu0 %v646
    %v2731 = vpop.f32.mrf.mxu0
    %v2732 = vadd.f32 %v2683, %v2731
    %v2733 = vpop.f32.mrf.mxu0
    %v2734 = vadd.f32 %v2685, %v2733
    %2735 = vmatmul.bf16.gmra.mxu0 %v654
    %v2736 = vpop.f32.mrf.mxu0
    %v2737 = vadd.f32 %v2688, %v2736
    %v2738 = vpop.f32.mrf.mxu0
    %v2739 = vadd.f32 %v2690, %v2738
    %2740 = vmatmul.bf16.gmra.mxu0 %v662
    %v2741 = vpop.f32.mrf.mxu0
    %v2742 = vadd.f32 %v2693, %v2741
    %v2743 = vpop.f32.mrf.mxu0
    %v2744 = vadd.f32 %v2695, %v2743
    %2745 = vmatmul.bf16.gmra.mxu0 %v670
    %v2746 = vpop.f32.mrf.mxu0
    %v2747 = vadd.f32 %v2698, %v2746
    %v2748 = vpop.f32.mrf.mxu0
    %v2749 = vadd.f32 %v2700, %v2748
    %2750 = vdwg.mxu0
    %2751 = vmatpush.bf16.msra.mxu0 %v1757
    %2752 = vmatpush.bf16.msra.mxu0 %v1753
    %2753 = vmatpush.bf16.msra.mxu0 %v1749
    %2754 = vmatpush.bf16.msra.mxu0 %v1745
    %2755 = vmatpush.bf16.msra.mxu0 %v1741
    %2756 = vmatpush.bf16.msra.mxu0 %v1737
    %2757 = vmatpush.bf16.msra.mxu0 %v1733
    %2758 = vmatpush.bf16.msra.mxu0 %v1729
    %2759 = vmatmul.bf16.gmra.mxu0 %v615
    %v2760 = vpop.f32.mrf.mxu0
    %v2761 = vadd.f32 %v2712, %v2760
    %v2762 = vpop.f32.mrf.mxu0
    %v2763 = vadd.f32 %v2714, %v2762
    %2764 = vmatmul.bf16.gmra.mxu0 %v623
    %v2765 = vpop.f32.mrf.mxu0
    %v2766 = vadd.f32 %v2717, %v2765
    %v2767 = vpop.f32.mrf.mxu0
    %v2768 = vadd.f32 %v2719, %v2767
    %2769 = vmatmul.bf16.gmra.mxu0 %v631
    %v2770 = vpop.f32.mrf.mxu0
    %v2771 = vadd.f32 %v2722, %v2770
    %v2772 = vpop.f32.mrf.mxu0
    %v2773 = vadd.f32 %v2724, %v2772
    %2774 = vmatmul.bf16.gmra.mxu0 %v639
    %v2775 = vpop.f32.mrf.mxu0
    %v2776 = vadd.f32 %v2727, %v2775
    %v2777 = vpop.f32.mrf.mxu0
    %v2778 = vadd.f32 %v2729, %v2777
    %2779 = vmatmul.bf16.gmra.mxu0 %v647
    %v2780 = vpop.f32.mrf.mxu0
    %v2781 = vadd.f32 %v2732, %v2780
    %v2782 = vpop.f32.mrf.mxu0
    %v2783 = vadd.f32 %v2734, %v2782
    %2784 = vmatmul.bf16.gmra.mxu0 %v655
    %v2785 = vpop.f32.mrf.mxu0
    %v2786 = vadd.f32 %v2737, %v2785
    %v2787 = vpop.f32.mrf.mxu0
    %v2788 = vadd.f32 %v2739, %v2787
    %2789 = vmatmul.bf16.gmra.mxu0 %v663
    %v2790 = vpop.f32.mrf.mxu0
    %v2791 = vadd.f32 %v2742, %v2790
    %v2792 = vpop.f32.mrf.mxu0
    %v2793 = vadd.f32 %v2744, %v2792
    %2794 = vmatmul.bf16.gmra.mxu0 %v671
    %v2795 = vpop.f32.mrf.mxu0
    %v2796 = vadd.f32 %v2747, %v2795
    %v2797 = vpop.f32.mrf.mxu0
    %v2798 = vadd.f32 %v2749, %v2797
    %2799 = vdwg.mxu0
    %2800 = vmatpush.bf16.msra.mxu0 %v1534
    %2801 = vmatpush.bf16.msra.mxu0 %v1530
    %2802 = vmatpush.bf16.msra.mxu0 %v1526
    %2803 = vmatpush.bf16.msra.mxu0 %v1522
    %2804 = vmatpush.bf16.msra.mxu0 %v1518
    %2805 = vmatpush.bf16.msra.mxu0 %v1514
    %2806 = vmatpush.bf16.msra.mxu0 %v1510
    %2807 = vmatpush.bf16.msra.mxu0 %v1506
    %2808 = vmatmul.bf16.gmra.mxu0 %v608
    %v2809 = vpop.f32.mrf.mxu0
    %v2810 = vadd.f32 %v410, %v2809
    %v2811 = vpop.f32.mrf.mxu0
    %v2812 = vadd.f32 %v410, %v2811
    %2813 = vmatmul.bf16.gmra.mxu0 %v616
    %v2814 = vpop.f32.mrf.mxu0
    %v2815 = vadd.f32 %v410, %v2814
    %v2816 = vpop.f32.mrf.mxu0
    %v2817 = vadd.f32 %v410, %v2816
    %2818 = vmatmul.bf16.gmra.mxu0 %v624
    %v2819 = vpop.f32.mrf.mxu0
    %v2820 = vadd.f32 %v410, %v2819
    %v2821 = vpop.f32.mrf.mxu0
    %v2822 = vadd.f32 %v410, %v2821
    %2823 = vmatmul.bf16.gmra.mxu0 %v632
    %v2824 = vpop.f32.mrf.mxu0
    %v2825 = vadd.f32 %v410, %v2824
    %v2826 = vpop.f32.mrf.mxu0
    %v2827 = vadd.f32 %v410, %v2826
    %2828 = vmatmul.bf16.gmra.mxu0 %v640
    %v2829 = vpop.f32.mrf.mxu0
    %v2830 = vadd.f32 %v410, %v2829
    %v2831 = vpop.f32.mrf.mxu0
    %v2832 = vadd.f32 %v410, %v2831
    %2833 = vmatmul.bf16.gmra.mxu0 %v648
    %v2834 = vpop.f32.mrf.mxu0
    %v2835 = vadd.f32 %v410, %v2834
    %v2836 = vpop.f32.mrf.mxu0
    %v2837 = vadd.f32 %v410, %v2836
    %2838 = vmatmul.bf16.gmra.mxu0 %v656
    %v2839 = vpop.f32.mrf.mxu0
    %v2840 = vadd.f32 %v410, %v2839
    %v2841 = vpop.f32.mrf.mxu0
    %v2842 = vadd.f32 %v410, %v2841
    %2843 = vmatmul.bf16.gmra.mxu0 %v664
    %v2844 = vpop.f32.mrf.mxu0
    %v2845 = vadd.f32 %v410, %v2844
    %v2846 = vpop.f32.mrf.mxu0
    %v2847 = vadd.f32 %v410, %v2846
    %2848 = vdwg.mxu0
    %2849 = vmatpush.bf16.msra.mxu0 %v1566
    %2850 = vmatpush.bf16.msra.mxu0 %v1562
    %2851 = vmatpush.bf16.msra.mxu0 %v1558
    %2852 = vmatpush.bf16.msra.mxu0 %v1554
    %2853 = vmatpush.bf16.msra.mxu0 %v1550
    %2854 = vmatpush.bf16.msra.mxu0 %v1546
    %2855 = vmatpush.bf16.msra.mxu0 %v1542
    %2856 = vmatpush.bf16.msra.mxu0 %v1538
    %2857 = vmatmul.bf16.gmra.mxu0 %v609
    %v2858 = vpop.f32.mrf.mxu0
    %v2859 = vadd.f32 %v2810, %v2858
    %v2860 = vpop.f32.mrf.mxu0
    %v2861 = vadd.f32 %v2812, %v2860
    %2862 = vmatmul.bf16.gmra.mxu0 %v617
    %v2863 = vpop.f32.mrf.mxu0
    %v2864 = vadd.f32 %v2815, %v2863
    %v2865 = vpop.f32.mrf.mxu0
    %v2866 = vadd.f32 %v2817, %v2865
    %2867 = vmatmul.bf16.gmra.mxu0 %v625
    %v2868 = vpop.f32.mrf.mxu0
    %v2869 = vadd.f32 %v2820, %v2868
    %v2870 = vpop.f32.mrf.mxu0
    %v2871 = vadd.f32 %v2822, %v2870
    %2872 = vmatmul.bf16.gmra.mxu0 %v633
    %v2873 = vpop.f32.mrf.mxu0
    %v2874 = vadd.f32 %v2825, %v2873
    %v2875 = vpop.f32.mrf.mxu0
    %v2876 = vadd.f32 %v2827, %v2875
    %2877 = vmatmul.bf16.gmra.mxu0 %v641
    %v2878 = vpop.f32.mrf.mxu0
    %v2879 = vadd.f32 %v2830, %v2878
    %v2880 = vpop.f32.mrf.mxu0
    %v2881 = vadd.f32 %v2832, %v2880
    %2882 = vmatmul.bf16.gmra.mxu0 %v649
    %v2883 = vpop.f32.mrf.mxu0
    %v2884 = vadd.f32 %v2835, %v2883
    %v2885 = vpop.f32.mrf.mxu0
    %v2886 = vadd.f32 %v2837, %v2885
    %2887 = vmatmul.bf16.gmra.mxu0 %v657
    %v2888 = vpop.f32.mrf.mxu0
    %v2889 = vadd.f32 %v2840, %v2888
    %v2890 = vpop.f32.mrf.mxu0
    %v2891 = vadd.f32 %v2842, %v2890
    %2892 = vmatmul.bf16.gmra.mxu0 %v665
    %v2893 = vpop.f32.mrf.mxu0
    %v2894 = vadd.f32 %v2845, %v2893
    %v2895 = vpop.f32.mrf.mxu0
    %v2896 = vadd.f32 %v2847, %v2895
    %2897 = vdwg.mxu0
    %2898 = vmatpush.bf16.msra.mxu0 %v1598
    %2899 = vmatpush.bf16.msra.mxu0 %v1594
    %2900 = vmatpush.bf16.msra.mxu0 %v1590
    %2901 = vmatpush.bf16.msra.mxu0 %v1586
    %2902 = vmatpush.bf16.msra.mxu0 %v1582
    %2903 = vmatpush.bf16.msra.mxu0 %v1578
    %2904 = vmatpush.bf16.msra.mxu0 %v1574
    %2905 = vmatpush.bf16.msra.mxu0 %v1570
    %2906 = vmatmul.bf16.gmra.mxu0 %v610
    %v2907 = vpop.f32.mrf.mxu0
    %v2908 = vadd.f32 %v2859, %v2907
    %v2909 = vpop.f32.mrf.mxu0
    %v2910 = vadd.f32 %v2861, %v2909
    %2911 = vmatmul.bf16.gmra.mxu0 %v618
    %v2912 = vpop.f32.mrf.mxu0
    %v2913 = vadd.f32 %v2864, %v2912
    %v2914 = vpop.f32.mrf.mxu0
    %v2915 = vadd.f32 %v2866, %v2914
    %2916 = vmatmul.bf16.gmra.mxu0 %v626
    %v2917 = vpop.f32.mrf.mxu0
    %v2918 = vadd.f32 %v2869, %v2917
    %v2919 = vpop.f32.mrf.mxu0
    %v2920 = vadd.f32 %v2871, %v2919
    %2921 = vmatmul.bf16.gmra.mxu0 %v634
    %v2922 = vpop.f32.mrf.mxu0
    %v2923 = vadd.f32 %v2874, %v2922
    %v2924 = vpop.f32.mrf.mxu0
    %v2925 = vadd.f32 %v2876, %v2924
    %2926 = vmatmul.bf16.gmra.mxu0 %v642
    %v2927 = vpop.f32.mrf.mxu0
    %v2928 = vadd.f32 %v2879, %v2927
    %v2929 = vpop.f32.mrf.mxu0
    %v2930 = vadd.f32 %v2881, %v2929
    %2931 = vmatmul.bf16.gmra.mxu0 %v650
    %v2932 = vpop.f32.mrf.mxu0
    %v2933 = vadd.f32 %v2884, %v2932
    %v2934 = vpop.f32.mrf.mxu0
    %v2935 = vadd.f32 %v2886, %v2934
    %2936 = vmatmul.bf16.gmra.mxu0 %v658
    %v2937 = vpop.f32.mrf.mxu0
    %v2938 = vadd.f32 %v2889, %v2937
    %v2939 = vpop.f32.mrf.mxu0
    %v2940 = vadd.f32 %v2891, %v2939
    %2941 = vmatmul.bf16.gmra.mxu0 %v666
    %v2942 = vpop.f32.mrf.mxu0
    %v2943 = vadd.f32 %v2894, %v2942
    %v2944 = vpop.f32.mrf.mxu0
    %v2945 = vadd.f32 %v2896, %v2944
    %2946 = vdwg.mxu0
    %2947 = vmatpush.bf16.msra.mxu0 %v1630
    %2948 = vmatpush.bf16.msra.mxu0 %v1626
    %2949 = vmatpush.bf16.msra.mxu0 %v1622
    %2950 = vmatpush.bf16.msra.mxu0 %v1618
    %2951 = vmatpush.bf16.msra.mxu0 %v1614
    %2952 = vmatpush.bf16.msra.mxu0 %v1610
    %2953 = vmatpush.bf16.msra.mxu0 %v1606
    %2954 = vmatpush.bf16.msra.mxu0 %v1602
    %2955 = vmatmul.bf16.gmra.mxu0 %v611
    %v2956 = vpop.f32.mrf.mxu0
    %v2957 = vadd.f32 %v2908, %v2956
    %v2958 = vpop.f32.mrf.mxu0
    %v2959 = vadd.f32 %v2910, %v2958
    %2960 = vmatmul.bf16.gmra.mxu0 %v619
    %v2961 = vpop.f32.mrf.mxu0
    %v2962 = vadd.f32 %v2913, %v2961
    %v2963 = vpop.f32.mrf.mxu0
    %v2964 = vadd.f32 %v2915, %v2963
    %2965 = vmatmul.bf16.gmra.mxu0 %v627
    %v2966 = vpop.f32.mrf.mxu0
    %v2967 = vadd.f32 %v2918, %v2966
    %v2968 = vpop.f32.mrf.mxu0
    %v2969 = vadd.f32 %v2920, %v2968
    %2970 = vmatmul.bf16.gmra.mxu0 %v635
    %v2971 = vpop.f32.mrf.mxu0
    %v2972 = vadd.f32 %v2923, %v2971
    %v2973 = vpop.f32.mrf.mxu0
    %v2974 = vadd.f32 %v2925, %v2973
    %2975 = vmatmul.bf16.gmra.mxu0 %v643
    %v2976 = vpop.f32.mrf.mxu0
    %v2977 = vadd.f32 %v2928, %v2976
    %v2978 = vpop.f32.mrf.mxu0
    %v2979 = vadd.f32 %v2930, %v2978
    %2980 = vmatmul.bf16.gmra.mxu0 %v651
    %v2981 = vpop.f32.mrf.mxu0
    %v2982 = vadd.f32 %v2933, %v2981
    %v2983 = vpop.f32.mrf.mxu0
    %v2984 = vadd.f32 %v2935, %v2983
    %2985 = vmatmul.bf16.gmra.mxu0 %v659
    %v2986 = vpop.f32.mrf.mxu0
    %v2987 = vadd.f32 %v2938, %v2986
    %v2988 = vpop.f32.mrf.mxu0
    %v2989 = vadd.f32 %v2940, %v2988
    %2990 = vmatmul.bf16.gmra.mxu0 %v667
    %v2991 = vpop.f32.mrf.mxu0
    %v2992 = vadd.f32 %v2943, %v2991
    %v2993 = vpop.f32.mrf.mxu0
    %v2994 = vadd.f32 %v2945, %v2993
    %2995 = vdwg.mxu0
    %2996 = vmatpush.bf16.msra.mxu0 %v1662
    %2997 = vmatpush.bf16.msra.mxu0 %v1658
    %2998 = vmatpush.bf16.msra.mxu0 %v1654
    %2999 = vmatpush.bf16.msra.mxu0 %v1650
    %3000 = vmatpush.bf16.msra.mxu0 %v1646
    %3001 = vmatpush.bf16.msra.mxu0 %v1642
    %3002 = vmatpush.bf16.msra.mxu0 %v1638
    %3003 = vmatpush.bf16.msra.mxu0 %v1634
    %3004 = vmatmul.bf16.gmra.mxu0 %v612
    %v3005 = vpop.f32.mrf.mxu0
    %v3006 = vadd.f32 %v2957, %v3005
    %v3007 = vpop.f32.mrf.mxu0
    %v3008 = vadd.f32 %v2959, %v3007
    %3009 = vmatmul.bf16.gmra.mxu0 %v620
    %v3010 = vpop.f32.mrf.mxu0
    %v3011 = vadd.f32 %v2962, %v3010
    %v3012 = vpop.f32.mrf.mxu0
    %v3013 = vadd.f32 %v2964, %v3012
    %3014 = vmatmul.bf16.gmra.mxu0 %v628
    %v3015 = vpop.f32.mrf.mxu0
    %v3016 = vadd.f32 %v2967, %v3015
    %v3017 = vpop.f32.mrf.mxu0
    %v3018 = vadd.f32 %v2969, %v3017
    %3019 = vmatmul.bf16.gmra.mxu0 %v636
    %v3020 = vpop.f32.mrf.mxu0
    %v3021 = vadd.f32 %v2972, %v3020
    %v3022 = vpop.f32.mrf.mxu0
    %v3023 = vadd.f32 %v2974, %v3022
    %3024 = vmatmul.bf16.gmra.mxu0 %v644
    %v3025 = vpop.f32.mrf.mxu0
    %v3026 = vadd.f32 %v2977, %v3025
    %v3027 = vpop.f32.mrf.mxu0
    %v3028 = vadd.f32 %v2979, %v3027
    %3029 = vmatmul.bf16.gmra.mxu0 %v652
    %v3030 = vpop.f32.mrf.mxu0
    %v3031 = vadd.f32 %v2982, %v3030
    %v3032 = vpop.f32.mrf.mxu0
    %v3033 = vadd.f32 %v2984, %v3032
    %3034 = vmatmul.bf16.gmra.mxu0 %v660
    %v3035 = vpop.f32.mrf.mxu0
    %v3036 = vadd.f32 %v2987, %v3035
    %v3037 = vpop.f32.mrf.mxu0
    %v3038 = vadd.f32 %v2989, %v3037
    %3039 = vmatmul.bf16.gmra.mxu0 %v668
    %v3040 = vpop.f32.mrf.mxu0
    %v3041 = vadd.f32 %v2992, %v3040
    %v3042 = vpop.f32.mrf.mxu0
    %v3043 = vadd.f32 %v2994, %v3042
    %3044 = vdwg.mxu0
    %3045 = vmatpush.bf16.msra.mxu0 %v1694
    %3046 = vmatpush.bf16.msra.mxu0 %v1690
    %3047 = vmatpush.bf16.msra.mxu0 %v1686
    %3048 = vmatpush.bf16.msra.mxu0 %v1682
    %3049 = vmatpush.bf16.msra.mxu0 %v1678
    %3050 = vmatpush.bf16.msra.mxu0 %v1674
    %3051 = vmatpush.bf16.msra.mxu0 %v1670
    %3052 = vmatpush.bf16.msra.mxu0 %v1666
    %3053 = vmatmul.bf16.gmra.mxu0 %v613
    %v3054 = vpop.f32.mrf.mxu0
    %v3055 = vadd.f32 %v3006, %v3054
    %v3056 = vpop.f32.mrf.mxu0
    %v3057 = vadd.f32 %v3008, %v3056
    %3058 = vmatmul.bf16.gmra.mxu0 %v621
    %v3059 = vpop.f32.mrf.mxu0
    %v3060 = vadd.f32 %v3011, %v3059
    %v3061 = vpop.f32.mrf.mxu0
    %v3062 = vadd.f32 %v3013, %v3061
    %3063 = vmatmul.bf16.gmra.mxu0 %v629
    %v3064 = vpop.f32.mrf.mxu0
    %v3065 = vadd.f32 %v3016, %v3064
    %v3066 = vpop.f32.mrf.mxu0
    %v3067 = vadd.f32 %v3018, %v3066
    %3068 = vmatmul.bf16.gmra.mxu0 %v637
    %v3069 = vpop.f32.mrf.mxu0
    %v3070 = vadd.f32 %v3021, %v3069
    %v3071 = vpop.f32.mrf.mxu0
    %v3072 = vadd.f32 %v3023, %v3071
    %3073 = vmatmul.bf16.gmra.mxu0 %v645
    %v3074 = vpop.f32.mrf.mxu0
    %v3075 = vadd.f32 %v3026, %v3074
    %v3076 = vpop.f32.mrf.mxu0
    %v3077 = vadd.f32 %v3028, %v3076
    %3078 = vmatmul.bf16.gmra.mxu0 %v653
    %v3079 = vpop.f32.mrf.mxu0
    %v3080 = vadd.f32 %v3031, %v3079
    %v3081 = vpop.f32.mrf.mxu0
    %v3082 = vadd.f32 %v3033, %v3081
    %3083 = vmatmul.bf16.gmra.mxu0 %v661
    %v3084 = vpop.f32.mrf.mxu0
    %v3085 = vadd.f32 %v3036, %v3084
    %v3086 = vpop.f32.mrf.mxu0
    %v3087 = vadd.f32 %v3038, %v3086
    %3088 = vmatmul.bf16.gmra.mxu0 %v669
    %v3089 = vpop.f32.mrf.mxu0
    %v3090 = vadd.f32 %v3041, %v3089
    %v3091 = vpop.f32.mrf.mxu0
    %v3092 = vadd.f32 %v3043, %v3091
    %3093 = vdwg.mxu0
    %3094 = vmatpush.bf16.msra.mxu0 %v1726
    %3095 = vmatpush.bf16.msra.mxu0 %v1722
    %3096 = vmatpush.bf16.msra.mxu0 %v1718
    %3097 = vmatpush.bf16.msra.mxu0 %v1714
    %3098 = vmatpush.bf16.msra.mxu0 %v1710
    %3099 = vmatpush.bf16.msra.mxu0 %v1706
    %3100 = vmatpush.bf16.msra.mxu0 %v1702
    %3101 = vmatpush.bf16.msra.mxu0 %v1698
    %3102 = vmatmul.bf16.gmra.mxu0 %v614
    %v3103 = vpop.f32.mrf.mxu0
    %v3104 = vadd.f32 %v3055, %v3103
    %v3105 = vpop.f32.mrf.mxu0
    %v3106 = vadd.f32 %v3057, %v3105
    %3107 = vmatmul.bf16.gmra.mxu0 %v622
    %v3108 = vpop.f32.mrf.mxu0
    %v3109 = vadd.f32 %v3060, %v3108
    %v3110 = vpop.f32.mrf.mxu0
    %v3111 = vadd.f32 %v3062, %v3110
    %3112 = vmatmul.bf16.gmra.mxu0 %v630
    %v3113 = vpop.f32.mrf.mxu0
    %v3114 = vadd.f32 %v3065, %v3113
    %v3115 = vpop.f32.mrf.mxu0
    %v3116 = vadd.f32 %v3067, %v3115
    %3117 = vmatmul.bf16.gmra.mxu0 %v638
    %v3118 = vpop.f32.mrf.mxu0
    %v3119 = vadd.f32 %v3070, %v3118
    %v3120 = vpop.f32.mrf.mxu0
    %v3121 = vadd.f32 %v3072, %v3120
    %3122 = vmatmul.bf16.gmra.mxu0 %v646
    %v3123 = vpop.f32.mrf.mxu0
    %v3124 = vadd.f32 %v3075, %v3123
    %v3125 = vpop.f32.mrf.mxu0
    %v3126 = vadd.f32 %v3077, %v3125
    %3127 = vmatmul.bf16.gmra.mxu0 %v654
    %v3128 = vpop.f32.mrf.mxu0
    %v3129 = vadd.f32 %v3080, %v3128
    %v3130 = vpop.f32.mrf.mxu0
    %v3131 = vadd.f32 %v3082, %v3130
    %3132 = vmatmul.bf16.gmra.mxu0 %v662
    %v3133 = vpop.f32.mrf.mxu0
    %v3134 = vadd.f32 %v3085, %v3133
    %v3135 = vpop.f32.mrf.mxu0
    %v3136 = vadd.f32 %v3087, %v3135
    %3137 = vmatmul.bf16.gmra.mxu0 %v670
    %v3138 = vpop.f32.mrf.mxu0
    %v3139 = vadd.f32 %v3090, %v3138
    %v3140 = vpop.f32.mrf.mxu0
    %v3141 = vadd.f32 %v3092, %v3140
    %3142 = vdwg.mxu0
    %3143 = vmatpush.bf16.msra.mxu0 %v1758
    %3144 = vmatpush.bf16.msra.mxu0 %v1754
    %3145 = vmatpush.bf16.msra.mxu0 %v1750
    %3146 = vmatpush.bf16.msra.mxu0 %v1746
    %3147 = vmatpush.bf16.msra.mxu0 %v1742
    %3148 = vmatpush.bf16.msra.mxu0 %v1738
    %3149 = vmatpush.bf16.msra.mxu0 %v1734
    %3150 = vmatpush.bf16.msra.mxu0 %v1730
    %3151 = vmatmul.bf16.gmra.mxu0 %v615
    %v3152 = vpop.f32.mrf.mxu0
    %v3153 = vadd.f32 %v3104, %v3152
    %v3154 = vpop.f32.mrf.mxu0
    %v3155 = vadd.f32 %v3106, %v3154
    %3156 = vmatmul.bf16.gmra.mxu0 %v623
    %v3157 = vpop.f32.mrf.mxu0
    %v3158 = vadd.f32 %v3109, %v3157
    %v3159 = vpop.f32.mrf.mxu0
    %v3160 = vadd.f32 %v3111, %v3159
    %3161 = vmatmul.bf16.gmra.mxu0 %v631
    %v3162 = vpop.f32.mrf.mxu0
    %v3163 = vadd.f32 %v3114, %v3162
    %v3164 = vpop.f32.mrf.mxu0
    %v3165 = vadd.f32 %v3116, %v3164
    %3166 = vmatmul.bf16.gmra.mxu0 %v639
    %v3167 = vpop.f32.mrf.mxu0
    %v3168 = vadd.f32 %v3119, %v3167
    %v3169 = vpop.f32.mrf.mxu0
    %v3170 = vadd.f32 %v3121, %v3169
    %3171 = vmatmul.bf16.gmra.mxu0 %v647
    %v3172 = vpop.f32.mrf.mxu0
    %v3173 = vadd.f32 %v3124, %v3172
    %v3174 = vpop.f32.mrf.mxu0
    %v3175 = vadd.f32 %v3126, %v3174
    %3176 = vmatmul.bf16.gmra.mxu0 %v655
    %v3177 = vpop.f32.mrf.mxu0
    %v3178 = vadd.f32 %v3129, %v3177
    %v3179 = vpop.f32.mrf.mxu0
    %v3180 = vadd.f32 %v3131, %v3179
    %3181 = vmatmul.bf16.gmra.mxu0 %v663
    %v3182 = vpop.f32.mrf.mxu0
    %v3183 = vadd.f32 %v3134, %v3182
    %v3184 = vpop.f32.mrf.mxu0
    %v3185 = vadd.f32 %v3136, %v3184
    %3186 = vmatmul.bf16.gmra.mxu0 %v671
    %v3187 = vpop.f32.mrf.mxu0
    %v3188 = vadd.f32 %v3139, %v3187
    %v3189 = vpop.f32.mrf.mxu0
    %v3190 = vadd.f32 %v3141, %v3189
    %3191 = vdwg.mxu0
    %3192 = vmatpush.bf16.msra.mxu0 %v1535
    %3193 = vmatpush.bf16.msra.mxu0 %v1531
    %3194 = vmatpush.bf16.msra.mxu0 %v1527
    %3195 = vmatpush.bf16.msra.mxu0 %v1523
    %3196 = vmatpush.bf16.msra.mxu0 %v1519
    %3197 = vmatpush.bf16.msra.mxu0 %v1515
    %3198 = vmatpush.bf16.msra.mxu0 %v1511
    %3199 = vmatpush.bf16.msra.mxu0 %v1507
    %3200 = vmatmul.bf16.gmra.mxu0 %v608
    %v3201 = vpop.f32.mrf.mxu0
    %v3202 = vadd.f32 %v411, %v3201
    %v3203 = vpop.f32.mrf.mxu0
    %v3204 = vadd.f32 %v411, %v3203
    %3205 = vmatmul.bf16.gmra.mxu0 %v616
    %v3206 = vpop.f32.mrf.mxu0
    %v3207 = vadd.f32 %v411, %v3206
    %v3208 = vpop.f32.mrf.mxu0
    %v3209 = vadd.f32 %v411, %v3208
    %3210 = vmatmul.bf16.gmra.mxu0 %v624
    %v3211 = vpop.f32.mrf.mxu0
    %v3212 = vadd.f32 %v411, %v3211
    %v3213 = vpop.f32.mrf.mxu0
    %v3214 = vadd.f32 %v411, %v3213
    %3215 = vmatmul.bf16.gmra.mxu0 %v632
    %v3216 = vpop.f32.mrf.mxu0
    %v3217 = vadd.f32 %v411, %v3216
    %v3218 = vpop.f32.mrf.mxu0
    %v3219 = vadd.f32 %v411, %v3218
    %3220 = vmatmul.bf16.gmra.mxu0 %v640
    %v3221 = vpop.f32.mrf.mxu0
    %v3222 = vadd.f32 %v411, %v3221
    %v3223 = vpop.f32.mrf.mxu0
    %v3224 = vadd.f32 %v411, %v3223
    %3225 = vmatmul.bf16.gmra.mxu0 %v648
    %v3226 = vpop.f32.mrf.mxu0
    %v3227 = vadd.f32 %v411, %v3226
    %v3228 = vpop.f32.mrf.mxu0
    %v3229 = vadd.f32 %v411, %v3228
    %3230 = vmatmul.bf16.gmra.mxu0 %v656
    %v3231 = vpop.f32.mrf.mxu0
    %v3232 = vadd.f32 %v411, %v3231
    %v3233 = vpop.f32.mrf.mxu0
    %v3234 = vadd.f32 %v411, %v3233
    %3235 = vmatmul.bf16.gmra.mxu0 %v664
    %v3236 = vpop.f32.mrf.mxu0
    %v3237 = vadd.f32 %v411, %v3236
    %v3238 = vpop.f32.mrf.mxu0
    %v3239 = vadd.f32 %v411, %v3238
    %3240 = vdwg.mxu0
    %3241 = vmatpush.bf16.msra.mxu0 %v1567
    %3242 = vmatpush.bf16.msra.mxu0 %v1563
    %3243 = vmatpush.bf16.msra.mxu0 %v1559
    %3244 = vmatpush.bf16.msra.mxu0 %v1555
    %3245 = vmatpush.bf16.msra.mxu0 %v1551
    %3246 = vmatpush.bf16.msra.mxu0 %v1547
    %3247 = vmatpush.bf16.msra.mxu0 %v1543
    %3248 = vmatpush.bf16.msra.mxu0 %v1539
    %3249 = vmatmul.bf16.gmra.mxu0 %v609
    %v3250 = vpop.f32.mrf.mxu0
    %v3251 = vadd.f32 %v3202, %v3250
    %v3252 = vpop.f32.mrf.mxu0
    %v3253 = vadd.f32 %v3204, %v3252
    %3254 = vmatmul.bf16.gmra.mxu0 %v617
    %v3255 = vpop.f32.mrf.mxu0
    %v3256 = vadd.f32 %v3207, %v3255
    %v3257 = vpop.f32.mrf.mxu0
    %v3258 = vadd.f32 %v3209, %v3257
    %3259 = vmatmul.bf16.gmra.mxu0 %v625
    %v3260 = vpop.f32.mrf.mxu0
    %v3261 = vadd.f32 %v3212, %v3260
    %v3262 = vpop.f32.mrf.mxu0
    %v3263 = vadd.f32 %v3214, %v3262
    %3264 = vmatmul.bf16.gmra.mxu0 %v633
    %v3265 = vpop.f32.mrf.mxu0
    %v3266 = vadd.f32 %v3217, %v3265
    %v3267 = vpop.f32.mrf.mxu0
    %v3268 = vadd.f32 %v3219, %v3267
    %3269 = vmatmul.bf16.gmra.mxu0 %v641
    %v3270 = vpop.f32.mrf.mxu0
    %v3271 = vadd.f32 %v3222, %v3270
    %v3272 = vpop.f32.mrf.mxu0
    %v3273 = vadd.f32 %v3224, %v3272
    %3274 = vmatmul.bf16.gmra.mxu0 %v649
    %v3275 = vpop.f32.mrf.mxu0
    %v3276 = vadd.f32 %v3227, %v3275
    %v3277 = vpop.f32.mrf.mxu0
    %v3278 = vadd.f32 %v3229, %v3277
    %3279 = vmatmul.bf16.gmra.mxu0 %v657
    %v3280 = vpop.f32.mrf.mxu0
    %v3281 = vadd.f32 %v3232, %v3280
    %v3282 = vpop.f32.mrf.mxu0
    %v3283 = vadd.f32 %v3234, %v3282
    %3284 = vmatmul.bf16.gmra.mxu0 %v665
    %v3285 = vpop.f32.mrf.mxu0
    %v3286 = vadd.f32 %v3237, %v3285
    %v3287 = vpop.f32.mrf.mxu0
    %v3288 = vadd.f32 %v3239, %v3287
    %3289 = vdwg.mxu0
    %3290 = vmatpush.bf16.msra.mxu0 %v1599
    %3291 = vmatpush.bf16.msra.mxu0 %v1595
    %3292 = vmatpush.bf16.msra.mxu0 %v1591
    %3293 = vmatpush.bf16.msra.mxu0 %v1587
    %3294 = vmatpush.bf16.msra.mxu0 %v1583
    %3295 = vmatpush.bf16.msra.mxu0 %v1579
    %3296 = vmatpush.bf16.msra.mxu0 %v1575
    %3297 = vmatpush.bf16.msra.mxu0 %v1571
    %3298 = vmatmul.bf16.gmra.mxu0 %v610
    %v3299 = vpop.f32.mrf.mxu0
    %v3300 = vadd.f32 %v3251, %v3299
    %v3301 = vpop.f32.mrf.mxu0
    %v3302 = vadd.f32 %v3253, %v3301
    %3303 = vmatmul.bf16.gmra.mxu0 %v618
    %v3304 = vpop.f32.mrf.mxu0
    %v3305 = vadd.f32 %v3256, %v3304
    %v3306 = vpop.f32.mrf.mxu0
    %v3307 = vadd.f32 %v3258, %v3306
    %3308 = vmatmul.bf16.gmra.mxu0 %v626
    %v3309 = vpop.f32.mrf.mxu0
    %v3310 = vadd.f32 %v3261, %v3309
    %v3311 = vpop.f32.mrf.mxu0
    %v3312 = vadd.f32 %v3263, %v3311
    %3313 = vmatmul.bf16.gmra.mxu0 %v634
    %v3314 = vpop.f32.mrf.mxu0
    %v3315 = vadd.f32 %v3266, %v3314
    %v3316 = vpop.f32.mrf.mxu0
    %v3317 = vadd.f32 %v3268, %v3316
    %3318 = vmatmul.bf16.gmra.mxu0 %v642
    %v3319 = vpop.f32.mrf.mxu0
    %v3320 = vadd.f32 %v3271, %v3319
    %v3321 = vpop.f32.mrf.mxu0
    %v3322 = vadd.f32 %v3273, %v3321
    %3323 = vmatmul.bf16.gmra.mxu0 %v650
    %v3324 = vpop.f32.mrf.mxu0
    %v3325 = vadd.f32 %v3276, %v3324
    %v3326 = vpop.f32.mrf.mxu0
    %v3327 = vadd.f32 %v3278, %v3326
    %3328 = vmatmul.bf16.gmra.mxu0 %v658
    %v3329 = vpop.f32.mrf.mxu0
    %v3330 = vadd.f32 %v3281, %v3329
    %v3331 = vpop.f32.mrf.mxu0
    %v3332 = vadd.f32 %v3283, %v3331
    %3333 = vmatmul.bf16.gmra.mxu0 %v666
    %v3334 = vpop.f32.mrf.mxu0
    %v3335 = vadd.f32 %v3286, %v3334
    %v3336 = vpop.f32.mrf.mxu0
    %v3337 = vadd.f32 %v3288, %v3336
    %3338 = vdwg.mxu0
    %3339 = vmatpush.bf16.msra.mxu0 %v1631
    %3340 = vmatpush.bf16.msra.mxu0 %v1627
    %3341 = vmatpush.bf16.msra.mxu0 %v1623
    %3342 = vmatpush.bf16.msra.mxu0 %v1619
    %3343 = vmatpush.bf16.msra.mxu0 %v1615
    %3344 = vmatpush.bf16.msra.mxu0 %v1611
    %3345 = vmatpush.bf16.msra.mxu0 %v1607
    %3346 = vmatpush.bf16.msra.mxu0 %v1603
    %3347 = vmatmul.bf16.gmra.mxu0 %v611
    %v3348 = vpop.f32.mrf.mxu0
    %v3349 = vadd.f32 %v3300, %v3348
    %v3350 = vpop.f32.mrf.mxu0
    %v3351 = vadd.f32 %v3302, %v3350
    %3352 = vmatmul.bf16.gmra.mxu0 %v619
    %v3353 = vpop.f32.mrf.mxu0
    %v3354 = vadd.f32 %v3305, %v3353
    %v3355 = vpop.f32.mrf.mxu0
    %v3356 = vadd.f32 %v3307, %v3355
    %3357 = vmatmul.bf16.gmra.mxu0 %v627
    %v3358 = vpop.f32.mrf.mxu0
    %v3359 = vadd.f32 %v3310, %v3358
    %v3360 = vpop.f32.mrf.mxu0
    %v3361 = vadd.f32 %v3312, %v3360
    %3362 = vmatmul.bf16.gmra.mxu0 %v635
    %v3363 = vpop.f32.mrf.mxu0
    %v3364 = vadd.f32 %v3315, %v3363
    %v3365 = vpop.f32.mrf.mxu0
    %v3366 = vadd.f32 %v3317, %v3365
    %3367 = vmatmul.bf16.gmra.mxu0 %v643
    %v3368 = vpop.f32.mrf.mxu0
    %v3369 = vadd.f32 %v3320, %v3368
    %v3370 = vpop.f32.mrf.mxu0
    %v3371 = vadd.f32 %v3322, %v3370
    %3372 = vmatmul.bf16.gmra.mxu0 %v651
    %v3373 = vpop.f32.mrf.mxu0
    %v3374 = vadd.f32 %v3325, %v3373
    %v3375 = vpop.f32.mrf.mxu0
    %v3376 = vadd.f32 %v3327, %v3375
    %3377 = vmatmul.bf16.gmra.mxu0 %v659
    %v3378 = vpop.f32.mrf.mxu0
    %v3379 = vadd.f32 %v3330, %v3378
    %v3380 = vpop.f32.mrf.mxu0
    %v3381 = vadd.f32 %v3332, %v3380
    %3382 = vmatmul.bf16.gmra.mxu0 %v667
    %v3383 = vpop.f32.mrf.mxu0
    %v3384 = vadd.f32 %v3335, %v3383
    %v3385 = vpop.f32.mrf.mxu0
    %v3386 = vadd.f32 %v3337, %v3385
    %3387 = vdwg.mxu0
    %3388 = vmatpush.bf16.msra.mxu0 %v1663
    %3389 = vmatpush.bf16.msra.mxu0 %v1659
    %3390 = vmatpush.bf16.msra.mxu0 %v1655
    %3391 = vmatpush.bf16.msra.mxu0 %v1651
    %3392 = vmatpush.bf16.msra.mxu0 %v1647
    %3393 = vmatpush.bf16.msra.mxu0 %v1643
    %3394 = vmatpush.bf16.msra.mxu0 %v1639
    %3395 = vmatpush.bf16.msra.mxu0 %v1635
    %3396 = vmatmul.bf16.gmra.mxu0 %v612
    %v3397 = vpop.f32.mrf.mxu0
    %v3398 = vadd.f32 %v3349, %v3397
    %v3399 = vpop.f32.mrf.mxu0
    %v3400 = vadd.f32 %v3351, %v3399
    %3401 = vmatmul.bf16.gmra.mxu0 %v620
    %v3402 = vpop.f32.mrf.mxu0
    %v3403 = vadd.f32 %v3354, %v3402
    %v3404 = vpop.f32.mrf.mxu0
    %v3405 = vadd.f32 %v3356, %v3404
    %3406 = vmatmul.bf16.gmra.mxu0 %v628
    %v3407 = vpop.f32.mrf.mxu0
    %v3408 = vadd.f32 %v3359, %v3407
    %v3409 = vpop.f32.mrf.mxu0
    %v3410 = vadd.f32 %v3361, %v3409
    %3411 = vmatmul.bf16.gmra.mxu0 %v636
    %v3412 = vpop.f32.mrf.mxu0
    %v3413 = vadd.f32 %v3364, %v3412
    %v3414 = vpop.f32.mrf.mxu0
    %v3415 = vadd.f32 %v3366, %v3414
    %3416 = vmatmul.bf16.gmra.mxu0 %v644
    %v3417 = vpop.f32.mrf.mxu0
    %v3418 = vadd.f32 %v3369, %v3417
    %v3419 = vpop.f32.mrf.mxu0
    %v3420 = vadd.f32 %v3371, %v3419
    %3421 = vmatmul.bf16.gmra.mxu0 %v652
    %v3422 = vpop.f32.mrf.mxu0
    %v3423 = vadd.f32 %v3374, %v3422
    %v3424 = vpop.f32.mrf.mxu0
    %v3425 = vadd.f32 %v3376, %v3424
    %3426 = vmatmul.bf16.gmra.mxu0 %v660
    %v3427 = vpop.f32.mrf.mxu0
    %v3428 = vadd.f32 %v3379, %v3427
    %v3429 = vpop.f32.mrf.mxu0
    %v3430 = vadd.f32 %v3381, %v3429
    %3431 = vmatmul.bf16.gmra.mxu0 %v668
    %v3432 = vpop.f32.mrf.mxu0
    %v3433 = vadd.f32 %v3384, %v3432
    %v3434 = vpop.f32.mrf.mxu0
    %v3435 = vadd.f32 %v3386, %v3434
    %3436 = vdwg.mxu0
    %3437 = vmatpush.bf16.msra.mxu0 %v1695
    %3438 = vmatpush.bf16.msra.mxu0 %v1691
    %3439 = vmatpush.bf16.msra.mxu0 %v1687
    %3440 = vmatpush.bf16.msra.mxu0 %v1683
    %3441 = vmatpush.bf16.msra.mxu0 %v1679
    %3442 = vmatpush.bf16.msra.mxu0 %v1675
    %3443 = vmatpush.bf16.msra.mxu0 %v1671
    %3444 = vmatpush.bf16.msra.mxu0 %v1667
    %3445 = vmatmul.bf16.gmra.mxu0 %v613
    %v3446 = vpop.f32.mrf.mxu0
    %v3447 = vadd.f32 %v3398, %v3446
    %v3448 = vpop.f32.mrf.mxu0
    %v3449 = vadd.f32 %v3400, %v3448
    %3450 = vmatmul.bf16.gmra.mxu0 %v621
    %v3451 = vpop.f32.mrf.mxu0
    %v3452 = vadd.f32 %v3403, %v3451
    %v3453 = vpop.f32.mrf.mxu0
    %v3454 = vadd.f32 %v3405, %v3453
    %3455 = vmatmul.bf16.gmra.mxu0 %v629
    %v3456 = vpop.f32.mrf.mxu0
    %v3457 = vadd.f32 %v3408, %v3456
    %v3458 = vpop.f32.mrf.mxu0
    %v3459 = vadd.f32 %v3410, %v3458
    %3460 = vmatmul.bf16.gmra.mxu0 %v637
    %v3461 = vpop.f32.mrf.mxu0
    %v3462 = vadd.f32 %v3413, %v3461
    %v3463 = vpop.f32.mrf.mxu0
    %v3464 = vadd.f32 %v3415, %v3463
    %3465 = vmatmul.bf16.gmra.mxu0 %v645
    %v3466 = vpop.f32.mrf.mxu0
    %v3467 = vadd.f32 %v3418, %v3466
    %v3468 = vpop.f32.mrf.mxu0
    %v3469 = vadd.f32 %v3420, %v3468
    %3470 = vmatmul.bf16.gmra.mxu0 %v653
    %v3471 = vpop.f32.mrf.mxu0
    %v3472 = vadd.f32 %v3423, %v3471
    %v3473 = vpop.f32.mrf.mxu0
    %v3474 = vadd.f32 %v3425, %v3473
    %3475 = vmatmul.bf16.gmra.mxu0 %v661
    %v3476 = vpop.f32.mrf.mxu0
    %v3477 = vadd.f32 %v3428, %v3476
    %v3478 = vpop.f32.mrf.mxu0
    %v3479 = vadd.f32 %v3430, %v3478
    %3480 = vmatmul.bf16.gmra.mxu0 %v669
    %v3481 = vpop.f32.mrf.mxu0
    %v3482 = vadd.f32 %v3433, %v3481
    %v3483 = vpop.f32.mrf.mxu0
    %v3484 = vadd.f32 %v3435, %v3483
    %3485 = vdwg.mxu0
    %3486 = vmatpush.bf16.msra.mxu0 %v1727
    %3487 = vmatpush.bf16.msra.mxu0 %v1723
    %3488 = vmatpush.bf16.msra.mxu0 %v1719
    %3489 = vmatpush.bf16.msra.mxu0 %v1715
    %3490 = vmatpush.bf16.msra.mxu0 %v1711
    %3491 = vmatpush.bf16.msra.mxu0 %v1707
    %3492 = vmatpush.bf16.msra.mxu0 %v1703
    %3493 = vmatpush.bf16.msra.mxu0 %v1699
    %3494 = vmatmul.bf16.gmra.mxu0 %v614
    %v3495 = vpop.f32.mrf.mxu0
    %v3496 = vadd.f32 %v3447, %v3495
    %v3497 = vpop.f32.mrf.mxu0
    %v3498 = vadd.f32 %v3449, %v3497
    %3499 = vmatmul.bf16.gmra.mxu0 %v622
    %v3500 = vpop.f32.mrf.mxu0
    %v3501 = vadd.f32 %v3452, %v3500
    %v3502 = vpop.f32.mrf.mxu0
    %v3503 = vadd.f32 %v3454, %v3502
    %3504 = vmatmul.bf16.gmra.mxu0 %v630
    %v3505 = vpop.f32.mrf.mxu0
    %v3506 = vadd.f32 %v3457, %v3505
    %v3507 = vpop.f32.mrf.mxu0
    %v3508 = vadd.f32 %v3459, %v3507
    %3509 = vmatmul.bf16.gmra.mxu0 %v638
    %v3510 = vpop.f32.mrf.mxu0
    %v3511 = vadd.f32 %v3462, %v3510
    %v3512 = vpop.f32.mrf.mxu0
    %v3513 = vadd.f32 %v3464, %v3512
    %3514 = vmatmul.bf16.gmra.mxu0 %v646
    %v3515 = vpop.f32.mrf.mxu0
    %v3516 = vadd.f32 %v3467, %v3515
    %v3517 = vpop.f32.mrf.mxu0
    %v3518 = vadd.f32 %v3469, %v3517
    %3519 = vmatmul.bf16.gmra.mxu0 %v654
    %v3520 = vpop.f32.mrf.mxu0
    %v3521 = vadd.f32 %v3472, %v3520
    %v3522 = vpop.f32.mrf.mxu0
    %v3523 = vadd.f32 %v3474, %v3522
    %3524 = vmatmul.bf16.gmra.mxu0 %v662
    %v3525 = vpop.f32.mrf.mxu0
    %v3526 = vadd.f32 %v3477, %v3525
    %v3527 = vpop.f32.mrf.mxu0
    %v3528 = vadd.f32 %v3479, %v3527
    %3529 = vmatmul.bf16.gmra.mxu0 %v670
    %v3530 = vpop.f32.mrf.mxu0
    %v3531 = vadd.f32 %v3482, %v3530
    %v3532 = vpop.f32.mrf.mxu0
    %v3533 = vadd.f32 %v3484, %v3532
    %3534 = vdwg.mxu0
    %3535 = vmatpush.bf16.msra.mxu0 %v1759
    %3536 = vmatpush.bf16.msra.mxu0 %v1755
    %3537 = vmatpush.bf16.msra.mxu0 %v1751
    %3538 = vmatpush.bf16.msra.mxu0 %v1747
    %3539 = vmatpush.bf16.msra.mxu0 %v1743
    %3540 = vmatpush.bf16.msra.mxu0 %v1739
    %3541 = vmatpush.bf16.msra.mxu0 %v1735
    %3542 = vmatpush.bf16.msra.mxu0 %v1731
    %3543 = vmatmul.bf16.gmra.mxu0 %v615
    %v3544 = vpop.f32.mrf.mxu0
    %v3545 = vadd.f32 %v3496, %v3544
    %v3546 = vpop.f32.mrf.mxu0
    %v3547 = vadd.f32 %v3498, %v3546
    %3548 = vmatmul.bf16.gmra.mxu0 %v623
    %v3549 = vpop.f32.mrf.mxu0
    %v3550 = vadd.f32 %v3501, %v3549
    %v3551 = vpop.f32.mrf.mxu0
    %v3552 = vadd.f32 %v3503, %v3551
    %3553 = vmatmul.bf16.gmra.mxu0 %v631
    %v3554 = vpop.f32.mrf.mxu0
    %v3555 = vadd.f32 %v3506, %v3554
    %v3556 = vpop.f32.mrf.mxu0
    %v3557 = vadd.f32 %v3508, %v3556
    %3558 = vmatmul.bf16.gmra.mxu0 %v639
    %v3559 = vpop.f32.mrf.mxu0
    %v3560 = vadd.f32 %v3511, %v3559
    %v3561 = vpop.f32.mrf.mxu0
    %v3562 = vadd.f32 %v3513, %v3561
    %3563 = vmatmul.bf16.gmra.mxu0 %v647
    %v3564 = vpop.f32.mrf.mxu0
    %v3565 = vadd.f32 %v3516, %v3564
    %v3566 = vpop.f32.mrf.mxu0
    %v3567 = vadd.f32 %v3518, %v3566
    %3568 = vmatmul.bf16.gmra.mxu0 %v655
    %v3569 = vpop.f32.mrf.mxu0
    %v3570 = vadd.f32 %v3521, %v3569
    %v3571 = vpop.f32.mrf.mxu0
    %v3572 = vadd.f32 %v3523, %v3571
    %3573 = vmatmul.bf16.gmra.mxu0 %v663
    %v3574 = vpop.f32.mrf.mxu0
    %v3575 = vadd.f32 %v3526, %v3574
    %v3576 = vpop.f32.mrf.mxu0
    %v3577 = vadd.f32 %v3528, %v3576
    %3578 = vmatmul.bf16.gmra.mxu0 %v671
    %v3579 = vpop.f32.mrf.mxu0
    %v3580 = vadd.f32 %v3531, %v3579
    %v3581 = vpop.f32.mrf.mxu0
    %v3582 = vadd.f32 %v3533, %v3581
    %3583 = vdwg.mxu0
    %v3584 = vmax.f32 %v2369, 0.0
    %v3585 = vmax.f32 %v2761, 0.0
    %v3586 = vmax.f32 %v3153, 0.0
    %v3587 = vmax.f32 %v3545, 0.0
    %v3588 = vmax.f32 %v2371, 0.0
    %v3589 = vmax.f32 %v2763, 0.0
    %v3590 = vmax.f32 %v3155, 0.0
    %v3591 = vmax.f32 %v3547, 0.0
    %v3592 = vmax.f32 %v2374, 0.0
    %v3593 = vmax.f32 %v2766, 0.0
    %v3594 = vmax.f32 %v3158, 0.0
    %v3595 = vmax.f32 %v3550, 0.0
    %v3596 = vmax.f32 %v2376, 0.0
    %v3597 = vmax.f32 %v2768, 0.0
    %v3598 = vmax.f32 %v3160, 0.0
    %v3599 = vmax.f32 %v3552, 0.0
    %v3600 = vmax.f32 %v2379, 0.0
    %v3601 = vmax.f32 %v2771, 0.0
    %v3602 = vmax.f32 %v3163, 0.0
    %v3603 = vmax.f32 %v3555, 0.0
    %v3604 = vmax.f32 %v2381, 0.0
    %v3605 = vmax.f32 %v2773, 0.0
    %v3606 = vmax.f32 %v3165, 0.0
    %v3607 = vmax.f32 %v3557, 0.0
    %v3608 = vmax.f32 %v2384, 0.0
    %v3609 = vmax.f32 %v2776, 0.0
    %v3610 = vmax.f32 %v3168, 0.0
    %v3611 = vmax.f32 %v3560, 0.0
    %v3612 = vmax.f32 %v2386, 0.0
    %v3613 = vmax.f32 %v2778, 0.0
    %v3614 = vmax.f32 %v3170, 0.0
    %v3615 = vmax.f32 %v3562, 0.0
    %v3616 = vmax.f32 %v2389, 0.0
    %v3617 = vmax.f32 %v2781, 0.0
    %v3618 = vmax.f32 %v3173, 0.0
    %v3619 = vmax.f32 %v3565, 0.0
    %v3620 = vmax.f32 %v2391, 0.0
    %v3621 = vmax.f32 %v2783, 0.0
    %v3622 = vmax.f32 %v3175, 0.0
    %v3623 = vmax.f32 %v3567, 0.0
    %v3624 = vmax.f32 %v2394, 0.0
    %v3625 = vmax.f32 %v2786, 0.0
    %v3626 = vmax.f32 %v3178, 0.0
    %v3627 = vmax.f32 %v3570, 0.0
    %v3628 = vmax.f32 %v2396, 0.0
    %v3629 = vmax.f32 %v2788, 0.0
    %v3630 = vmax.f32 %v3180, 0.0
    %v3631 = vmax.f32 %v3572, 0.0
    %v3632 = vmax.f32 %v2399, 0.0
    %v3633 = vmax.f32 %v2791, 0.0
    %v3634 = vmax.f32 %v3183, 0.0
    %v3635 = vmax.f32 %v3575, 0.0
    %v3636 = vmax.f32 %v2401, 0.0
    %v3637 = vmax.f32 %v2793, 0.0
    %v3638 = vmax.f32 %v3185, 0.0
    %v3639 = vmax.f32 %v3577, 0.0
    %v3640 = vmax.f32 %v2404, 0.0
    %v3641 = vmax.f32 %v2796, 0.0
    %v3642 = vmax.f32 %v3188, 0.0
    %v3643 = vmax.f32 %v3580, 0.0
    %v3644 = vmax.f32 %v2406, 0.0
    %v3645 = vmax.f32 %v2798, 0.0
    %v3646 = vmax.f32 %v3190, 0.0
    %v3647 = vmax.f32 %v3582, 0.0
    %s3648 = smul.u32 0, 128
    %v3649 = vlaneseq
    %v3650 = vshrl.u32 %v3649, 7
    %v3651 = vadd.s32 %v3650, 8
    %v3652 = vadd.s32 %v3650, 16
    %v3653 = vadd.s32 %v3650, 24
    %v3654 = vadd.s32 %v3650, 32
    %v3655 = vadd.s32 %v3650, 40
    %v3656 = vadd.s32 %v3650, 48
    %v3657 = vadd.s32 %v3650, 56
    %v3658 = vadd.s32 %v3650, 64
    %v3659 = vadd.s32 %v3650, 72
    %v3660 = vadd.s32 %v3650, 80
    %v3661 = vadd.s32 %v3650, 88
    %v3662 = vadd.s32 %v3650, 96
    %v3663 = vadd.s32 %v3650, 104
    %v3664 = vadd.s32 %v3650, 112
    %v3665 = vadd.s32 %v3650, 120
    %v3666 = vstv %s3648
    %v3667 = vadd.s32 %v3666, %v3650
    %v3668 = vadd.s32 %v3666, %v3651
    %v3669 = vadd.s32 %v3666, %v3652
    %v3670 = vadd.s32 %v3666, %v3653
    %v3671 = vadd.s32 %v3666, %v3654
    %v3672 = vadd.s32 %v3666, %v3655
    %v3673 = vadd.s32 %v3666, %v3656
    %v3674 = vadd.s32 %v3666, %v3657
    %v3675 = vadd.s32 %v3666, %v3658
    %v3676 = vadd.s32 %v3666, %v3659
    %v3677 = vadd.s32 %v3666, %v3660
    %v3678 = vadd.s32 %v3666, %v3661
    %v3679 = vadd.s32 %v3666, %v3662
    %v3680 = vadd.s32 %v3666, %v3663
    %v3681 = vadd.s32 %v3666, %v3664
    %v3682 = vadd.s32 %v3666, %v3665
    %vm3683 = vcmp.lt.s32.totalorder %v3667, 8
    %vm3684 = vcmp.lt.s32.totalorder %v3668, 8
    %vm3685 = vcmp.lt.s32.totalorder %v3669, 8
    %vm3686 = vcmp.lt.s32.totalorder %v3670, 8
    %vm3687 = vcmp.lt.s32.totalorder %v3671, 8
    %vm3688 = vcmp.lt.s32.totalorder %v3672, 8
    %vm3689 = vcmp.lt.s32.totalorder %v3673, 8
    %vm3690 = vcmp.lt.s32.totalorder %v3674, 8
    %vm3691 = vcmp.lt.s32.totalorder %v3675, 8
    %vm3692 = vcmp.lt.s32.totalorder %v3676, 8
    %vm3693 = vcmp.lt.s32.totalorder %v3677, 8
    %vm3694 = vcmp.lt.s32.totalorder %v3678, 8
    %vm3695 = vcmp.lt.s32.totalorder %v3679, 8
    %vm3696 = vcmp.lt.s32.totalorder %v3680, 8
    %vm3697 = vcmp.lt.s32.totalorder %v3681, 8
    %vm3698 = vcmp.lt.s32.totalorder %v3682, 8
    %v3699 = vsel %vm3683, 1, 0
    %v3700 = vsel %vm3684, 1, 0
    %v3701 = vsel %vm3685, 1, 0
    %v3702 = vsel %vm3686, 1, 0
    %v3703 = vsel %vm3687, 1, 0
    %v3704 = vsel %vm3688, 1, 0
    %v3705 = vsel %vm3689, 1, 0
    %v3706 = vsel %vm3690, 1, 0
    %v3707 = vsel %vm3691, 1, 0
    %v3708 = vsel %vm3692, 1, 0
    %v3709 = vsel %vm3693, 1, 0
    %v3710 = vsel %vm3694, 1, 0
    %v3711 = vsel %vm3695, 1, 0
    %v3712 = vsel %vm3696, 1, 0
    %v3713 = vsel %vm3697, 1, 0
    %v3714 = vsel %vm3698, 1, 0
    %vm3715 = vcmp.eq.s32.totalorder %v3699, 1
    %vm3716 = vcmp.eq.s32.totalorder %v3700, 1
    %vm3717 = vcmp.eq.s32.totalorder %v3701, 1
    %vm3718 = vcmp.eq.s32.totalorder %v3702, 1
    %vm3719 = vcmp.eq.s32.totalorder %v3703, 1
    %vm3720 = vcmp.eq.s32.totalorder %v3704, 1
    %vm3721 = vcmp.eq.s32.totalorder %v3705, 1
    %vm3722 = vcmp.eq.s32.totalorder %v3706, 1
    %vm3723 = vcmp.eq.s32.totalorder %v3707, 1
    %vm3724 = vcmp.eq.s32.totalorder %v3708, 1
    %vm3725 = vcmp.eq.s32.totalorder %v3709, 1
    %vm3726 = vcmp.eq.s32.totalorder %v3710, 1
    %vm3727 = vcmp.eq.s32.totalorder %v3711, 1
    %vm3728 = vcmp.eq.s32.totalorder %v3712, 1
    %vm3729 = vcmp.eq.s32.totalorder %v3713, 1
    %vm3730 = vcmp.eq.s32.totalorder %v3714, 1
    %v3731 = vsel %vm3715, %v3584, 0.0
    %v3732 = vsel %vm3715, %v3585, 0.0
    %v3733 = vsel %vm3715, %v3586, 0.0
    %v3734 = vsel %vm3715, %v3587, 0.0
    %v3735 = vsel %vm3716, %v3588, 0.0
    %v3736 = vsel %vm3716, %v3589, 0.0
    %v3737 = vsel %vm3716, %v3590, 0.0
    %v3738 = vsel %vm3716, %v3591, 0.0
    %v3739 = vsel %vm3717, %v3592, 0.0
    %v3740 = vsel %vm3717, %v3593, 0.0
    %v3741 = vsel %vm3717, %v3594, 0.0
    %v3742 = vsel %vm3717, %v3595, 0.0
    %v3743 = vsel %vm3718, %v3596, 0.0
    %v3744 = vsel %vm3718, %v3597, 0.0
    %v3745 = vsel %vm3718, %v3598, 0.0
    %v3746 = vsel %vm3718, %v3599, 0.0
    %v3747 = vsel %vm3719, %v3600, 0.0
    %v3748 = vsel %vm3719, %v3601, 0.0
    %v3749 = vsel %vm3719, %v3602, 0.0
    %v3750 = vsel %vm3719, %v3603, 0.0
    %v3751 = vsel %vm3720, %v3604, 0.0
    %v3752 = vsel %vm3720, %v3605, 0.0
    %v3753 = vsel %vm3720, %v3606, 0.0
    %v3754 = vsel %vm3720, %v3607, 0.0
    %v3755 = vsel %vm3721, %v3608, 0.0
    %v3756 = vsel %vm3721, %v3609, 0.0
    %v3757 = vsel %vm3721, %v3610, 0.0
    %v3758 = vsel %vm3721, %v3611, 0.0
    %v3759 = vsel %vm3722, %v3612, 0.0
    %v3760 = vsel %vm3722, %v3613, 0.0
    %v3761 = vsel %vm3722, %v3614, 0.0
    %v3762 = vsel %vm3722, %v3615, 0.0
    %v3763 = vsel %vm3723, %v3616, 0.0
    %v3764 = vsel %vm3723, %v3617, 0.0
    %v3765 = vsel %vm3723, %v3618, 0.0
    %v3766 = vsel %vm3723, %v3619, 0.0
    %v3767 = vsel %vm3724, %v3620, 0.0
    %v3768 = vsel %vm3724, %v3621, 0.0
    %v3769 = vsel %vm3724, %v3622, 0.0
    %v3770 = vsel %vm3724, %v3623, 0.0
    %v3771 = vsel %vm3725, %v3624, 0.0
    %v3772 = vsel %vm3725, %v3625, 0.0
    %v3773 = vsel %vm3725, %v3626, 0.0
    %v3774 = vsel %vm3725, %v3627, 0.0
    %v3775 = vsel %vm3726, %v3628, 0.0
    %v3776 = vsel %vm3726, %v3629, 0.0
    %v3777 = vsel %vm3726, %v3630, 0.0
    %v3778 = vsel %vm3726, %v3631, 0.0
    %v3779 = vsel %vm3727, %v3632, 0.0
    %v3780 = vsel %vm3727, %v3633, 0.0
    %v3781 = vsel %vm3727, %v3634, 0.0
    %v3782 = vsel %vm3727, %v3635, 0.0
    %v3783 = vsel %vm3728, %v3636, 0.0
    %v3784 = vsel %vm3728, %v3637, 0.0
    %v3785 = vsel %vm3728, %v3638, 0.0
    %v3786 = vsel %vm3728, %v3639, 0.0
    %v3787 = vsel %vm3729, %v3640, 0.0
    %v3788 = vsel %vm3729, %v3641, 0.0
    %v3789 = vsel %vm3729, %v3642, 0.0
    %v3790 = vsel %vm3729, %v3643, 0.0
    %v3791 = vsel %vm3730, %v3644, 0.0
    %v3792 = vsel %vm3730, %v3645, 0.0
    %v3793 = vsel %vm3730, %v3646, 0.0
    %v3794 = vsel %vm3730, %v3647, 0.0
    %v3795 = vpack.c.bf16 %v3735, %v3731
    %v3796 = vpack.c.bf16 %v3736, %v3732
    %v3797 = vpack.c.bf16 %v3737, %v3733
    %v3798 = vpack.c.bf16 %v3738, %v3734
    %v3799 = vpack.c.bf16 %v3743, %v3739
    %v3800 = vpack.c.bf16 %v3744, %v3740
    %v3801 = vpack.c.bf16 %v3745, %v3741
    %v3802 = vpack.c.bf16 %v3746, %v3742
    %v3803 = vpack.c.bf16 %v3751, %v3747
    %v3804 = vpack.c.bf16 %v3752, %v3748
    %v3805 = vpack.c.bf16 %v3753, %v3749
    %v3806 = vpack.c.bf16 %v3754, %v3750
    %v3807 = vpack.c.bf16 %v3759, %v3755
    %v3808 = vpack.c.bf16 %v3760, %v3756
    %v3809 = vpack.c.bf16 %v3761, %v3757
    %v3810 = vpack.c.bf16 %v3762, %v3758
    %v3811 = vpack.c.bf16 %v3767, %v3763
    %v3812 = vpack.c.bf16 %v3768, %v3764
    %v3813 = vpack.c.bf16 %v3769, %v3765
    %v3814 = vpack.c.bf16 %v3770, %v3766
    %v3815 = vpack.c.bf16 %v3775, %v3771
    %v3816 = vpack.c.bf16 %v3776, %v3772
    %v3817 = vpack.c.bf16 %v3777, %v3773
    %v3818 = vpack.c.bf16 %v3778, %v3774
    %v3819 = vpack.c.bf16 %v3783, %v3779
    %v3820 = vpack.c.bf16 %v3784, %v3780
    %v3821 = vpack.c.bf16 %v3785, %v3781
    %v3822 = vpack.c.bf16 %v3786, %v3782
    %v3823 = vpack.c.bf16 %v3791, %v3787
    %v3824 = vpack.c.bf16 %v3792, %v3788
    %v3825 = vpack.c.bf16 %v3793, %v3789
    %v3826 = vpack.c.bf16 %v3794, %v3790
    %v3827 = vld [vmem:[#allocation9] sm:$0xff]
    %v3828 = vld [vmem:[#allocation9 + $0x8] sm:$0xff]
    %v3829 = vld [vmem:[#allocation9 + $0x10] sm:$0xff]
    %v3830 = vld [vmem:[#allocation9 + $0x18] sm:$0xff]
    %v3831 = vld [vmem:[#allocation9 + $0x20] sm:$0xff]
    %v3832 = vld [vmem:[#allocation9 + $0x28] sm:$0xff]
    %v3833 = vld [vmem:[#allocation9 + $0x30] sm:$0xff]
    %v3834 = vld [vmem:[#allocation9 + $0x38] sm:$0xff]
    %v3835 = vld [vmem:[#allocation9 + $0x40] sm:$0xff]
    %v3836 = vld [vmem:[#allocation9 + $0x48] sm:$0xff]
    %v3837 = vld [vmem:[#allocation9 + $0x50] sm:$0xff]
    %v3838 = vld [vmem:[#allocation9 + $0x58] sm:$0xff]
    %v3839 = vld [vmem:[#allocation9 + $0x60] sm:$0xff]
    %v3840 = vld [vmem:[#allocation9 + $0x68] sm:$0xff]
    %v3841 = vld [vmem:[#allocation9 + $0x70] sm:$0xff]
    %v3842 = vld [vmem:[#allocation9 + $0x78] sm:$0xff]
    %v3843 = vld [vmem:[#allocation9 + $0x80] sm:$0xff]
    %v3844 = vld [vmem:[#allocation9 + $0x88] sm:$0xff]
    %v3845 = vld [vmem:[#allocation9 + $0x90] sm:$0xff]
    %v3846 = vld [vmem:[#allocation9 + $0x98] sm:$0xff]
    %v3847 = vld [vmem:[#allocation9 + $0xa0] sm:$0xff]
    %v3848 = vld [vmem:[#allocation9 + $0xa8] sm:$0xff]
    %v3849 = vld [vmem:[#allocation9 + $0xb0] sm:$0xff]
    %v3850 = vld [vmem:[#allocation9 + $0xb8] sm:$0xff]
    %v3851 = vld [vmem:[#allocation9 + $0xc0] sm:$0xff]
    %v3852 = vld [vmem:[#allocation9 + $0xc8] sm:$0xff]
    %v3853 = vld [vmem:[#allocation9 + $0xd0] sm:$0xff]
    %v3854 = vld [vmem:[#allocation9 + $0xd8] sm:$0xff]
    %v3855 = vld [vmem:[#allocation9 + $0xe0] sm:$0xff]
    %v3856 = vld [vmem:[#allocation9 + $0xe8] sm:$0xff]
    %v3857 = vld [vmem:[#allocation9 + $0xf0] sm:$0xff]
    %v3858 = vld [vmem:[#allocation9 + $0xf8] sm:$0xff]
    %v3859 = vld [vmem:[#allocation9 + $0x100] sm:$0xff]
    %v3860 = vld [vmem:[#allocation9 + $0x108] sm:$0xff]
    %v3861 = vld [vmem:[#allocation9 + $0x110] sm:$0xff]
    %v3862 = vld [vmem:[#allocation9 + $0x118] sm:$0xff]
    %v3863 = vld [vmem:[#allocation9 + $0x120] sm:$0xff]
    %v3864 = vld [vmem:[#allocation9 + $0x128] sm:$0xff]
    %v3865 = vld [vmem:[#allocation9 + $0x130] sm:$0xff]
    %v3866 = vld [vmem:[#allocation9 + $0x138] sm:$0xff]
    %v3867 = vld [vmem:[#allocation9 + $0x140] sm:$0xff]
    %v3868 = vld [vmem:[#allocation9 + $0x148] sm:$0xff]
    %v3869 = vld [vmem:[#allocation9 + $0x150] sm:$0xff]
    %v3870 = vld [vmem:[#allocation9 + $0x158] sm:$0xff]
    %v3871 = vld [vmem:[#allocation9 + $0x160] sm:$0xff]
    %v3872 = vld [vmem:[#allocation9 + $0x168] sm:$0xff]
    %v3873 = vld [vmem:[#allocation9 + $0x170] sm:$0xff]
    %v3874 = vld [vmem:[#allocation9 + $0x178] sm:$0xff]
    %v3875 = vld [vmem:[#allocation9 + $0x180] sm:$0xff]
    %v3876 = vld [vmem:[#allocation9 + $0x188] sm:$0xff]
    %v3877 = vld [vmem:[#allocation9 + $0x190] sm:$0xff]
    %v3878 = vld [vmem:[#allocation9 + $0x198] sm:$0xff]
    %v3879 = vld [vmem:[#allocation9 + $0x1a0] sm:$0xff]
    %v3880 = vld [vmem:[#allocation9 + $0x1a8] sm:$0xff]
    %v3881 = vld [vmem:[#allocation9 + $0x1b0] sm:$0xff]
    %v3882 = vld [vmem:[#allocation9 + $0x1b8] sm:$0xff]
    %v3883 = vld [vmem:[#allocation9 + $0x1c0] sm:$0xff]
    %v3884 = vld [vmem:[#allocation9 + $0x1c8] sm:$0xff]
    %v3885 = vld [vmem:[#allocation9 + $0x1d0] sm:$0xff]
    %v3886 = vld [vmem:[#allocation9 + $0x1d8] sm:$0xff]
    %v3887 = vld [vmem:[#allocation9 + $0x1e0] sm:$0xff]
    %v3888 = vld [vmem:[#allocation9 + $0x1e8] sm:$0xff]
    %v3889 = vld [vmem:[#allocation9 + $0x1f0] sm:$0xff]
    %v3890 = vld [vmem:[#allocation9 + $0x1f8] sm:$0xff]
    %v3891 = vld [vmem:[#allocation9 + $0x200] sm:$0xff]
    %v3892 = vld [vmem:[#allocation9 + $0x208] sm:$0xff]
    %v3893 = vld [vmem:[#allocation9 + $0x210] sm:$0xff]
    %v3894 = vld [vmem:[#allocation9 + $0x218] sm:$0xff]
    %v3895 = vld [vmem:[#allocation9 + $0x220] sm:$0xff]
    %v3896 = vld [vmem:[#allocation9 + $0x228] sm:$0xff]
    %v3897 = vld [vmem:[#allocation9 + $0x230] sm:$0xff]
    %v3898 = vld [vmem:[#allocation9 + $0x238] sm:$0xff]
    %v3899 = vld [vmem:[#allocation9 + $0x240] sm:$0xff]
    %v3900 = vld [vmem:[#allocation9 + $0x248] sm:$0xff]
    %v3901 = vld [vmem:[#allocation9 + $0x250] sm:$0xff]
    %v3902 = vld [vmem:[#allocation9 + $0x258] sm:$0xff]
    %v3903 = vld [vmem:[#allocation9 + $0x260] sm:$0xff]
    %v3904 = vld [vmem:[#allocation9 + $0x268] sm:$0xff]
    %v3905 = vld [vmem:[#allocation9 + $0x270] sm:$0xff]
    %v3906 = vld [vmem:[#allocation9 + $0x278] sm:$0xff]
    %v3907 = vld [vmem:[#allocation9 + $0x280] sm:$0xff]
    %v3908 = vld [vmem:[#allocation9 + $0x288] sm:$0xff]
    %v3909 = vld [vmem:[#allocation9 + $0x290] sm:$0xff]
    %v3910 = vld [vmem:[#allocation9 + $0x298] sm:$0xff]
    %v3911 = vld [vmem:[#allocation9 + $0x2a0] sm:$0xff]
    %v3912 = vld [vmem:[#allocation9 + $0x2a8] sm:$0xff]
    %v3913 = vld [vmem:[#allocation9 + $0x2b0] sm:$0xff]
    %v3914 = vld [vmem:[#allocation9 + $0x2b8] sm:$0xff]
    %v3915 = vld [vmem:[#allocation9 + $0x2c0] sm:$0xff]
    %v3916 = vld [vmem:[#allocation9 + $0x2c8] sm:$0xff]
    %v3917 = vld [vmem:[#allocation9 + $0x2d0] sm:$0xff]
    %v3918 = vld [vmem:[#allocation9 + $0x2d8] sm:$0xff]
    %v3919 = vld [vmem:[#allocation9 + $0x2e0] sm:$0xff]
    %v3920 = vld [vmem:[#allocation9 + $0x2e8] sm:$0xff]
    %v3921 = vld [vmem:[#allocation9 + $0x2f0] sm:$0xff]
    %v3922 = vld [vmem:[#allocation9 + $0x2f8] sm:$0xff]
    %v3923 = vld [vmem:[#allocation9 + $0x300] sm:$0xff]
    %v3924 = vld [vmem:[#allocation9 + $0x308] sm:$0xff]
    %v3925 = vld [vmem:[#allocation9 + $0x310] sm:$0xff]
    %v3926 = vld [vmem:[#allocation9 + $0x318] sm:$0xff]
    %v3927 = vld [vmem:[#allocation9 + $0x320] sm:$0xff]
    %v3928 = vld [vmem:[#allocation9 + $0x328] sm:$0xff]
    %v3929 = vld [vmem:[#allocation9 + $0x330] sm:$0xff]
    %v3930 = vld [vmem:[#allocation9 + $0x338] sm:$0xff]
    %v3931 = vld [vmem:[#allocation9 + $0x340] sm:$0xff]
    %v3932 = vld [vmem:[#allocation9 + $0x348] sm:$0xff]
    %v3933 = vld [vmem:[#allocation9 + $0x350] sm:$0xff]
    %v3934 = vld [vmem:[#allocation9 + $0x358] sm:$0xff]
    %v3935 = vld [vmem:[#allocation9 + $0x360] sm:$0xff]
    %v3936 = vld [vmem:[#allocation9 + $0x368] sm:$0xff]
    %v3937 = vld [vmem:[#allocation9 + $0x370] sm:$0xff]
    %v3938 = vld [vmem:[#allocation9 + $0x378] sm:$0xff]
    %v3939 = vld [vmem:[#allocation9 + $0x380] sm:$0xff]
    %v3940 = vld [vmem:[#allocation9 + $0x388] sm:$0xff]
    %v3941 = vld [vmem:[#allocation9 + $0x390] sm:$0xff]
    %v3942 = vld [vmem:[#allocation9 + $0x398] sm:$0xff]
    %v3943 = vld [vmem:[#allocation9 + $0x3a0] sm:$0xff]
    %v3944 = vld [vmem:[#allocation9 + $0x3a8] sm:$0xff]
    %v3945 = vld [vmem:[#allocation9 + $0x3b0] sm:$0xff]
    %v3946 = vld [vmem:[#allocation9 + $0x3b8] sm:$0xff]
    %v3947 = vld [vmem:[#allocation9 + $0x3c0] sm:$0xff]
    %v3948 = vld [vmem:[#allocation9 + $0x3c8] sm:$0xff]
    %v3949 = vld [vmem:[#allocation9 + $0x3d0] sm:$0xff]
    %v3950 = vld [vmem:[#allocation9 + $0x3d8] sm:$0xff]
    %v3951 = vld [vmem:[#allocation9 + $0x3e0] sm:$0xff]
    %v3952 = vld [vmem:[#allocation9 + $0x3e8] sm:$0xff]
    %v3953 = vld [vmem:[#allocation9 + $0x3f0] sm:$0xff]
    %v3954 = vld [vmem:[#allocation9 + $0x3f8] sm:$0xff]
    %v3955 = vld [vmem:[%s4] sm:$0xf]
    %v3957 = vperm.slane %v3955, 0
    %v3958 = vperm.slane %v3955, 1
    %v3959 = vperm.slane %v3955, 2
    %v3960 = vperm.slane %v3955, 3
    %v4093 = vunpack.c.l.b16 %v3827
    %v4094 = vunpack.c.h.b16 %v3827
    %v4095 = vunpack.c.l.b16 %v3828
    %v4096 = vunpack.c.h.b16 %v3828
    %v4097 = vunpack.c.l.b16 %v3829
    %v4098 = vunpack.c.h.b16 %v3829
    %v4099 = vunpack.c.l.b16 %v3830
    %v4100 = vunpack.c.h.b16 %v3830
    %v4101 = vunpack.c.l.b16 %v3831
    %v4102 = vunpack.c.h.b16 %v3831
    %v4103 = vunpack.c.l.b16 %v3832
    %v4104 = vunpack.c.h.b16 %v3832
    %v4105 = vunpack.c.l.b16 %v3833
    %v4106 = vunpack.c.h.b16 %v3833
    %v4107 = vunpack.c.l.b16 %v3834
    %v4108 = vunpack.c.h.b16 %v3834
    %v4109 = vunpack.c.l.b16 %v3835
    %v4110 = vunpack.c.h.b16 %v3835
    %v4111 = vunpack.c.l.b16 %v3836
    %v4112 = vunpack.c.h.b16 %v3836
    %v4113 = vunpack.c.l.b16 %v3837
    %v4114 = vunpack.c.h.b16 %v3837
    %v4115 = vunpack.c.l.b16 %v3838
    %v4116 = vunpack.c.h.b16 %v3838
    %v4117 = vunpack.c.l.b16 %v3839
    %v4118 = vunpack.c.h.b16 %v3839
    %v4119 = vunpack.c.l.b16 %v3840
    %v4120 = vunpack.c.h.b16 %v3840
    %v4121 = vunpack.c.l.b16 %v3841
    %v4122 = vunpack.c.h.b16 %v3841
    %v4123 = vunpack.c.l.b16 %v3842
    %v4124 = vunpack.c.h.b16 %v3842
    %v4125 = vunpack.c.l.b16 %v3843
    %v4126 = vunpack.c.h.b16 %v3843
    %v4127 = vunpack.c.l.b16 %v3844
    %v4128 = vunpack.c.h.b16 %v3844
    %v4129 = vunpack.c.l.b16 %v3845
    %v4130 = vunpack.c.h.b16 %v3845
    %v4131 = vunpack.c.l.b16 %v3846
    %v4132 = vunpack.c.h.b16 %v3846
    %v4133 = vunpack.c.l.b16 %v3847
    %v4134 = vunpack.c.h.b16 %v3847
    %v4135 = vunpack.c.l.b16 %v3848
    %v4136 = vunpack.c.h.b16 %v3848
    %v4137 = vunpack.c.l.b16 %v3849
    %v4138 = vunpack.c.h.b16 %v3849
    %v4139 = vunpack.c.l.b16 %v3850
    %v4140 = vunpack.c.h.b16 %v3850
    %v4141 = vunpack.c.l.b16 %v3851
    %v4142 = vunpack.c.h.b16 %v3851
    %v4143 = vunpack.c.l.b16 %v3852
    %v4144 = vunpack.c.h.b16 %v3852
    %v4145 = vunpack.c.l.b16 %v3853
    %v4146 = vunpack.c.h.b16 %v3853
    %v4147 = vunpack.c.l.b16 %v3854
    %v4148 = vunpack.c.h.b16 %v3854
    %v4149 = vunpack.c.l.b16 %v3855
    %v4150 = vunpack.c.h.b16 %v3855
    %v4151 = vunpack.c.l.b16 %v3856
    %v4152 = vunpack.c.h.b16 %v3856
    %v4153 = vunpack.c.l.b16 %v3857
    %v4154 = vunpack.c.h.b16 %v3857
    %v4155 = vunpack.c.l.b16 %v3858
    %v4156 = vunpack.c.h.b16 %v3858
    %v4157 = vunpack.c.l.b16 %v3859
    %v4158 = vunpack.c.h.b16 %v3859
    %v4159 = vunpack.c.l.b16 %v3860
    %v4160 = vunpack.c.h.b16 %v3860
    %v4161 = vunpack.c.l.b16 %v3861
    %v4162 = vunpack.c.h.b16 %v3861
    %v4163 = vunpack.c.l.b16 %v3862
    %v4164 = vunpack.c.h.b16 %v3862
    %v4165 = vunpack.c.l.b16 %v3863
    %v4166 = vunpack.c.h.b16 %v3863
    %v4167 = vunpack.c.l.b16 %v3864
    %v4168 = vunpack.c.h.b16 %v3864
    %v4169 = vunpack.c.l.b16 %v3865
    %v4170 = vunpack.c.h.b16 %v3865
    %v4171 = vunpack.c.l.b16 %v3866
    %v4172 = vunpack.c.h.b16 %v3866
    %v4173 = vunpack.c.l.b16 %v3867
    %v4174 = vunpack.c.h.b16 %v3867
    %v4175 = vunpack.c.l.b16 %v3868
    %v4176 = vunpack.c.h.b16 %v3868
    %v4177 = vunpack.c.l.b16 %v3869
    %v4178 = vunpack.c.h.b16 %v3869
    %v4179 = vunpack.c.l.b16 %v3870
    %v4180 = vunpack.c.h.b16 %v3870
    %v4181 = vunpack.c.l.b16 %v3871
    %v4182 = vunpack.c.h.b16 %v3871
    %v4183 = vunpack.c.l.b16 %v3872
    %v4184 = vunpack.c.h.b16 %v3872
    %v4185 = vunpack.c.l.b16 %v3873
    %v4186 = vunpack.c.h.b16 %v3873
    %v4187 = vunpack.c.l.b16 %v3874
    %v4188 = vunpack.c.h.b16 %v3874
    %v4189 = vunpack.c.l.b16 %v3875
    %v4190 = vunpack.c.h.b16 %v3875
    %v4191 = vunpack.c.l.b16 %v3876
    %v4192 = vunpack.c.h.b16 %v3876
    %v4193 = vunpack.c.l.b16 %v3877
    %v4194 = vunpack.c.h.b16 %v3877
    %v4195 = vunpack.c.l.b16 %v3878
    %v4196 = vunpack.c.h.b16 %v3878
    %v4197 = vunpack.c.l.b16 %v3879
    %v4198 = vunpack.c.h.b16 %v3879
    %v4199 = vunpack.c.l.b16 %v3880
    %v4200 = vunpack.c.h.b16 %v3880
    %v4201 = vunpack.c.l.b16 %v3881
    %v4202 = vunpack.c.h.b16 %v3881
    %v4203 = vunpack.c.l.b16 %v3882
    %v4204 = vunpack.c.h.b16 %v3882
    %v4205 = vunpack.c.l.b16 %v3883
    %v4206 = vunpack.c.h.b16 %v3883
    %v4207 = vunpack.c.l.b16 %v3884
    %v4208 = vunpack.c.h.b16 %v3884
    %v4209 = vunpack.c.l.b16 %v3885
    %v4210 = vunpack.c.h.b16 %v3885
    %v4211 = vunpack.c.l.b16 %v3886
    %v4212 = vunpack.c.h.b16 %v3886
    %v4213 = vunpack.c.l.b16 %v3887
    %v4214 = vunpack.c.h.b16 %v3887
    %v4215 = vunpack.c.l.b16 %v3888
    %v4216 = vunpack.c.h.b16 %v3888
    %v4217 = vunpack.c.l.b16 %v3889
    %v4218 = vunpack.c.h.b16 %v3889
    %v4219 = vunpack.c.l.b16 %v3890
    %v4220 = vunpack.c.h.b16 %v3890
    %v4221 = vunpack.c.l.b16 %v3891
    %v4222 = vunpack.c.h.b16 %v3891
    %v4223 = vunpack.c.l.b16 %v3892
    %v4224 = vunpack.c.h.b16 %v3892
    %v4225 = vunpack.c.l.b16 %v3893
    %v4226 = vunpack.c.h.b16 %v3893
    %v4227 = vunpack.c.l.b16 %v3894
    %v4228 = vunpack.c.h.b16 %v3894
    %v4229 = vunpack.c.l.b16 %v3895
    %v4230 = vunpack.c.h.b16 %v3895
    %v4231 = vunpack.c.l.b16 %v3896
    %v4232 = vunpack.c.h.b16 %v3896
    %v4233 = vunpack.c.l.b16 %v3897
    %v4234 = vunpack.c.h.b16 %v3897
    %v4235 = vunpack.c.l.b16 %v3898
    %v4236 = vunpack.c.h.b16 %v3898
    %v4237 = vunpack.c.l.b16 %v3899
    %v4238 = vunpack.c.h.b16 %v3899
    %v4239 = vunpack.c.l.b16 %v3900
    %v4240 = vunpack.c.h.b16 %v3900
    %v4241 = vunpack.c.l.b16 %v3901
    %v4242 = vunpack.c.h.b16 %v3901
    %v4243 = vunpack.c.l.b16 %v3902
    %v4244 = vunpack.c.h.b16 %v3902
    %v4245 = vunpack.c.l.b16 %v3903
    %v4246 = vunpack.c.h.b16 %v3903
    %v4247 = vunpack.c.l.b16 %v3904
    %v4248 = vunpack.c.h.b16 %v3904
    %v4249 = vunpack.c.l.b16 %v3905
    %v4250 = vunpack.c.h.b16 %v3905
    %v4251 = vunpack.c.l.b16 %v3906
    %v4252 = vunpack.c.h.b16 %v3906
    %v4253 = vunpack.c.l.b16 %v3907
    %v4254 = vunpack.c.h.b16 %v3907
    %v4255 = vunpack.c.l.b16 %v3908
    %v4256 = vunpack.c.h.b16 %v3908
    %v4257 = vunpack.c.l.b16 %v3909
    %v4258 = vunpack.c.h.b16 %v3909
    %v4259 = vunpack.c.l.b16 %v3910
    %v4260 = vunpack.c.h.b16 %v3910
    %v4261 = vunpack.c.l.b16 %v3911
    %v4262 = vunpack.c.h.b16 %v3911
    %v4263 = vunpack.c.l.b16 %v3912
    %v4264 = vunpack.c.h.b16 %v3912
    %v4265 = vunpack.c.l.b16 %v3913
    %v4266 = vunpack.c.h.b16 %v3913
    %v4267 = vunpack.c.l.b16 %v3914
    %v4268 = vunpack.c.h.b16 %v3914
    %v4269 = vunpack.c.l.b16 %v3915
    %v4270 = vunpack.c.h.b16 %v3915
    %v4271 = vunpack.c.l.b16 %v3916
    %v4272 = vunpack.c.h.b16 %v3916
    %v4273 = vunpack.c.l.b16 %v3917
    %v4274 = vunpack.c.h.b16 %v3917
    %v4275 = vunpack.c.l.b16 %v3918
    %v4276 = vunpack.c.h.b16 %v3918
    %v4277 = vunpack.c.l.b16 %v3919
    %v4278 = vunpack.c.h.b16 %v3919
    %v4279 = vunpack.c.l.b16 %v3920
    %v4280 = vunpack.c.h.b16 %v3920
    %v4281 = vunpack.c.l.b16 %v3921
    %v4282 = vunpack.c.h.b16 %v3921
    %v4283 = vunpack.c.l.b16 %v3922
    %v4284 = vunpack.c.h.b16 %v3922
    %v4285 = vunpack.c.l.b16 %v3923
    %v4286 = vunpack.c.h.b16 %v3923
    %v4287 = vunpack.c.l.b16 %v3924
    %v4288 = vunpack.c.h.b16 %v3924
    %v4289 = vunpack.c.l.b16 %v3925
    %v4290 = vunpack.c.h.b16 %v3925
    %v4291 = vunpack.c.l.b16 %v3926
    %v4292 = vunpack.c.h.b16 %v3926
    %v4293 = vunpack.c.l.b16 %v3927
    %v4294 = vunpack.c.h.b16 %v3927
    %v4295 = vunpack.c.l.b16 %v3928
    %v4296 = vunpack.c.h.b16 %v3928
    %v4297 = vunpack.c.l.b16 %v3929
    %v4298 = vunpack.c.h.b16 %v3929
    %v4299 = vunpack.c.l.b16 %v3930
    %v4300 = vunpack.c.h.b16 %v3930
    %v4301 = vunpack.c.l.b16 %v3931
    %v4302 = vunpack.c.h.b16 %v3931
    %v4303 = vunpack.c.l.b16 %v3932
    %v4304 = vunpack.c.h.b16 %v3932
    %v4305 = vunpack.c.l.b16 %v3933
    %v4306 = vunpack.c.h.b16 %v3933
    %v4307 = vunpack.c.l.b16 %v3934
    %v4308 = vunpack.c.h.b16 %v3934
    %v4309 = vunpack.c.l.b16 %v3935
    %v4310 = vunpack.c.h.b16 %v3935
    %v4311 = vunpack.c.l.b16 %v3936
    %v4312 = vunpack.c.h.b16 %v3936
    %v4313 = vunpack.c.l.b16 %v3937
    %v4314 = vunpack.c.h.b16 %v3937
    %v4315 = vunpack.c.l.b16 %v3938
    %v4316 = vunpack.c.h.b16 %v3938
    %v4317 = vunpack.c.l.b16 %v3939
    %v4318 = vunpack.c.h.b16 %v3939
    %v4319 = vunpack.c.l.b16 %v3940
    %v4320 = vunpack.c.h.b16 %v3940
    %v4321 = vunpack.c.l.b16 %v3941
    %v4322 = vunpack.c.h.b16 %v3941
    %v4323 = vunpack.c.l.b16 %v3942
    %v4324 = vunpack.c.h.b16 %v3942
    %v4325 = vunpack.c.l.b16 %v3943
    %v4326 = vunpack.c.h.b16 %v3943
    %v4327 = vunpack.c.l.b16 %v3944
    %v4328 = vunpack.c.h.b16 %v3944
    %v4329 = vunpack.c.l.b16 %v3945
    %v4330 = vunpack.c.h.b16 %v3945
    %v4331 = vunpack.c.l.b16 %v3946
    %v4332 = vunpack.c.h.b16 %v3946
    %v4333 = vunpack.c.l.b16 %v3947
    %v4334 = vunpack.c.h.b16 %v3947
    %v4335 = vunpack.c.l.b16 %v3948
    %v4336 = vunpack.c.h.b16 %v3948
    %v4337 = vunpack.c.l.b16 %v3949
    %v4338 = vunpack.c.h.b16 %v3949
    %v4339 = vunpack.c.l.b16 %v3950
    %v4340 = vunpack.c.h.b16 %v3950
    %v4341 = vunpack.c.l.b16 %v3951
    %v4342 = vunpack.c.h.b16 %v3951
    %v4343 = vunpack.c.l.b16 %v3952
    %v4344 = vunpack.c.h.b16 %v3952
    %v4345 = vunpack.c.l.b16 %v3953
    %v4346 = vunpack.c.h.b16 %v3953
    %v4347 = vunpack.c.l.b16 %v3954
    %v4348 = vunpack.c.h.b16 %v3954
    %v4349 = vpack.c.b16 %v4097, %v4093
    %v4350 = vpack.c.b16 %v4098, %v4094
    %v4351 = vpack.c.b16 %v4099, %v4095
    %v4352 = vpack.c.b16 %v4100, %v4096
    %v4353 = vpack.c.b16 %v4105, %v4101
    %v4354 = vpack.c.b16 %v4106, %v4102
    %v4355 = vpack.c.b16 %v4107, %v4103
    %v4356 = vpack.c.b16 %v4108, %v4104
    %v4357 = vpack.c.b16 %v4113, %v4109
    %v4358 = vpack.c.b16 %v4114, %v4110
    %v4359 = vpack.c.b16 %v4115, %v4111
    %v4360 = vpack.c.b16 %v4116, %v4112
    %v4361 = vpack.c.b16 %v4121, %v4117
    %v4362 = vpack.c.b16 %v4122, %v4118
    %v4363 = vpack.c.b16 %v4123, %v4119
    %v4364 = vpack.c.b16 %v4124, %v4120
    %v4365 = vpack.c.b16 %v4129, %v4125
    %v4366 = vpack.c.b16 %v4130, %v4126
    %v4367 = vpack.c.b16 %v4131, %v4127
    %v4368 = vpack.c.b16 %v4132, %v4128
    %v4369 = vpack.c.b16 %v4137, %v4133
    %v4370 = vpack.c.b16 %v4138, %v4134
    %v4371 = vpack.c.b16 %v4139, %v4135
    %v4372 = vpack.c.b16 %v4140, %v4136
    %v4373 = vpack.c.b16 %v4145, %v4141
    %v4374 = vpack.c.b16 %v4146, %v4142
    %v4375 = vpack.c.b16 %v4147, %v4143
    %v4376 = vpack.c.b16 %v4148, %v4144
    %v4377 = vpack.c.b16 %v4153, %v4149
    %v4378 = vpack.c.b16 %v4154, %v4150
    %v4379 = vpack.c.b16 %v4155, %v4151
    %v4380 = vpack.c.b16 %v4156, %v4152
    %v4381 = vpack.c.b16 %v4161, %v4157
    %v4382 = vpack.c.b16 %v4162, %v4158
    %v4383 = vpack.c.b16 %v4163, %v4159
    %v4384 = vpack.c.b16 %v4164, %v4160
    %v4385 = vpack.c.b16 %v4169, %v4165
    %v4386 = vpack.c.b16 %v4170, %v4166
    %v4387 = vpack.c.b16 %v4171, %v4167
    %v4388 = vpack.c.b16 %v4172, %v4168
    %v4389 = vpack.c.b16 %v4177, %v4173
    %v4390 = vpack.c.b16 %v4178, %v4174
    %v4391 = vpack.c.b16 %v4179, %v4175
    %v4392 = vpack.c.b16 %v4180, %v4176
    %v4393 = vpack.c.b16 %v4185, %v4181
    %v4394 = vpack.c.b16 %v4186, %v4182
    %v4395 = vpack.c.b16 %v4187, %v4183
    %v4396 = vpack.c.b16 %v4188, %v4184
    %v4397 = vpack.c.b16 %v4193, %v4189
    %v4398 = vpack.c.b16 %v4194, %v4190
    %v4399 = vpack.c.b16 %v4195, %v4191
    %v4400 = vpack.c.b16 %v4196, %v4192
    %v4401 = vpack.c.b16 %v4201, %v4197
    %v4402 = vpack.c.b16 %v4202, %v4198
    %v4403 = vpack.c.b16 %v4203, %v4199
    %v4404 = vpack.c.b16 %v4204, %v4200
    %v4405 = vpack.c.b16 %v4209, %v4205
    %v4406 = vpack.c.b16 %v4210, %v4206
    %v4407 = vpack.c.b16 %v4211, %v4207
    %v4408 = vpack.c.b16 %v4212, %v4208
    %v4409 = vpack.c.b16 %v4217, %v4213
    %v4410 = vpack.c.b16 %v4218, %v4214
    %v4411 = vpack.c.b16 %v4219, %v4215
    %v4412 = vpack.c.b16 %v4220, %v4216
    %v4413 = vpack.c.b16 %v4225, %v4221
    %v4414 = vpack.c.b16 %v4226, %v4222
    %v4415 = vpack.c.b16 %v4227, %v4223
    %v4416 = vpack.c.b16 %v4228, %v4224
    %v4417 = vpack.c.b16 %v4233, %v4229
    %v4418 = vpack.c.b16 %v4234, %v4230
    %v4419 = vpack.c.b16 %v4235, %v4231
    %v4420 = vpack.c.b16 %v4236, %v4232
    %v4421 = vpack.c.b16 %v4241, %v4237
    %v4422 = vpack.c.b16 %v4242, %v4238
    %v4423 = vpack.c.b16 %v4243, %v4239
    %v4424 = vpack.c.b16 %v4244, %v4240
    %v4425 = vpack.c.b16 %v4249, %v4245
    %v4426 = vpack.c.b16 %v4250, %v4246
    %v4427 = vpack.c.b16 %v4251, %v4247
    %v4428 = vpack.c.b16 %v4252, %v4248
    %v4429 = vpack.c.b16 %v4257, %v4253
    %v4430 = vpack.c.b16 %v4258, %v4254
    %v4431 = vpack.c.b16 %v4259, %v4255
    %v4432 = vpack.c.b16 %v4260, %v4256
    %v4433 = vpack.c.b16 %v4265, %v4261
    %v4434 = vpack.c.b16 %v4266, %v4262
    %v4435 = vpack.c.b16 %v4267, %v4263
    %v4436 = vpack.c.b16 %v4268, %v4264
    %v4437 = vpack.c.b16 %v4273, %v4269
    %v4438 = vpack.c.b16 %v4274, %v4270
    %v4439 = vpack.c.b16 %v4275, %v4271
    %v4440 = vpack.c.b16 %v4276, %v4272
    %v4441 = vpack.c.b16 %v4281, %v4277
    %v4442 = vpack.c.b16 %v4282, %v4278
    %v4443 = vpack.c.b16 %v4283, %v4279
    %v4444 = vpack.c.b16 %v4284, %v4280
    %v4445 = vpack.c.b16 %v4289, %v4285
    %v4446 = vpack.c.b16 %v4290, %v4286
    %v4447 = vpack.c.b16 %v4291, %v4287
    %v4448 = vpack.c.b16 %v4292, %v4288
    %v4449 = vpack.c.b16 %v4297, %v4293
    %v4450 = vpack.c.b16 %v4298, %v4294
    %v4451 = vpack.c.b16 %v4299, %v4295
    %v4452 = vpack.c.b16 %v4300, %v4296
    %v4453 = vpack.c.b16 %v4305, %v4301
    %v4454 = vpack.c.b16 %v4306, %v4302
    %v4455 = vpack.c.b16 %v4307, %v4303
    %v4456 = vpack.c.b16 %v4308, %v4304
    %v4457 = vpack.c.b16 %v4313, %v4309
    %v4458 = vpack.c.b16 %v4314, %v4310
    %v4459 = vpack.c.b16 %v4315, %v4311
    %v4460 = vpack.c.b16 %v4316, %v4312
    %v4461 = vpack.c.b16 %v4321, %v4317
    %v4462 = vpack.c.b16 %v4322, %v4318
    %v4463 = vpack.c.b16 %v4323, %v4319
    %v4464 = vpack.c.b16 %v4324, %v4320
    %v4465 = vpack.c.b16 %v4329, %v4325
    %v4466 = vpack.c.b16 %v4330, %v4326
    %v4467 = vpack.c.b16 %v4331, %v4327
    %v4468 = vpack.c.b16 %v4332, %v4328
    %v4469 = vpack.c.b16 %v4337, %v4333
    %v4470 = vpack.c.b16 %v4338, %v4334
    %v4471 = vpack.c.b16 %v4339, %v4335
    %v4472 = vpack.c.b16 %v4340, %v4336
    %v4473 = vpack.c.b16 %v4345, %v4341
    %v4474 = vpack.c.b16 %v4346, %v4342
    %v4475 = vpack.c.b16 %v4347, %v4343
    %v4476 = vpack.c.b16 %v4348, %v4344
    %4605 = vmatpush.bf16.msra.mxu0 %v4377
    %4606 = vmatpush.bf16.msra.mxu0 %v4373
    %4607 = vmatpush.bf16.msra.mxu0 %v4369
    %4608 = vmatpush.bf16.msra.mxu0 %v4365
    %4609 = vmatpush.bf16.msra.mxu0 %v4361
    %4610 = vmatpush.bf16.msra.mxu0 %v4357
    %4611 = vmatpush.bf16.msra.mxu0 %v4353
    %4612 = vmatpush.bf16.msra.mxu0 %v4349
    %4613 = vmatmul.bf16.gmra.mxu0 %v3795
    %v4614 = vpop.f32.mrf.mxu0
    %v4615 = vadd.f32 %v3957, %v4614
    %v4616 = vpop.f32.mrf.mxu0
    %v4617 = vadd.f32 %v3957, %v4616
    %4618 = vmatmul.bf16.gmra.mxu0 %v3799
    %v4619 = vpop.f32.mrf.mxu0
    %v4620 = vadd.f32 %v3957, %v4619
    %v4621 = vpop.f32.mrf.mxu0
    %v4622 = vadd.f32 %v3957, %v4621
    %4623 = vmatmul.bf16.gmra.mxu0 %v3803
    %v4624 = vpop.f32.mrf.mxu0
    %v4625 = vadd.f32 %v3957, %v4624
    %v4626 = vpop.f32.mrf.mxu0
    %v4627 = vadd.f32 %v3957, %v4626
    %4628 = vmatmul.bf16.gmra.mxu0 %v3807
    %v4629 = vpop.f32.mrf.mxu0
    %v4630 = vadd.f32 %v3957, %v4629
    %v4631 = vpop.f32.mrf.mxu0
    %v4632 = vadd.f32 %v3957, %v4631
    %4633 = vmatmul.bf16.gmra.mxu0 %v3811
    %v4634 = vpop.f32.mrf.mxu0
    %v4635 = vadd.f32 %v3957, %v4634
    %v4636 = vpop.f32.mrf.mxu0
    %v4637 = vadd.f32 %v3957, %v4636
    %4638 = vmatmul.bf16.gmra.mxu0 %v3815
    %v4639 = vpop.f32.mrf.mxu0
    %v4640 = vadd.f32 %v3957, %v4639
    %v4641 = vpop.f32.mrf.mxu0
    %v4642 = vadd.f32 %v3957, %v4641
    %4643 = vmatmul.bf16.gmra.mxu0 %v3819
    %v4644 = vpop.f32.mrf.mxu0
    %v4645 = vadd.f32 %v3957, %v4644
    %v4646 = vpop.f32.mrf.mxu0
    %v4647 = vadd.f32 %v3957, %v4646
    %4648 = vmatmul.bf16.gmra.mxu0 %v3823
    %v4649 = vpop.f32.mrf.mxu0
    %v4650 = vadd.f32 %v3957, %v4649
    %v4651 = vpop.f32.mrf.mxu0
    %v4652 = vadd.f32 %v3957, %v4651
    %4653 = vdwg.mxu0
    %4654 = vmatpush.bf16.msra.mxu0 %v4409
    %4655 = vmatpush.bf16.msra.mxu0 %v4405
    %4656 = vmatpush.bf16.msra.mxu0 %v4401
    %4657 = vmatpush.bf16.msra.mxu0 %v4397
    %4658 = vmatpush.bf16.msra.mxu0 %v4393
    %4659 = vmatpush.bf16.msra.mxu0 %v4389
    %4660 = vmatpush.bf16.msra.mxu0 %v4385
    %4661 = vmatpush.bf16.msra.mxu0 %v4381
    %4662 = vmatmul.bf16.gmra.mxu0 %v3796
    %v4663 = vpop.f32.mrf.mxu0
    %v4664 = vadd.f32 %v4615, %v4663
    %v4665 = vpop.f32.mrf.mxu0
    %v4666 = vadd.f32 %v4617, %v4665
    %4667 = vmatmul.bf16.gmra.mxu0 %v3800
    %v4668 = vpop.f32.mrf.mxu0
    %v4669 = vadd.f32 %v4620, %v4668
    %v4670 = vpop.f32.mrf.mxu0
    %v4671 = vadd.f32 %v4622, %v4670
    %4672 = vmatmul.bf16.gmra.mxu0 %v3804
    %v4673 = vpop.f32.mrf.mxu0
    %v4674 = vadd.f32 %v4625, %v4673
    %v4675 = vpop.f32.mrf.mxu0
    %v4676 = vadd.f32 %v4627, %v4675
    %4677 = vmatmul.bf16.gmra.mxu0 %v3808
    %v4678 = vpop.f32.mrf.mxu0
    %v4679 = vadd.f32 %v4630, %v4678
    %v4680 = vpop.f32.mrf.mxu0
    %v4681 = vadd.f32 %v4632, %v4680
    %4682 = vmatmul.bf16.gmra.mxu0 %v3812
    %v4683 = vpop.f32.mrf.mxu0
    %v4684 = vadd.f32 %v4635, %v4683
    %v4685 = vpop.f32.mrf.mxu0
    %v4686 = vadd.f32 %v4637, %v4685
    %4687 = vmatmul.bf16.gmra.mxu0 %v3816
    %v4688 = vpop.f32.mrf.mxu0
    %v4689 = vadd.f32 %v4640, %v4688
    %v4690 = vpop.f32.mrf.mxu0
    %v4691 = vadd.f32 %v4642, %v4690
    %4692 = vmatmul.bf16.gmra.mxu0 %v3820
    %v4693 = vpop.f32.mrf.mxu0
    %v4694 = vadd.f32 %v4645, %v4693
    %v4695 = vpop.f32.mrf.mxu0
    %v4696 = vadd.f32 %v4647, %v4695
    %4697 = vmatmul.bf16.gmra.mxu0 %v3824
    %v4698 = vpop.f32.mrf.mxu0
    %v4699 = vadd.f32 %v4650, %v4698
    %v4700 = vpop.f32.mrf.mxu0
    %v4701 = vadd.f32 %v4652, %v4700
    %4702 = vdwg.mxu0
    %4703 = vmatpush.bf16.msra.mxu0 %v4441
    %4704 = vmatpush.bf16.msra.mxu0 %v4437
    %4705 = vmatpush.bf16.msra.mxu0 %v4433
    %4706 = vmatpush.bf16.msra.mxu0 %v4429
    %4707 = vmatpush.bf16.msra.mxu0 %v4425
    %4708 = vmatpush.bf16.msra.mxu0 %v4421
    %4709 = vmatpush.bf16.msra.mxu0 %v4417
    %4710 = vmatpush.bf16.msra.mxu0 %v4413
    %4711 = vmatmul.bf16.gmra.mxu0 %v3797
    %v4712 = vpop.f32.mrf.mxu0
    %v4713 = vadd.f32 %v4664, %v4712
    %v4714 = vpop.f32.mrf.mxu0
    %v4715 = vadd.f32 %v4666, %v4714
    %4716 = vmatmul.bf16.gmra.mxu0 %v3801
    %v4717 = vpop.f32.mrf.mxu0
    %v4718 = vadd.f32 %v4669, %v4717
    %v4719 = vpop.f32.mrf.mxu0
    %v4720 = vadd.f32 %v4671, %v4719
    %4721 = vmatmul.bf16.gmra.mxu0 %v3805
    %v4722 = vpop.f32.mrf.mxu0
    %v4723 = vadd.f32 %v4674, %v4722
    %v4724 = vpop.f32.mrf.mxu0
    %v4725 = vadd.f32 %v4676, %v4724
    %4726 = vmatmul.bf16.gmra.mxu0 %v3809
    %v4727 = vpop.f32.mrf.mxu0
    %v4728 = vadd.f32 %v4679, %v4727
    %v4729 = vpop.f32.mrf.mxu0
    %v4730 = vadd.f32 %v4681, %v4729
    %4731 = vmatmul.bf16.gmra.mxu0 %v3813
    %v4732 = vpop.f32.mrf.mxu0
    %v4733 = vadd.f32 %v4684, %v4732
    %v4734 = vpop.f32.mrf.mxu0
    %v4735 = vadd.f32 %v4686, %v4734
    %4736 = vmatmul.bf16.gmra.mxu0 %v3817
    %v4737 = vpop.f32.mrf.mxu0
    %v4738 = vadd.f32 %v4689, %v4737
    %v4739 = vpop.f32.mrf.mxu0
    %v4740 = vadd.f32 %v4691, %v4739
    %4741 = vmatmul.bf16.gmra.mxu0 %v3821
    %v4742 = vpop.f32.mrf.mxu0
    %v4743 = vadd.f32 %v4694, %v4742
    %v4744 = vpop.f32.mrf.mxu0
    %v4745 = vadd.f32 %v4696, %v4744
    %4746 = vmatmul.bf16.gmra.mxu0 %v3825
    %v4747 = vpop.f32.mrf.mxu0
    %v4748 = vadd.f32 %v4699, %v4747
    %v4749 = vpop.f32.mrf.mxu0
    %v4750 = vadd.f32 %v4701, %v4749
    %4751 = vdwg.mxu0
    %4752 = vmatpush.bf16.msra.mxu0 %v4473
    %4753 = vmatpush.bf16.msra.mxu0 %v4469
    %4754 = vmatpush.bf16.msra.mxu0 %v4465
    %4755 = vmatpush.bf16.msra.mxu0 %v4461
    %4756 = vmatpush.bf16.msra.mxu0 %v4457
    %4757 = vmatpush.bf16.msra.mxu0 %v4453
    %4758 = vmatpush.bf16.msra.mxu0 %v4449
    %4759 = vmatpush.bf16.msra.mxu0 %v4445
    %4760 = vmatmul.bf16.gmra.mxu0 %v3798
    %v4761 = vpop.f32.mrf.mxu0
    %v4762 = vadd.f32 %v4713, %v4761
    %v4763 = vpop.f32.mrf.mxu0
    %v4764 = vadd.f32 %v4715, %v4763
    %4765 = vmatmul.bf16.gmra.mxu0 %v3802
    %v4766 = vpop.f32.mrf.mxu0
    %v4767 = vadd.f32 %v4718, %v4766
    %v4768 = vpop.f32.mrf.mxu0
    %v4769 = vadd.f32 %v4720, %v4768
    %4770 = vmatmul.bf16.gmra.mxu0 %v3806
    %v4771 = vpop.f32.mrf.mxu0
    %v4772 = vadd.f32 %v4723, %v4771
    %v4773 = vpop.f32.mrf.mxu0
    %v4774 = vadd.f32 %v4725, %v4773
    %4775 = vmatmul.bf16.gmra.mxu0 %v3810
    %v4776 = vpop.f32.mrf.mxu0
    %v4777 = vadd.f32 %v4728, %v4776
    %v4778 = vpop.f32.mrf.mxu0
    %v4779 = vadd.f32 %v4730, %v4778
    %4780 = vmatmul.bf16.gmra.mxu0 %v3814
    %v4781 = vpop.f32.mrf.mxu0
    %v4782 = vadd.f32 %v4733, %v4781
    %v4783 = vpop.f32.mrf.mxu0
    %v4784 = vadd.f32 %v4735, %v4783
    %4785 = vmatmul.bf16.gmra.mxu0 %v3818
    %v4786 = vpop.f32.mrf.mxu0
    %v4787 = vadd.f32 %v4738, %v4786
    %v4788 = vpop.f32.mrf.mxu0
    %v4789 = vadd.f32 %v4740, %v4788
    %4790 = vmatmul.bf16.gmra.mxu0 %v3822
    %v4791 = vpop.f32.mrf.mxu0
    %v4792 = vadd.f32 %v4743, %v4791
    %v4793 = vpop.f32.mrf.mxu0
    %v4794 = vadd.f32 %v4745, %v4793
    %4795 = vmatmul.bf16.gmra.mxu0 %v3826
    %v4796 = vpop.f32.mrf.mxu0
    %v4797 = vadd.f32 %v4748, %v4796
    %v4798 = vpop.f32.mrf.mxu0
    %v4799 = vadd.f32 %v4750, %v4798
    %4800 = vdwg.mxu0
    %4801 = vmatpush.bf16.msra.mxu0 %v4378
    %4802 = vmatpush.bf16.msra.mxu0 %v4374
    %4803 = vmatpush.bf16.msra.mxu0 %v4370
    %4804 = vmatpush.bf16.msra.mxu0 %v4366
    %4805 = vmatpush.bf16.msra.mxu0 %v4362
    %4806 = vmatpush.bf16.msra.mxu0 %v4358
    %4807 = vmatpush.bf16.msra.mxu0 %v4354
    %4808 = vmatpush.bf16.msra.mxu0 %v4350
    %4809 = vmatmul.bf16.gmra.mxu0 %v3795
    %v4810 = vpop.f32.mrf.mxu0
    %v4811 = vadd.f32 %v3958, %v4810
    %v4812 = vpop.f32.mrf.mxu0
    %v4813 = vadd.f32 %v3958, %v4812
    %4814 = vmatmul.bf16.gmra.mxu0 %v3799
    %v4815 = vpop.f32.mrf.mxu0
    %v4816 = vadd.f32 %v3958, %v4815
    %v4817 = vpop.f32.mrf.mxu0
    %v4818 = vadd.f32 %v3958, %v4817
    %4819 = vmatmul.bf16.gmra.mxu0 %v3803
    %v4820 = vpop.f32.mrf.mxu0
    %v4821 = vadd.f32 %v3958, %v4820
    %v4822 = vpop.f32.mrf.mxu0
    %v4823 = vadd.f32 %v3958, %v4822
    %4824 = vmatmul.bf16.gmra.mxu0 %v3807
    %v4825 = vpop.f32.mrf.mxu0
    %v4826 = vadd.f32 %v3958, %v4825
    %v4827 = vpop.f32.mrf.mxu0
    %v4828 = vadd.f32 %v3958, %v4827
    %4829 = vmatmul.bf16.gmra.mxu0 %v3811
    %v4830 = vpop.f32.mrf.mxu0
    %v4831 = vadd.f32 %v3958, %v4830
    %v4832 = vpop.f32.mrf.mxu0
    %v4833 = vadd.f32 %v3958, %v4832
    %4834 = vmatmul.bf16.gmra.mxu0 %v3815
    %v4835 = vpop.f32.mrf.mxu0
    %v4836 = vadd.f32 %v3958, %v4835
    %v4837 = vpop.f32.mrf.mxu0
    %v4838 = vadd.f32 %v3958, %v4837
    %4839 = vmatmul.bf16.gmra.mxu0 %v3819
    %v4840 = vpop.f32.mrf.mxu0
    %v4841 = vadd.f32 %v3958, %v4840
    %v4842 = vpop.f32.mrf.mxu0
    %v4843 = vadd.f32 %v3958, %v4842
    %4844 = vmatmul.bf16.gmra.mxu0 %v3823
    %v4845 = vpop.f32.mrf.mxu0
    %v4846 = vadd.f32 %v3958, %v4845
    %v4847 = vpop.f32.mrf.mxu0
    %v4848 = vadd.f32 %v3958, %v4847
    %4849 = vdwg.mxu0
    %4850 = vmatpush.bf16.msra.mxu0 %v4410
    %4851 = vmatpush.bf16.msra.mxu0 %v4406
    %4852 = vmatpush.bf16.msra.mxu0 %v4402
    %4853 = vmatpush.bf16.msra.mxu0 %v4398
    %4854 = vmatpush.bf16.msra.mxu0 %v4394
    %4855 = vmatpush.bf16.msra.mxu0 %v4390
    %4856 = vmatpush.bf16.msra.mxu0 %v4386
    %4857 = vmatpush.bf16.msra.mxu0 %v4382
    %4858 = vmatmul.bf16.gmra.mxu0 %v3796
    %v4859 = vpop.f32.mrf.mxu0
    %v4860 = vadd.f32 %v4811, %v4859
    %v4861 = vpop.f32.mrf.mxu0
    %v4862 = vadd.f32 %v4813, %v4861
    %4863 = vmatmul.bf16.gmra.mxu0 %v3800
    %v4864 = vpop.f32.mrf.mxu0
    %v4865 = vadd.f32 %v4816, %v4864
    %v4866 = vpop.f32.mrf.mxu0
    %v4867 = vadd.f32 %v4818, %v4866
    %4868 = vmatmul.bf16.gmra.mxu0 %v3804
    %v4869 = vpop.f32.mrf.mxu0
    %v4870 = vadd.f32 %v4821, %v4869
    %v4871 = vpop.f32.mrf.mxu0
    %v4872 = vadd.f32 %v4823, %v4871
    %4873 = vmatmul.bf16.gmra.mxu0 %v3808
    %v4874 = vpop.f32.mrf.mxu0
    %v4875 = vadd.f32 %v4826, %v4874
    %v4876 = vpop.f32.mrf.mxu0
    %v4877 = vadd.f32 %v4828, %v4876
    %4878 = vmatmul.bf16.gmra.mxu0 %v3812
    %v4879 = vpop.f32.mrf.mxu0
    %v4880 = vadd.f32 %v4831, %v4879
    %v4881 = vpop.f32.mrf.mxu0
    %v4882 = vadd.f32 %v4833, %v4881
    %4883 = vmatmul.bf16.gmra.mxu0 %v3816
    %v4884 = vpop.f32.mrf.mxu0
    %v4885 = vadd.f32 %v4836, %v4884
    %v4886 = vpop.f32.mrf.mxu0
    %v4887 = vadd.f32 %v4838, %v4886
    %4888 = vmatmul.bf16.gmra.mxu0 %v3820
    %v4889 = vpop.f32.mrf.mxu0
    %v4890 = vadd.f32 %v4841, %v4889
    %v4891 = vpop.f32.mrf.mxu0
    %v4892 = vadd.f32 %v4843, %v4891
    %4893 = vmatmul.bf16.gmra.mxu0 %v3824
    %v4894 = vpop.f32.mrf.mxu0
    %v4895 = vadd.f32 %v4846, %v4894
    %v4896 = vpop.f32.mrf.mxu0
    %v4897 = vadd.f32 %v4848, %v4896
    %4898 = vdwg.mxu0
    %4899 = vmatpush.bf16.msra.mxu0 %v4442
    %4900 = vmatpush.bf16.msra.mxu0 %v4438
    %4901 = vmatpush.bf16.msra.mxu0 %v4434
    %4902 = vmatpush.bf16.msra.mxu0 %v4430
    %4903 = vmatpush.bf16.msra.mxu0 %v4426
    %4904 = vmatpush.bf16.msra.mxu0 %v4422
    %4905 = vmatpush.bf16.msra.mxu0 %v4418
    %4906 = vmatpush.bf16.msra.mxu0 %v4414
    %4907 = vmatmul.bf16.gmra.mxu0 %v3797
    %v4908 = vpop.f32.mrf.mxu0
    %v4909 = vadd.f32 %v4860, %v4908
    %v4910 = vpop.f32.mrf.mxu0
    %v4911 = vadd.f32 %v4862, %v4910
    %4912 = vmatmul.bf16.gmra.mxu0 %v3801
    %v4913 = vpop.f32.mrf.mxu0
    %v4914 = vadd.f32 %v4865, %v4913
    %v4915 = vpop.f32.mrf.mxu0
    %v4916 = vadd.f32 %v4867, %v4915
    %4917 = vmatmul.bf16.gmra.mxu0 %v3805
    %v4918 = vpop.f32.mrf.mxu0
    %v4919 = vadd.f32 %v4870, %v4918
    %v4920 = vpop.f32.mrf.mxu0
    %v4921 = vadd.f32 %v4872, %v4920
    %4922 = vmatmul.bf16.gmra.mxu0 %v3809
    %v4923 = vpop.f32.mrf.mxu0
    %v4924 = vadd.f32 %v4875, %v4923
    %v4925 = vpop.f32.mrf.mxu0
    %v4926 = vadd.f32 %v4877, %v4925
    %4927 = vmatmul.bf16.gmra.mxu0 %v3813
    %v4928 = vpop.f32.mrf.mxu0
    %v4929 = vadd.f32 %v4880, %v4928
    %v4930 = vpop.f32.mrf.mxu0
    %v4931 = vadd.f32 %v4882, %v4930
    %4932 = vmatmul.bf16.gmra.mxu0 %v3817
    %v4933 = vpop.f32.mrf.mxu0
    %v4934 = vadd.f32 %v4885, %v4933
    %v4935 = vpop.f32.mrf.mxu0
    %v4936 = vadd.f32 %v4887, %v4935
    %4937 = vmatmul.bf16.gmra.mxu0 %v3821
    %v4938 = vpop.f32.mrf.mxu0
    %v4939 = vadd.f32 %v4890, %v4938
    %v4940 = vpop.f32.mrf.mxu0
    %v4941 = vadd.f32 %v4892, %v4940
    %4942 = vmatmul.bf16.gmra.mxu0 %v3825
    %v4943 = vpop.f32.mrf.mxu0
    %v4944 = vadd.f32 %v4895, %v4943
    %v4945 = vpop.f32.mrf.mxu0
    %v4946 = vadd.f32 %v4897, %v4945
    %4947 = vdwg.mxu0
    %4948 = vmatpush.bf16.msra.mxu0 %v4474
    %4949 = vmatpush.bf16.msra.mxu0 %v4470
    %4950 = vmatpush.bf16.msra.mxu0 %v4466
    %4951 = vmatpush.bf16.msra.mxu0 %v4462
    %4952 = vmatpush.bf16.msra.mxu0 %v4458
    %4953 = vmatpush.bf16.msra.mxu0 %v4454
    %4954 = vmatpush.bf16.msra.mxu0 %v4450
    %4955 = vmatpush.bf16.msra.mxu0 %v4446
    %4956 = vmatmul.bf16.gmra.mxu0 %v3798
    %v4957 = vpop.f32.mrf.mxu0
    %v4958 = vadd.f32 %v4909, %v4957
    %v4959 = vpop.f32.mrf.mxu0
    %v4960 = vadd.f32 %v4911, %v4959
    %4961 = vmatmul.bf16.gmra.mxu0 %v3802
    %v4962 = vpop.f32.mrf.mxu0
    %v4963 = vadd.f32 %v4914, %v4962
    %v4964 = vpop.f32.mrf.mxu0
    %v4965 = vadd.f32 %v4916, %v4964
    %4966 = vmatmul.bf16.gmra.mxu0 %v3806
    %v4967 = vpop.f32.mrf.mxu0
    %v4968 = vadd.f32 %v4919, %v4967
    %v4969 = vpop.f32.mrf.mxu0
    %v4970 = vadd.f32 %v4921, %v4969
    %4971 = vmatmul.bf16.gmra.mxu0 %v3810
    %v4972 = vpop.f32.mrf.mxu0
    %v4973 = vadd.f32 %v4924, %v4972
    %v4974 = vpop.f32.mrf.mxu0
    %v4975 = vadd.f32 %v4926, %v4974
    %4976 = vmatmul.bf16.gmra.mxu0 %v3814
    %v4977 = vpop.f32.mrf.mxu0
    %v4978 = vadd.f32 %v4929, %v4977
    %v4979 = vpop.f32.mrf.mxu0
    %v4980 = vadd.f32 %v4931, %v4979
    %4981 = vmatmul.bf16.gmra.mxu0 %v3818
    %v4982 = vpop.f32.mrf.mxu0
    %v4983 = vadd.f32 %v4934, %v4982
    %v4984 = vpop.f32.mrf.mxu0
    %v4985 = vadd.f32 %v4936, %v4984
    %4986 = vmatmul.bf16.gmra.mxu0 %v3822
    %v4987 = vpop.f32.mrf.mxu0
    %v4988 = vadd.f32 %v4939, %v4987
    %v4989 = vpop.f32.mrf.mxu0
    %v4990 = vadd.f32 %v4941, %v4989
    %4991 = vmatmul.bf16.gmra.mxu0 %v3826
    %v4992 = vpop.f32.mrf.mxu0
    %v4993 = vadd.f32 %v4944, %v4992
    %v4994 = vpop.f32.mrf.mxu0
    %v4995 = vadd.f32 %v4946, %v4994
    %4996 = vdwg.mxu0
    %4997 = vmatpush.bf16.msra.mxu0 %v4379
    %4998 = vmatpush.bf16.msra.mxu0 %v4375
    %4999 = vmatpush.bf16.msra.mxu0 %v4371
    %5000 = vmatpush.bf16.msra.mxu0 %v4367
    %5001 = vmatpush.bf16.msra.mxu0 %v4363
    %5002 = vmatpush.bf16.msra.mxu0 %v4359
    %5003 = vmatpush.bf16.msra.mxu0 %v4355
    %5004 = vmatpush.bf16.msra.mxu0 %v4351
    %5005 = vmatmul.bf16.gmra.mxu0 %v3795
    %v5006 = vpop.f32.mrf.mxu0
    %v5007 = vadd.f32 %v3959, %v5006
    %v5008 = vpop.f32.mrf.mxu0
    %v5009 = vadd.f32 %v3959, %v5008
    %5010 = vmatmul.bf16.gmra.mxu0 %v3799
    %v5011 = vpop.f32.mrf.mxu0
    %v5012 = vadd.f32 %v3959, %v5011
    %v5013 = vpop.f32.mrf.mxu0
    %v5014 = vadd.f32 %v3959, %v5013
    %5015 = vmatmul.bf16.gmra.mxu0 %v3803
    %v5016 = vpop.f32.mrf.mxu0
    %v5017 = vadd.f32 %v3959, %v5016
    %v5018 = vpop.f32.mrf.mxu0
    %v5019 = vadd.f32 %v3959, %v5018
    %5020 = vmatmul.bf16.gmra.mxu0 %v3807
    %v5021 = vpop.f32.mrf.mxu0
    %v5022 = vadd.f32 %v3959, %v5021
    %v5023 = vpop.f32.mrf.mxu0
    %v5024 = vadd.f32 %v3959, %v5023
    %5025 = vmatmul.bf16.gmra.mxu0 %v3811
    %v5026 = vpop.f32.mrf.mxu0
    %v5027 = vadd.f32 %v3959, %v5026
    %v5028 = vpop.f32.mrf.mxu0
    %v5029 = vadd.f32 %v3959, %v5028
    %5030 = vmatmul.bf16.gmra.mxu0 %v3815
    %v5031 = vpop.f32.mrf.mxu0
    %v5032 = vadd.f32 %v3959, %v5031
    %v5033 = vpop.f32.mrf.mxu0
    %v5034 = vadd.f32 %v3959, %v5033
    %5035 = vmatmul.bf16.gmra.mxu0 %v3819
    %v5036 = vpop.f32.mrf.mxu0
    %v5037 = vadd.f32 %v3959, %v5036
    %v5038 = vpop.f32.mrf.mxu0
    %v5039 = vadd.f32 %v3959, %v5038
    %5040 = vmatmul.bf16.gmra.mxu0 %v3823
    %v5041 = vpop.f32.mrf.mxu0
    %v5042 = vadd.f32 %v3959, %v5041
    %v5043 = vpop.f32.mrf.mxu0
    %v5044 = vadd.f32 %v3959, %v5043
    %5045 = vdwg.mxu0
    %5046 = vmatpush.bf16.msra.mxu0 %v4411
    %5047 = vmatpush.bf16.msra.mxu0 %v4407
    %5048 = vmatpush.bf16.msra.mxu0 %v4403
    %5049 = vmatpush.bf16.msra.mxu0 %v4399
    %5050 = vmatpush.bf16.msra.mxu0 %v4395
    %5051 = vmatpush.bf16.msra.mxu0 %v4391
    %5052 = vmatpush.bf16.msra.mxu0 %v4387
    %5053 = vmatpush.bf16.msra.mxu0 %v4383
    %5054 = vmatmul.bf16.gmra.mxu0 %v3796
    %v5055 = vpop.f32.mrf.mxu0
    %v5056 = vadd.f32 %v5007, %v5055
    %v5057 = vpop.f32.mrf.mxu0
    %v5058 = vadd.f32 %v5009, %v5057
    %5059 = vmatmul.bf16.gmra.mxu0 %v3800
    %v5060 = vpop.f32.mrf.mxu0
    %v5061 = vadd.f32 %v5012, %v5060
    %v5062 = vpop.f32.mrf.mxu0
    %v5063 = vadd.f32 %v5014, %v5062
    %5064 = vmatmul.bf16.gmra.mxu0 %v3804
    %v5065 = vpop.f32.mrf.mxu0
    %v5066 = vadd.f32 %v5017, %v5065
    %v5067 = vpop.f32.mrf.mxu0
    %v5068 = vadd.f32 %v5019, %v5067
    %5069 = vmatmul.bf16.gmra.mxu0 %v3808
    %v5070 = vpop.f32.mrf.mxu0
    %v5071 = vadd.f32 %v5022, %v5070
    %v5072 = vpop.f32.mrf.mxu0
    %v5073 = vadd.f32 %v5024, %v5072
    %5074 = vmatmul.bf16.gmra.mxu0 %v3812
    %v5075 = vpop.f32.mrf.mxu0
    %v5076 = vadd.f32 %v5027, %v5075
    %v5077 = vpop.f32.mrf.mxu0
    %v5078 = vadd.f32 %v5029, %v5077
    %5079 = vmatmul.bf16.gmra.mxu0 %v3816
    %v5080 = vpop.f32.mrf.mxu0
    %v5081 = vadd.f32 %v5032, %v5080
    %v5082 = vpop.f32.mrf.mxu0
    %v5083 = vadd.f32 %v5034, %v5082
    %5084 = vmatmul.bf16.gmra.mxu0 %v3820
    %v5085 = vpop.f32.mrf.mxu0
    %v5086 = vadd.f32 %v5037, %v5085
    %v5087 = vpop.f32.mrf.mxu0
    %v5088 = vadd.f32 %v5039, %v5087
    %5089 = vmatmul.bf16.gmra.mxu0 %v3824
    %v5090 = vpop.f32.mrf.mxu0
    %v5091 = vadd.f32 %v5042, %v5090
    %v5092 = vpop.f32.mrf.mxu0
    %v5093 = vadd.f32 %v5044, %v5092
    %5094 = vdwg.mxu0
    %5095 = vmatpush.bf16.msra.mxu0 %v4443
    %5096 = vmatpush.bf16.msra.mxu0 %v4439
    %5097 = vmatpush.bf16.msra.mxu0 %v4435
    %5098 = vmatpush.bf16.msra.mxu0 %v4431
    %5099 = vmatpush.bf16.msra.mxu0 %v4427
    %5100 = vmatpush.bf16.msra.mxu0 %v4423
    %5101 = vmatpush.bf16.msra.mxu0 %v4419
    %5102 = vmatpush.bf16.msra.mxu0 %v4415
    %5103 = vmatmul.bf16.gmra.mxu0 %v3797
    %v5104 = vpop.f32.mrf.mxu0
    %v5105 = vadd.f32 %v5056, %v5104
    %v5106 = vpop.f32.mrf.mxu0
    %v5107 = vadd.f32 %v5058, %v5106
    %5108 = vmatmul.bf16.gmra.mxu0 %v3801
    %v5109 = vpop.f32.mrf.mxu0
    %v5110 = vadd.f32 %v5061, %v5109
    %v5111 = vpop.f32.mrf.mxu0
    %v5112 = vadd.f32 %v5063, %v5111
    %5113 = vmatmul.bf16.gmra.mxu0 %v3805
    %v5114 = vpop.f32.mrf.mxu0
    %v5115 = vadd.f32 %v5066, %v5114
    %v5116 = vpop.f32.mrf.mxu0
    %v5117 = vadd.f32 %v5068, %v5116
    %5118 = vmatmul.bf16.gmra.mxu0 %v3809
    %v5119 = vpop.f32.mrf.mxu0
    %v5120 = vadd.f32 %v5071, %v5119
    %v5121 = vpop.f32.mrf.mxu0
    %v5122 = vadd.f32 %v5073, %v5121
    %5123 = vmatmul.bf16.gmra.mxu0 %v3813
    %v5124 = vpop.f32.mrf.mxu0
    %v5125 = vadd.f32 %v5076, %v5124
    %v5126 = vpop.f32.mrf.mxu0
    %v5127 = vadd.f32 %v5078, %v5126
    %5128 = vmatmul.bf16.gmra.mxu0 %v3817
    %v5129 = vpop.f32.mrf.mxu0
    %v5130 = vadd.f32 %v5081, %v5129
    %v5131 = vpop.f32.mrf.mxu0
    %v5132 = vadd.f32 %v5083, %v5131
    %5133 = vmatmul.bf16.gmra.mxu0 %v3821
    %v5134 = vpop.f32.mrf.mxu0
    %v5135 = vadd.f32 %v5086, %v5134
    %v5136 = vpop.f32.mrf.mxu0
    %v5137 = vadd.f32 %v5088, %v5136
    %5138 = vmatmul.bf16.gmra.mxu0 %v3825
    %v5139 = vpop.f32.mrf.mxu0
    %v5140 = vadd.f32 %v5091, %v5139
    %v5141 = vpop.f32.mrf.mxu0
    %v5142 = vadd.f32 %v5093, %v5141
    %5143 = vdwg.mxu0
    %5144 = vmatpush.bf16.msra.mxu0 %v4475
    %5145 = vmatpush.bf16.msra.mxu0 %v4471
    %5146 = vmatpush.bf16.msra.mxu0 %v4467
    %5147 = vmatpush.bf16.msra.mxu0 %v4463
    %5148 = vmatpush.bf16.msra.mxu0 %v4459
    %5149 = vmatpush.bf16.msra.mxu0 %v4455
    %5150 = vmatpush.bf16.msra.mxu0 %v4451
    %5151 = vmatpush.bf16.msra.mxu0 %v4447
    %5152 = vmatmul.bf16.gmra.mxu0 %v3798
    %v5153 = vpop.f32.mrf.mxu0
    %v5154 = vadd.f32 %v5105, %v5153
    %v5155 = vpop.f32.mrf.mxu0
    %v5156 = vadd.f32 %v5107, %v5155
    %5157 = vmatmul.bf16.gmra.mxu0 %v3802
    %v5158 = vpop.f32.mrf.mxu0
    %v5159 = vadd.f32 %v5110, %v5158
    %v5160 = vpop.f32.mrf.mxu0
    %v5161 = vadd.f32 %v5112, %v5160
    %5162 = vmatmul.bf16.gmra.mxu0 %v3806
    %v5163 = vpop.f32.mrf.mxu0
    %v5164 = vadd.f32 %v5115, %v5163
    %v5165 = vpop.f32.mrf.mxu0
    %v5166 = vadd.f32 %v5117, %v5165
    %5167 = vmatmul.bf16.gmra.mxu0 %v3810
    %v5168 = vpop.f32.mrf.mxu0
    %v5169 = vadd.f32 %v5120, %v5168
    %v5170 = vpop.f32.mrf.mxu0
    %v5171 = vadd.f32 %v5122, %v5170
    %5172 = vmatmul.bf16.gmra.mxu0 %v3814
    %v5173 = vpop.f32.mrf.mxu0
    %v5174 = vadd.f32 %v5125, %v5173
    %v5175 = vpop.f32.mrf.mxu0
    %v5176 = vadd.f32 %v5127, %v5175
    %5177 = vmatmul.bf16.gmra.mxu0 %v3818
    %v5178 = vpop.f32.mrf.mxu0
    %v5179 = vadd.f32 %v5130, %v5178
    %v5180 = vpop.f32.mrf.mxu0
    %v5181 = vadd.f32 %v5132, %v5180
    %5182 = vmatmul.bf16.gmra.mxu0 %v3822
    %v5183 = vpop.f32.mrf.mxu0
    %v5184 = vadd.f32 %v5135, %v5183
    %v5185 = vpop.f32.mrf.mxu0
    %v5186 = vadd.f32 %v5137, %v5185
    %5187 = vmatmul.bf16.gmra.mxu0 %v3826
    %v5188 = vpop.f32.mrf.mxu0
    %v5189 = vadd.f32 %v5140, %v5188
    %v5190 = vpop.f32.mrf.mxu0
    %v5191 = vadd.f32 %v5142, %v5190
    %5192 = vdwg.mxu0
    %5193 = vmatpush.bf16.msra.mxu0 %v4380
    %5194 = vmatpush.bf16.msra.mxu0 %v4376
    %5195 = vmatpush.bf16.msra.mxu0 %v4372
    %5196 = vmatpush.bf16.msra.mxu0 %v4368
    %5197 = vmatpush.bf16.msra.mxu0 %v4364
    %5198 = vmatpush.bf16.msra.mxu0 %v4360
    %5199 = vmatpush.bf16.msra.mxu0 %v4356
    %5200 = vmatpush.bf16.msra.mxu0 %v4352
    %5201 = vmatmul.bf16.gmra.mxu0 %v3795
    %v5202 = vpop.f32.mrf.mxu0
    %v5203 = vadd.f32 %v3960, %v5202
    %v5204 = vpop.f32.mrf.mxu0
    %v5205 = vadd.f32 %v3960, %v5204
    %5206 = vmatmul.bf16.gmra.mxu0 %v3799
    %v5207 = vpop.f32.mrf.mxu0
    %v5208 = vadd.f32 %v3960, %v5207
    %v5209 = vpop.f32.mrf.mxu0
    %v5210 = vadd.f32 %v3960, %v5209
    %5211 = vmatmul.bf16.gmra.mxu0 %v3803
    %v5212 = vpop.f32.mrf.mxu0
    %v5213 = vadd.f32 %v3960, %v5212
    %v5214 = vpop.f32.mrf.mxu0
    %v5215 = vadd.f32 %v3960, %v5214
    %5216 = vmatmul.bf16.gmra.mxu0 %v3807
    %v5217 = vpop.f32.mrf.mxu0
    %v5218 = vadd.f32 %v3960, %v5217
    %v5219 = vpop.f32.mrf.mxu0
    %v5220 = vadd.f32 %v3960, %v5219
    %5221 = vmatmul.bf16.gmra.mxu0 %v3811
    %v5222 = vpop.f32.mrf.mxu0
    %v5223 = vadd.f32 %v3960, %v5222
    %v5224 = vpop.f32.mrf.mxu0
    %v5225 = vadd.f32 %v3960, %v5224
    %5226 = vmatmul.bf16.gmra.mxu0 %v3815
    %v5227 = vpop.f32.mrf.mxu0
    %v5228 = vadd.f32 %v3960, %v5227
    %v5229 = vpop.f32.mrf.mxu0
    %v5230 = vadd.f32 %v3960, %v5229
    %5231 = vmatmul.bf16.gmra.mxu0 %v3819
    %v5232 = vpop.f32.mrf.mxu0
    %v5233 = vadd.f32 %v3960, %v5232
    %v5234 = vpop.f32.mrf.mxu0
    %v5235 = vadd.f32 %v3960, %v5234
    %5236 = vmatmul.bf16.gmra.mxu0 %v3823
    %v5237 = vpop.f32.mrf.mxu0
    %v5238 = vadd.f32 %v3960, %v5237
    %v5239 = vpop.f32.mrf.mxu0
    %v5240 = vadd.f32 %v3960, %v5239
    %5241 = vdwg.mxu0
    %5242 = vmatpush.bf16.msra.mxu0 %v4412
    %5243 = vmatpush.bf16.msra.mxu0 %v4408
    %5244 = vmatpush.bf16.msra.mxu0 %v4404
    %5245 = vmatpush.bf16.msra.mxu0 %v4400
    %5246 = vmatpush.bf16.msra.mxu0 %v4396
    %5247 = vmatpush.bf16.msra.mxu0 %v4392
    %5248 = vmatpush.bf16.msra.mxu0 %v4388
    %5249 = vmatpush.bf16.msra.mxu0 %v4384
    %5250 = vmatmul.bf16.gmra.mxu0 %v3796
    %v5251 = vpop.f32.mrf.mxu0
    %v5252 = vadd.f32 %v5203, %v5251
    %v5253 = vpop.f32.mrf.mxu0
    %v5254 = vadd.f32 %v5205, %v5253
    %5255 = vmatmul.bf16.gmra.mxu0 %v3800
    %v5256 = vpop.f32.mrf.mxu0
    %v5257 = vadd.f32 %v5208, %v5256
    %v5258 = vpop.f32.mrf.mxu0
    %v5259 = vadd.f32 %v5210, %v5258
    %5260 = vmatmul.bf16.gmra.mxu0 %v3804
    %v5261 = vpop.f32.mrf.mxu0
    %v5262 = vadd.f32 %v5213, %v5261
    %v5263 = vpop.f32.mrf.mxu0
    %v5264 = vadd.f32 %v5215, %v5263
    %5265 = vmatmul.bf16.gmra.mxu0 %v3808
    %v5266 = vpop.f32.mrf.mxu0
    %v5267 = vadd.f32 %v5218, %v5266
    %v5268 = vpop.f32.mrf.mxu0
    %v5269 = vadd.f32 %v5220, %v5268
    %5270 = vmatmul.bf16.gmra.mxu0 %v3812
    %v5271 = vpop.f32.mrf.mxu0
    %v5272 = vadd.f32 %v5223, %v5271
    %v5273 = vpop.f32.mrf.mxu0
    %v5274 = vadd.f32 %v5225, %v5273
    %5275 = vmatmul.bf16.gmra.mxu0 %v3816
    %v5276 = vpop.f32.mrf.mxu0
    %v5277 = vadd.f32 %v5228, %v5276
    %v5278 = vpop.f32.mrf.mxu0
    %v5279 = vadd.f32 %v5230, %v5278
    %5280 = vmatmul.bf16.gmra.mxu0 %v3820
    %v5281 = vpop.f32.mrf.mxu0
    %v5282 = vadd.f32 %v5233, %v5281
    %v5283 = vpop.f32.mrf.mxu0
    %v5284 = vadd.f32 %v5235, %v5283
    %5285 = vmatmul.bf16.gmra.mxu0 %v3824
    %v5286 = vpop.f32.mrf.mxu0
    %v5287 = vadd.f32 %v5238, %v5286
    %v5288 = vpop.f32.mrf.mxu0
    %v5289 = vadd.f32 %v5240, %v5288
    %5290 = vdwg.mxu0
    %5291 = vmatpush.bf16.msra.mxu0 %v4444
    %5292 = vmatpush.bf16.msra.mxu0 %v4440
    %5293 = vmatpush.bf16.msra.mxu0 %v4436
    %5294 = vmatpush.bf16.msra.mxu0 %v4432
    %5295 = vmatpush.bf16.msra.mxu0 %v4428
    %5296 = vmatpush.bf16.msra.mxu0 %v4424
    %5297 = vmatpush.bf16.msra.mxu0 %v4420
    %5298 = vmatpush.bf16.msra.mxu0 %v4416
    %5299 = vmatmul.bf16.gmra.mxu0 %v3797
    %v5300 = vpop.f32.mrf.mxu0
    %v5301 = vadd.f32 %v5252, %v5300
    %v5302 = vpop.f32.mrf.mxu0
    %v5303 = vadd.f32 %v5254, %v5302
    %5304 = vmatmul.bf16.gmra.mxu0 %v3801
    %v5305 = vpop.f32.mrf.mxu0
    %v5306 = vadd.f32 %v5257, %v5305
    %v5307 = vpop.f32.mrf.mxu0
    %v5308 = vadd.f32 %v5259, %v5307
    %5309 = vmatmul.bf16.gmra.mxu0 %v3805
    %v5310 = vpop.f32.mrf.mxu0
    %v5311 = vadd.f32 %v5262, %v5310
    %v5312 = vpop.f32.mrf.mxu0
    %v5313 = vadd.f32 %v5264, %v5312
    %5314 = vmatmul.bf16.gmra.mxu0 %v3809
    %v5315 = vpop.f32.mrf.mxu0
    %v5316 = vadd.f32 %v5267, %v5315
    %v5317 = vpop.f32.mrf.mxu0
    %v5318 = vadd.f32 %v5269, %v5317
    %5319 = vmatmul.bf16.gmra.mxu0 %v3813
    %v5320 = vpop.f32.mrf.mxu0
    %v5321 = vadd.f32 %v5272, %v5320
    %v5322 = vpop.f32.mrf.mxu0
    %v5323 = vadd.f32 %v5274, %v5322
    %5324 = vmatmul.bf16.gmra.mxu0 %v3817
    %v5325 = vpop.f32.mrf.mxu0
    %v5326 = vadd.f32 %v5277, %v5325
    %v5327 = vpop.f32.mrf.mxu0
    %v5328 = vadd.f32 %v5279, %v5327
    %5329 = vmatmul.bf16.gmra.mxu0 %v3821
    %v5330 = vpop.f32.mrf.mxu0
    %v5331 = vadd.f32 %v5282, %v5330
    %v5332 = vpop.f32.mrf.mxu0
    %v5333 = vadd.f32 %v5284, %v5332
    %5334 = vmatmul.bf16.gmra.mxu0 %v3825
    %v5335 = vpop.f32.mrf.mxu0
    %v5336 = vadd.f32 %v5287, %v5335
    %v5337 = vpop.f32.mrf.mxu0
    %v5338 = vadd.f32 %v5289, %v5337
    %5339 = vdwg.mxu0
    %5340 = vmatpush.bf16.msra.mxu0 %v4476
    %5341 = vmatpush.bf16.msra.mxu0 %v4472
    %5342 = vmatpush.bf16.msra.mxu0 %v4468
    %5343 = vmatpush.bf16.msra.mxu0 %v4464
    %5344 = vmatpush.bf16.msra.mxu0 %v4460
    %5345 = vmatpush.bf16.msra.mxu0 %v4456
    %5346 = vmatpush.bf16.msra.mxu0 %v4452
    %5347 = vmatpush.bf16.msra.mxu0 %v4448
    %5348 = vmatmul.bf16.gmra.mxu0 %v3798
    %v5349 = vpop.f32.mrf.mxu0
    %v5350 = vadd.f32 %v5301, %v5349
    %v5351 = vpop.f32.mrf.mxu0
    %v5352 = vadd.f32 %v5303, %v5351
    %5353 = vmatmul.bf16.gmra.mxu0 %v3802
    %v5354 = vpop.f32.mrf.mxu0
    %v5355 = vadd.f32 %v5306, %v5354
    %v5356 = vpop.f32.mrf.mxu0
    %v5357 = vadd.f32 %v5308, %v5356
    %5358 = vmatmul.bf16.gmra.mxu0 %v3806
    %v5359 = vpop.f32.mrf.mxu0
    %v5360 = vadd.f32 %v5311, %v5359
    %v5361 = vpop.f32.mrf.mxu0
    %v5362 = vadd.f32 %v5313, %v5361
    %5363 = vmatmul.bf16.gmra.mxu0 %v3810
    %v5364 = vpop.f32.mrf.mxu0
    %v5365 = vadd.f32 %v5316, %v5364
    %v5366 = vpop.f32.mrf.mxu0
    %v5367 = vadd.f32 %v5318, %v5366
    %5368 = vmatmul.bf16.gmra.mxu0 %v3814
    %v5369 = vpop.f32.mrf.mxu0
    %v5370 = vadd.f32 %v5321, %v5369
    %v5371 = vpop.f32.mrf.mxu0
    %v5372 = vadd.f32 %v5323, %v5371
    %5373 = vmatmul.bf16.gmra.mxu0 %v3818
    %v5374 = vpop.f32.mrf.mxu0
    %v5375 = vadd.f32 %v5326, %v5374
    %v5376 = vpop.f32.mrf.mxu0
    %v5377 = vadd.f32 %v5328, %v5376
    %5378 = vmatmul.bf16.gmra.mxu0 %v3822
    %v5379 = vpop.f32.mrf.mxu0
    %v5380 = vadd.f32 %v5331, %v5379
    %v5381 = vpop.f32.mrf.mxu0
    %v5382 = vadd.f32 %v5333, %v5381
    %5383 = vmatmul.bf16.gmra.mxu0 %v3826
    %v5384 = vpop.f32.mrf.mxu0
    %v5385 = vadd.f32 %v5336, %v5384
    %v5386 = vpop.f32.mrf.mxu0
    %v5387 = vadd.f32 %v5338, %v5386
    %5388 = vdwg.mxu0
    %v5389 = vtanh.pop %v4762
    %v5390 = vtanh.pop %v4958
    %v5391 = vtanh.pop %v4764
    %v5392 = vtanh.pop %v4960
    %v5393 = vtanh.pop %v4767
    %v5394 = vtanh.pop %v4963
    %v5395 = vtanh.pop %v4769
    %v5396 = vtanh.pop %v4965
    %v5397 = vtanh.pop %v4772
    %v5398 = vtanh.pop %v4968
    %v5399 = vtanh.pop %v4774
    %v5400 = vtanh.pop %v4970
    %v5401 = vtanh.pop %v4777
    %v5402 = vtanh.pop %v4973
    %v5403 = vtanh.pop %v4779
    %v5404 = vtanh.pop %v4975
    %v5405 = vtanh.pop %v4782
    %v5406 = vtanh.pop %v4978
    %v5407 = vtanh.pop %v4784
    %v5408 = vtanh.pop %v4980
    %v5409 = vtanh.pop %v4787
    %v5410 = vtanh.pop %v4983
    %v5411 = vtanh.pop %v4789
    %v5412 = vtanh.pop %v4985
    %v5413 = vtanh.pop %v4792
    %v5414 = vtanh.pop %v4988
    %v5415 = vtanh.pop %v4794
    %v5416 = vtanh.pop %v4990
    %v5417 = vtanh.pop %v4797
    %v5418 = vtanh.pop %v4993
    %v5419 = vtanh.pop %v4799
    %v5420 = vtanh.pop %v4995
    %v5421 = vxor.u32 %v5154, 2147483648
    %v5422 = vxor.u32 %v5350, 2147483648
    %v5423 = vxor.u32 %v5156, 2147483648
    %v5424 = vxor.u32 %v5352, 2147483648
    %v5425 = vxor.u32 %v5159, 2147483648
    %v5426 = vxor.u32 %v5355, 2147483648
    %v5427 = vxor.u32 %v5161, 2147483648
    %v5428 = vxor.u32 %v5357, 2147483648
    %v5429 = vxor.u32 %v5164, 2147483648
    %v5430 = vxor.u32 %v5360, 2147483648
    %v5431 = vxor.u32 %v5166, 2147483648
    %v5432 = vxor.u32 %v5362, 2147483648
    %v5433 = vxor.u32 %v5169, 2147483648
    %v5434 = vxor.u32 %v5365, 2147483648
    %v5435 = vxor.u32 %v5171, 2147483648
    %v5436 = vxor.u32 %v5367, 2147483648
    %v5437 = vxor.u32 %v5174, 2147483648
    %v5438 = vxor.u32 %v5370, 2147483648
    %v5439 = vxor.u32 %v5176, 2147483648
    %v5440 = vxor.u32 %v5372, 2147483648
    %v5441 = vxor.u32 %v5179, 2147483648
    %v5442 = vxor.u32 %v5375, 2147483648
    %v5443 = vxor.u32 %v5181, 2147483648
    %v5444 = vxor.u32 %v5377, 2147483648
    %v5445 = vxor.u32 %v5184, 2147483648
    %v5446 = vxor.u32 %v5380, 2147483648
    %v5447 = vxor.u32 %v5186, 2147483648
    %v5448 = vxor.u32 %v5382, 2147483648
    %v5449 = vxor.u32 %v5189, 2147483648
    %v5450 = vxor.u32 %v5385, 2147483648
    %v5451 = vxor.u32 %v5191, 2147483648
    %v5452 = vxor.u32 %v5387, 2147483648
    %v5453 = vmul.f32 %v5421, 1.442695
    %v5454 = vpow.pop %v5453
    %v5455 = vmul.f32 %v5422, 1.442695
    %v5456 = vpow.pop %v5455
    %v5457 = vmul.f32 %v5423, 1.442695
    %v5458 = vpow.pop %v5457
    %v5459 = vmul.f32 %v5424, 1.442695
    %v5460 = vpow.pop %v5459
    %v5461 = vmul.f32 %v5425, 1.442695
    %v5462 = vpow.pop %v5461
    %v5463 = vmul.f32 %v5426, 1.442695
    %v5464 = vpow.pop %v5463
    %v5465 = vmul.f32 %v5427, 1.442695
    %v5466 = vpow.pop %v5465
    %v5467 = vmul.f32 %v5428, 1.442695
    %v5468 = vpow.pop %v5467
    %v5469 = vmul.f32 %v5429, 1.442695
    %v5470 = vpow.pop %v5469
    %v5471 = vmul.f32 %v5430, 1.442695
    %v5472 = vpow.pop %v5471
    %v5473 = vmul.f32 %v5431, 1.442695
    %v5474 = vpow.pop %v5473
    %v5475 = vmul.f32 %v5432, 1.442695
    %v5476 = vpow.pop %v5475
    %v5477 = vmul.f32 %v5433, 1.442695
    %v5478 = vpow.pop %v5477
    %v5479 = vmul.f32 %v5434, 1.442695
    %v5480 = vpow.pop %v5479
    %v5481 = vmul.f32 %v5435, 1.442695
    %v5482 = vpow.pop %v5481
    %v5483 = vmul.f32 %v5436, 1.442695
    %v5484 = vpow.pop %v5483
    %v5485 = vmul.f32 %v5437, 1.442695
    %v5486 = vpow.pop %v5485
    %v5487 = vmul.f32 %v5438, 1.442695
    %v5488 = vpow.pop %v5487
    %v5489 = vmul.f32 %v5439, 1.442695
    %v5490 = vpow.pop %v5489
    %v5491 = vmul.f32 %v5440, 1.442695
    %v5492 = vpow.pop %v5491
    %v5493 = vmul.f32 %v5441, 1.442695
    %v5494 = vpow.pop %v5493
    %v5495 = vmul.f32 %v5442, 1.442695
    %v5496 = vpow.pop %v5495
    %v5497 = vmul.f32 %v5443, 1.442695
    %v5498 = vpow.pop %v5497
    %v5499 = vmul.f32 %v5444, 1.442695
    %v5500 = vpow.pop %v5499
    %v5501 = vmul.f32 %v5445, 1.442695
    %v5502 = vpow.pop %v5501
    %v5503 = vmul.f32 %v5446, 1.442695
    %v5504 = vpow.pop %v5503
    %v5505 = vmul.f32 %v5447, 1.442695
    %v5506 = vpow.pop %v5505
    %v5507 = vmul.f32 %v5448, 1.442695
    %v5508 = vpow.pop %v5507
    %v5509 = vmul.f32 %v5449, 1.442695
    %v5510 = vpow.pop %v5509
    %v5511 = vmul.f32 %v5450, 1.442695
    %v5512 = vpow.pop %v5511
    %v5513 = vmul.f32 %v5451, 1.442695
    %v5514 = vpow.pop %v5513
    %v5515 = vmul.f32 %v5452, 1.442695
    %v5516 = vpow.pop %v5515
    %v5517 = vadd.f32 %v5454, 1.0
    %v5518 = vadd.f32 %v5456, 1.0
    %v5519 = vadd.f32 %v5458, 1.0
    %v5520 = vadd.f32 %v5460, 1.0
    %v5521 = vadd.f32 %v5462, 1.0
    %v5522 = vadd.f32 %v5464, 1.0
    %v5523 = vadd.f32 %v5466, 1.0
    %v5524 = vadd.f32 %v5468, 1.0
    %v5525 = vadd.f32 %v5470, 1.0
    %v5526 = vadd.f32 %v5472, 1.0
    %v5527 = vadd.f32 %v5474, 1.0
    %v5528 = vadd.f32 %v5476, 1.0
    %v5529 = vadd.f32 %v5478, 1.0
    %v5530 = vadd.f32 %v5480, 1.0
    %v5531 = vadd.f32 %v5482, 1.0
    %v5532 = vadd.f32 %v5484, 1.0
    %v5533 = vadd.f32 %v5486, 1.0
    %v5534 = vadd.f32 %v5488, 1.0
    %v5535 = vadd.f32 %v5490, 1.0
    %v5536 = vadd.f32 %v5492, 1.0
    %v5537 = vadd.f32 %v5494, 1.0
    %v5538 = vadd.f32 %v5496, 1.0
    %v5539 = vadd.f32 %v5498, 1.0
    %v5540 = vadd.f32 %v5500, 1.0
    %v5541 = vadd.f32 %v5502, 1.0
    %v5542 = vadd.f32 %v5504, 1.0
    %v5543 = vadd.f32 %v5506, 1.0
    %v5544 = vadd.f32 %v5508, 1.0
    %v5545 = vadd.f32 %v5510, 1.0
    %v5546 = vadd.f32 %v5512, 1.0
    %v5547 = vadd.f32 %v5514, 1.0
    %v5548 = vadd.f32 %v5516, 1.0
    %v5549 = vrcp.pop %v5517
    %v5550 = vmul.f32 %v5517, %v5549
    %v5551 = vsub.f32 1.0, %v5550
    %v5552 = vmul.f32 %v5549, %v5551
    %v5553 = vadd.f32 %v5549, %v5552
    %vm5554 = vweird.f32 %v5517
    %vm5555 = vweird.f32 %v5549
    %vm5556 = vmor %vm5554, %vm5555
    %v5557 = vsel %vm5556, %v5549, %v5553
    %v5558 = vand.u32 2147483647, %v5517
    %vm5559 = vcmp.eq.f32.partialorder %v5558, 8.507059e+37
    %v5560 = vand.u32 %v5517, 2147483648
    %v5561 = vor.u32 1.1754944e-38, %v5560
    %v5562 = vsel %vm5559, %v5561, %v5557
    %v5563 = vmul.f32 1.0, %v5562
    %v5564 = vrcp.pop %v5518
    %v5565 = vmul.f32 %v5518, %v5564
    %v5566 = vsub.f32 1.0, %v5565
    %v5567 = vmul.f32 %v5564, %v5566
    %v5568 = vadd.f32 %v5564, %v5567
    %vm5569 = vweird.f32 %v5518
    %vm5570 = vweird.f32 %v5564
    %vm5571 = vmor %vm5569, %vm5570
    %v5572 = vsel %vm5571, %v5564, %v5568
    %v5573 = vand.u32 2147483647, %v5518
    %vm5574 = vcmp.eq.f32.partialorder %v5573, 8.507059e+37
    %v5575 = vand.u32 %v5518, 2147483648
    %v5576 = vor.u32 1.1754944e-38, %v5575
    %v5577 = vsel %vm5574, %v5576, %v5572
    %v5578 = vmul.f32 1.0, %v5577
    %v5579 = vrcp.pop %v5519
    %v5580 = vmul.f32 %v5519, %v5579
    %v5581 = vsub.f32 1.0, %v5580
    %v5582 = vmul.f32 %v5579, %v5581
    %v5583 = vadd.f32 %v5579, %v5582
    %vm5584 = vweird.f32 %v5519
    %vm5585 = vweird.f32 %v5579
    %vm5586 = vmor %vm5584, %vm5585
    %v5587 = vsel %vm5586, %v5579, %v5583
    %v5588 = vand.u32 2147483647, %v5519
    %vm5589 = vcmp.eq.f32.partialorder %v5588, 8.507059e+37
    %v5590 = vand.u32 %v5519, 2147483648
    %v5591 = vor.u32 1.1754944e-38, %v5590
    %v5592 = vsel %vm5589, %v5591, %v5587
    %v5593 = vmul.f32 1.0, %v5592
    %v5594 = vrcp.pop %v5520
    %v5595 = vmul.f32 %v5520, %v5594
    %v5596 = vsub.f32 1.0, %v5595
    %v5597 = vmul.f32 %v5594, %v5596
    %v5598 = vadd.f32 %v5594, %v5597
    %vm5599 = vweird.f32 %v5520
    %vm5600 = vweird.f32 %v5594
    %vm5601 = vmor %vm5599, %vm5600
    %v5602 = vsel %vm5601, %v5594, %v5598
    %v5603 = vand.u32 2147483647, %v5520
    %vm5604 = vcmp.eq.f32.partialorder %v5603, 8.507059e+37
    %v5605 = vand.u32 %v5520, 2147483648
    %v5606 = vor.u32 1.1754944e-38, %v5605
    %v5607 = vsel %vm5604, %v5606, %v5602
    %v5608 = vmul.f32 1.0, %v5607
    %v5609 = vrcp.pop %v5521
    %v5610 = vmul.f32 %v5521, %v5609
    %v5611 = vsub.f32 1.0, %v5610
    %v5612 = vmul.f32 %v5609, %v5611
    %v5613 = vadd.f32 %v5609, %v5612
    %vm5614 = vweird.f32 %v5521
    %vm5615 = vweird.f32 %v5609
    %vm5616 = vmor %vm5614, %vm5615
    %v5617 = vsel %vm5616, %v5609, %v5613
    %v5618 = vand.u32 2147483647, %v5521
    %vm5619 = vcmp.eq.f32.partialorder %v5618, 8.507059e+37
    %v5620 = vand.u32 %v5521, 2147483648
    %v5621 = vor.u32 1.1754944e-38, %v5620
    %v5622 = vsel %vm5619, %v5621, %v5617
    %v5623 = vmul.f32 1.0, %v5622
    %v5624 = vrcp.pop %v5522
    %v5625 = vmul.f32 %v5522, %v5624
    %v5626 = vsub.f32 1.0, %v5625
    %v5627 = vmul.f32 %v5624, %v5626
    %v5628 = vadd.f32 %v5624, %v5627
    %vm5629 = vweird.f32 %v5522
    %vm5630 = vweird.f32 %v5624
    %vm5631 = vmor %vm5629, %vm5630
    %v5632 = vsel %vm5631, %v5624, %v5628
    %v5633 = vand.u32 2147483647, %v5522
    %vm5634 = vcmp.eq.f32.partialorder %v5633, 8.507059e+37
    %v5635 = vand.u32 %v5522, 2147483648
    %v5636 = vor.u32 1.1754944e-38, %v5635
    %v5637 = vsel %vm5634, %v5636, %v5632
    %v5638 = vmul.f32 1.0, %v5637
    %v5639 = vrcp.pop %v5523
    %v5640 = vmul.f32 %v5523, %v5639
    %v5641 = vsub.f32 1.0, %v5640
    %v5642 = vmul.f32 %v5639, %v5641
    %v5643 = vadd.f32 %v5639, %v5642
    %vm5644 = vweird.f32 %v5523
    %vm5645 = vweird.f32 %v5639
    %vm5646 = vmor %vm5644, %vm5645
    %v5647 = vsel %vm5646, %v5639, %v5643
    %v5648 = vand.u32 2147483647, %v5523
    %vm5649 = vcmp.eq.f32.partialorder %v5648, 8.507059e+37
    %v5650 = vand.u32 %v5523, 2147483648
    %v5651 = vor.u32 1.1754944e-38, %v5650
    %v5652 = vsel %vm5649, %v5651, %v5647
    %v5653 = vmul.f32 1.0, %v5652
    %v5654 = vrcp.pop %v5524
    %v5655 = vmul.f32 %v5524, %v5654
    %v5656 = vsub.f32 1.0, %v5655
    %v5657 = vmul.f32 %v5654, %v5656
    %v5658 = vadd.f32 %v5654, %v5657
    %vm5659 = vweird.f32 %v5524
    %vm5660 = vweird.f32 %v5654
    %vm5661 = vmor %vm5659, %vm5660
    %v5662 = vsel %vm5661, %v5654, %v5658
    %v5663 = vand.u32 2147483647, %v5524
    %vm5664 = vcmp.eq.f32.partialorder %v5663, 8.507059e+37
    %v5665 = vand.u32 %v5524, 2147483648
    %v5666 = vor.u32 1.1754944e-38, %v5665
    %v5667 = vsel %vm5664, %v5666, %v5662
    %v5668 = vmul.f32 1.0, %v5667
    %v5669 = vrcp.pop %v5525
    %v5670 = vmul.f32 %v5525, %v5669
    %v5671 = vsub.f32 1.0, %v5670
    %v5672 = vmul.f32 %v5669, %v5671
    %v5673 = vadd.f32 %v5669, %v5672
    %vm5674 = vweird.f32 %v5525
    %vm5675 = vweird.f32 %v5669
    %vm5676 = vmor %vm5674, %vm5675
    %v5677 = vsel %vm5676, %v5669, %v5673
    %v5678 = vand.u32 2147483647, %v5525
    %vm5679 = vcmp.eq.f32.partialorder %v5678, 8.507059e+37
    %v5680 = vand.u32 %v5525, 2147483648
    %v5681 = vor.u32 1.1754944e-38, %v5680
    %v5682 = vsel %vm5679, %v5681, %v5677
    %v5683 = vmul.f32 1.0, %v5682
    %v5684 = vrcp.pop %v5526
    %v5685 = vmul.f32 %v5526, %v5684
    %v5686 = vsub.f32 1.0, %v5685
    %v5687 = vmul.f32 %v5684, %v5686
    %v5688 = vadd.f32 %v5684, %v5687
    %vm5689 = vweird.f32 %v5526
    %vm5690 = vweird.f32 %v5684
    %vm5691 = vmor %vm5689, %vm5690
    %v5692 = vsel %vm5691, %v5684, %v5688
    %v5693 = vand.u32 2147483647, %v5526
    %vm5694 = vcmp.eq.f32.partialorder %v5693, 8.507059e+37
    %v5695 = vand.u32 %v5526, 2147483648
    %v5696 = vor.u32 1.1754944e-38, %v5695
    %v5697 = vsel %vm5694, %v5696, %v5692
    %v5698 = vmul.f32 1.0, %v5697
    %v5699 = vrcp.pop %v5527
    %v5700 = vmul.f32 %v5527, %v5699
    %v5701 = vsub.f32 1.0, %v5700
    %v5702 = vmul.f32 %v5699, %v5701
    %v5703 = vadd.f32 %v5699, %v5702
    %vm5704 = vweird.f32 %v5527
    %vm5705 = vweird.f32 %v5699
    %vm5706 = vmor %vm5704, %vm5705
    %v5707 = vsel %vm5706, %v5699, %v5703
    %v5708 = vand.u32 2147483647, %v5527
    %vm5709 = vcmp.eq.f32.partialorder %v5708, 8.507059e+37
    %v5710 = vand.u32 %v5527, 2147483648
    %v5711 = vor.u32 1.1754944e-38, %v5710
    %v5712 = vsel %vm5709, %v5711, %v5707
    %v5713 = vmul.f32 1.0, %v5712
    %v5714 = vrcp.pop %v5528
    %v5715 = vmul.f32 %v5528, %v5714
    %v5716 = vsub.f32 1.0, %v5715
    %v5717 = vmul.f32 %v5714, %v5716
    %v5718 = vadd.f32 %v5714, %v5717
    %vm5719 = vweird.f32 %v5528
    %vm5720 = vweird.f32 %v5714
    %vm5721 = vmor %vm5719, %vm5720
    %v5722 = vsel %vm5721, %v5714, %v5718
    %v5723 = vand.u32 2147483647, %v5528
    %vm5724 = vcmp.eq.f32.partialorder %v5723, 8.507059e+37
    %v5725 = vand.u32 %v5528, 2147483648
    %v5726 = vor.u32 1.1754944e-38, %v5725
    %v5727 = vsel %vm5724, %v5726, %v5722
    %v5728 = vmul.f32 1.0, %v5727
    %v5729 = vrcp.pop %v5529
    %v5730 = vmul.f32 %v5529, %v5729
    %v5731 = vsub.f32 1.0, %v5730
    %v5732 = vmul.f32 %v5729, %v5731
    %v5733 = vadd.f32 %v5729, %v5732
    %vm5734 = vweird.f32 %v5529
    %vm5735 = vweird.f32 %v5729
    %vm5736 = vmor %vm5734, %vm5735
    %v5737 = vsel %vm5736, %v5729, %v5733
    %v5738 = vand.u32 2147483647, %v5529
    %vm5739 = vcmp.eq.f32.partialorder %v5738, 8.507059e+37
    %v5740 = vand.u32 %v5529, 2147483648
    %v5741 = vor.u32 1.1754944e-38, %v5740
    %v5742 = vsel %vm5739, %v5741, %v5737
    %v5743 = vmul.f32 1.0, %v5742
    %v5744 = vrcp.pop %v5530
    %v5745 = vmul.f32 %v5530, %v5744
    %v5746 = vsub.f32 1.0, %v5745
    %v5747 = vmul.f32 %v5744, %v5746
    %v5748 = vadd.f32 %v5744, %v5747
    %vm5749 = vweird.f32 %v5530
    %vm5750 = vweird.f32 %v5744
    %vm5751 = vmor %vm5749, %vm5750
    %v5752 = vsel %vm5751, %v5744, %v5748
    %v5753 = vand.u32 2147483647, %v5530
    %vm5754 = vcmp.eq.f32.partialorder %v5753, 8.507059e+37
    %v5755 = vand.u32 %v5530, 2147483648
    %v5756 = vor.u32 1.1754944e-38, %v5755
    %v5757 = vsel %vm5754, %v5756, %v5752
    %v5758 = vmul.f32 1.0, %v5757
    %v5759 = vrcp.pop %v5531
    %v5760 = vmul.f32 %v5531, %v5759
    %v5761 = vsub.f32 1.0, %v5760
    %v5762 = vmul.f32 %v5759, %v5761
    %v5763 = vadd.f32 %v5759, %v5762
    %vm5764 = vweird.f32 %v5531
    %vm5765 = vweird.f32 %v5759
    %vm5766 = vmor %vm5764, %vm5765
    %v5767 = vsel %vm5766, %v5759, %v5763
    %v5768 = vand.u32 2147483647, %v5531
    %vm5769 = vcmp.eq.f32.partialorder %v5768, 8.507059e+37
    %v5770 = vand.u32 %v5531, 2147483648
    %v5771 = vor.u32 1.1754944e-38, %v5770
    %v5772 = vsel %vm5769, %v5771, %v5767
    %v5773 = vmul.f32 1.0, %v5772
    %v5774 = vrcp.pop %v5532
    %v5775 = vmul.f32 %v5532, %v5774
    %v5776 = vsub.f32 1.0, %v5775
    %v5777 = vmul.f32 %v5774, %v5776
    %v5778 = vadd.f32 %v5774, %v5777
    %vm5779 = vweird.f32 %v5532
    %vm5780 = vweird.f32 %v5774
    %vm5781 = vmor %vm5779, %vm5780
    %v5782 = vsel %vm5781, %v5774, %v5778
    %v5783 = vand.u32 2147483647, %v5532
    %vm5784 = vcmp.eq.f32.partialorder %v5783, 8.507059e+37
    %v5785 = vand.u32 %v5532, 2147483648
    %v5786 = vor.u32 1.1754944e-38, %v5785
    %v5787 = vsel %vm5784, %v5786, %v5782
    %v5788 = vmul.f32 1.0, %v5787
    %v5789 = vrcp.pop %v5533
    %v5790 = vmul.f32 %v5533, %v5789
    %v5791 = vsub.f32 1.0, %v5790
    %v5792 = vmul.f32 %v5789, %v5791
    %v5793 = vadd.f32 %v5789, %v5792
    %vm5794 = vweird.f32 %v5533
    %vm5795 = vweird.f32 %v5789
    %vm5796 = vmor %vm5794, %vm5795
    %v5797 = vsel %vm5796, %v5789, %v5793
    %v5798 = vand.u32 2147483647, %v5533
    %vm5799 = vcmp.eq.f32.partialorder %v5798, 8.507059e+37
    %v5800 = vand.u32 %v5533, 2147483648
    %v5801 = vor.u32 1.1754944e-38, %v5800
    %v5802 = vsel %vm5799, %v5801, %v5797
    %v5803 = vmul.f32 1.0, %v5802
    %v5804 = vrcp.pop %v5534
    %v5805 = vmul.f32 %v5534, %v5804
    %v5806 = vsub.f32 1.0, %v5805
    %v5807 = vmul.f32 %v5804, %v5806
    %v5808 = vadd.f32 %v5804, %v5807
    %vm5809 = vweird.f32 %v5534
    %vm5810 = vweird.f32 %v5804
    %vm5811 = vmor %vm5809, %vm5810
    %v5812 = vsel %vm5811, %v5804, %v5808
    %v5813 = vand.u32 2147483647, %v5534
    %vm5814 = vcmp.eq.f32.partialorder %v5813, 8.507059e+37
    %v5815 = vand.u32 %v5534, 2147483648
    %v5816 = vor.u32 1.1754944e-38, %v5815
    %v5817 = vsel %vm5814, %v5816, %v5812
    %v5818 = vmul.f32 1.0, %v5817
    %v5819 = vrcp.pop %v5535
    %v5820 = vmul.f32 %v5535, %v5819
    %v5821 = vsub.f32 1.0, %v5820
    %v5822 = vmul.f32 %v5819, %v5821
    %v5823 = vadd.f32 %v5819, %v5822
    %vm5824 = vweird.f32 %v5535
    %vm5825 = vweird.f32 %v5819
    %vm5826 = vmor %vm5824, %vm5825
    %v5827 = vsel %vm5826, %v5819, %v5823
    %v5828 = vand.u32 2147483647, %v5535
    %vm5829 = vcmp.eq.f32.partialorder %v5828, 8.507059e+37
    %v5830 = vand.u32 %v5535, 2147483648
    %v5831 = vor.u32 1.1754944e-38, %v5830
    %v5832 = vsel %vm5829, %v5831, %v5827
    %v5833 = vmul.f32 1.0, %v5832
    %v5834 = vrcp.pop %v5536
    %v5835 = vmul.f32 %v5536, %v5834
    %v5836 = vsub.f32 1.0, %v5835
    %v5837 = vmul.f32 %v5834, %v5836
    %v5838 = vadd.f32 %v5834, %v5837
    %vm5839 = vweird.f32 %v5536
    %vm5840 = vweird.f32 %v5834
    %vm5841 = vmor %vm5839, %vm5840
    %v5842 = vsel %vm5841, %v5834, %v5838
    %v5843 = vand.u32 2147483647, %v5536
    %vm5844 = vcmp.eq.f32.partialorder %v5843, 8.507059e+37
    %v5845 = vand.u32 %v5536, 2147483648
    %v5846 = vor.u32 1.1754944e-38, %v5845
    %v5847 = vsel %vm5844, %v5846, %v5842
    %v5848 = vmul.f32 1.0, %v5847
    %v5849 = vrcp.pop %v5537
    %v5850 = vmul.f32 %v5537, %v5849
    %v5851 = vsub.f32 1.0, %v5850
    %v5852 = vmul.f32 %v5849, %v5851
    %v5853 = vadd.f32 %v5849, %v5852
    %vm5854 = vweird.f32 %v5537
    %vm5855 = vweird.f32 %v5849
    %vm5856 = vmor %vm5854, %vm5855
    %v5857 = vsel %vm5856, %v5849, %v5853
    %v5858 = vand.u32 2147483647, %v5537
    %vm5859 = vcmp.eq.f32.partialorder %v5858, 8.507059e+37
    %v5860 = vand.u32 %v5537, 2147483648
    %v5861 = vor.u32 1.1754944e-38, %v5860
    %v5862 = vsel %vm5859, %v5861, %v5857
    %v5863 = vmul.f32 1.0, %v5862
    %v5864 = vrcp.pop %v5538
    %v5865 = vmul.f32 %v5538, %v5864
    %v5866 = vsub.f32 1.0, %v5865
    %v5867 = vmul.f32 %v5864, %v5866
    %v5868 = vadd.f32 %v5864, %v5867
    %vm5869 = vweird.f32 %v5538
    %vm5870 = vweird.f32 %v5864
    %vm5871 = vmor %vm5869, %vm5870
    %v5872 = vsel %vm5871, %v5864, %v5868
    %v5873 = vand.u32 2147483647, %v5538
    %vm5874 = vcmp.eq.f32.partialorder %v5873, 8.507059e+37
    %v5875 = vand.u32 %v5538, 2147483648
    %v5876 = vor.u32 1.1754944e-38, %v5875
    %v5877 = vsel %vm5874, %v5876, %v5872
    %v5878 = vmul.f32 1.0, %v5877
    %v5879 = vrcp.pop %v5539
    %v5880 = vmul.f32 %v5539, %v5879
    %v5881 = vsub.f32 1.0, %v5880
    %v5882 = vmul.f32 %v5879, %v5881
    %v5883 = vadd.f32 %v5879, %v5882
    %vm5884 = vweird.f32 %v5539
    %vm5885 = vweird.f32 %v5879
    %vm5886 = vmor %vm5884, %vm5885
    %v5887 = vsel %vm5886, %v5879, %v5883
    %v5888 = vand.u32 2147483647, %v5539
    %vm5889 = vcmp.eq.f32.partialorder %v5888, 8.507059e+37
    %v5890 = vand.u32 %v5539, 2147483648
    %v5891 = vor.u32 1.1754944e-38, %v5890
    %v5892 = vsel %vm5889, %v5891, %v5887
    %v5893 = vmul.f32 1.0, %v5892
    %v5894 = vrcp.pop %v5540
    %v5895 = vmul.f32 %v5540, %v5894
    %v5896 = vsub.f32 1.0, %v5895
    %v5897 = vmul.f32 %v5894, %v5896
    %v5898 = vadd.f32 %v5894, %v5897
    %vm5899 = vweird.f32 %v5540
    %vm5900 = vweird.f32 %v5894
    %vm5901 = vmor %vm5899, %vm5900
    %v5902 = vsel %vm5901, %v5894, %v5898
    %v5903 = vand.u32 2147483647, %v5540
    %vm5904 = vcmp.eq.f32.partialorder %v5903, 8.507059e+37
    %v5905 = vand.u32 %v5540, 2147483648
    %v5906 = vor.u32 1.1754944e-38, %v5905
    %v5907 = vsel %vm5904, %v5906, %v5902
    %v5908 = vmul.f32 1.0, %v5907
    %v5909 = vrcp.pop %v5541
    %v5910 = vmul.f32 %v5541, %v5909
    %v5911 = vsub.f32 1.0, %v5910
    %v5912 = vmul.f32 %v5909, %v5911
    %v5913 = vadd.f32 %v5909, %v5912
    %vm5914 = vweird.f32 %v5541
    %vm5915 = vweird.f32 %v5909
    %vm5916 = vmor %vm5914, %vm5915
    %v5917 = vsel %vm5916, %v5909, %v5913
    %v5918 = vand.u32 2147483647, %v5541
    %vm5919 = vcmp.eq.f32.partialorder %v5918, 8.507059e+37
    %v5920 = vand.u32 %v5541, 2147483648
    %v5921 = vor.u32 1.1754944e-38, %v5920
    %v5922 = vsel %vm5919, %v5921, %v5917
    %v5923 = vmul.f32 1.0, %v5922
    %v5924 = vrcp.pop %v5542
    %v5925 = vmul.f32 %v5542, %v5924
    %v5926 = vsub.f32 1.0, %v5925
    %v5927 = vmul.f32 %v5924, %v5926
    %v5928 = vadd.f32 %v5924, %v5927
    %vm5929 = vweird.f32 %v5542
    %vm5930 = vweird.f32 %v5924
    %vm5931 = vmor %vm5929, %vm5930
    %v5932 = vsel %vm5931, %v5924, %v5928
    %v5933 = vand.u32 2147483647, %v5542
    %vm5934 = vcmp.eq.f32.partialorder %v5933, 8.507059e+37
    %v5935 = vand.u32 %v5542, 2147483648
    %v5936 = vor.u32 1.1754944e-38, %v5935
    %v5937 = vsel %vm5934, %v5936, %v5932
    %v5938 = vmul.f32 1.0, %v5937
    %v5939 = vrcp.pop %v5543
    %v5940 = vmul.f32 %v5543, %v5939
    %v5941 = vsub.f32 1.0, %v5940
    %v5942 = vmul.f32 %v5939, %v5941
    %v5943 = vadd.f32 %v5939, %v5942
    %vm5944 = vweird.f32 %v5543
    %vm5945 = vweird.f32 %v5939
    %vm5946 = vmor %vm5944, %vm5945
    %v5947 = vsel %vm5946, %v5939, %v5943
    %v5948 = vand.u32 2147483647, %v5543
    %vm5949 = vcmp.eq.f32.partialorder %v5948, 8.507059e+37
    %v5950 = vand.u32 %v5543, 2147483648
    %v5951 = vor.u32 1.1754944e-38, %v5950
    %v5952 = vsel %vm5949, %v5951, %v5947
    %v5953 = vmul.f32 1.0, %v5952
    %v5954 = vrcp.pop %v5544
    %v5955 = vmul.f32 %v5544, %v5954
    %v5956 = vsub.f32 1.0, %v5955
    %v5957 = vmul.f32 %v5954, %v5956
    %v5958 = vadd.f32 %v5954, %v5957
    %vm5959 = vweird.f32 %v5544
    %vm5960 = vweird.f32 %v5954
    %vm5961 = vmor %vm5959, %vm5960
    %v5962 = vsel %vm5961, %v5954, %v5958
    %v5963 = vand.u32 2147483647, %v5544
    %vm5964 = vcmp.eq.f32.partialorder %v5963, 8.507059e+37
    %v5965 = vand.u32 %v5544, 2147483648
    %v5966 = vor.u32 1.1754944e-38, %v5965
    %v5967 = vsel %vm5964, %v5966, %v5962
    %v5968 = vmul.f32 1.0, %v5967
    %v5969 = vrcp.pop %v5545
    %v5970 = vmul.f32 %v5545, %v5969
    %v5971 = vsub.f32 1.0, %v5970
    %v5972 = vmul.f32 %v5969, %v5971
    %v5973 = vadd.f32 %v5969, %v5972
    %vm5974 = vweird.f32 %v5545
    %vm5975 = vweird.f32 %v5969
    %vm5976 = vmor %vm5974, %vm5975
    %v5977 = vsel %vm5976, %v5969, %v5973
    %v5978 = vand.u32 2147483647, %v5545
    %vm5979 = vcmp.eq.f32.partialorder %v5978, 8.507059e+37
    %v5980 = vand.u32 %v5545, 2147483648
    %v5981 = vor.u32 1.1754944e-38, %v5980
    %v5982 = vsel %vm5979, %v5981, %v5977
    %v5983 = vmul.f32 1.0, %v5982
    %v5984 = vrcp.pop %v5546
    %v5985 = vmul.f32 %v5546, %v5984
    %v5986 = vsub.f32 1.0, %v5985
    %v5987 = vmul.f32 %v5984, %v5986
    %v5988 = vadd.f32 %v5984, %v5987
    %vm5989 = vweird.f32 %v5546
    %vm5990 = vweird.f32 %v5984
    %vm5991 = vmor %vm5989, %vm5990
    %v5992 = vsel %vm5991, %v5984, %v5988
    %v5993 = vand.u32 2147483647, %v5546
    %vm5994 = vcmp.eq.f32.partialorder %v5993, 8.507059e+37
    %v5995 = vand.u32 %v5546, 2147483648
    %v5996 = vor.u32 1.1754944e-38, %v5995
    %v5997 = vsel %vm5994, %v5996, %v5992
    %v5998 = vmul.f32 1.0, %v5997
    %v5999 = vrcp.pop %v5547
    %v6000 = vmul.f32 %v5547, %v5999
    %v6001 = vsub.f32 1.0, %v6000
    %v6002 = vmul.f32 %v5999, %v6001
    %v6003 = vadd.f32 %v5999, %v6002
    %vm6004 = vweird.f32 %v5547
    %vm6005 = vweird.f32 %v5999
    %vm6006 = vmor %vm6004, %vm6005
    %v6007 = vsel %vm6006, %v5999, %v6003
    %v6008 = vand.u32 2147483647, %v5547
    %vm6009 = vcmp.eq.f32.partialorder %v6008, 8.507059e+37
    %v6010 = vand.u32 %v5547, 2147483648
    %v6011 = vor.u32 1.1754944e-38, %v6010
    %v6012 = vsel %vm6009, %v6011, %v6007
    %v6013 = vmul.f32 1.0, %v6012
    %v6014 = vrcp.pop %v5548
    %v6015 = vmul.f32 %v5548, %v6014
    %v6016 = vsub.f32 1.0, %v6015
    %v6017 = vmul.f32 %v6014, %v6016
    %v6018 = vadd.f32 %v6014, %v6017
    %vm6019 = vweird.f32 %v5548
    %vm6020 = vweird.f32 %v6014
    %vm6021 = vmor %vm6019, %vm6020
    %v6022 = vsel %vm6021, %v6014, %v6018
    %v6023 = vand.u32 2147483647, %v5548
    %vm6024 = vcmp.eq.f32.partialorder %v6023, 8.507059e+37
    %v6025 = vand.u32 %v5548, 2147483648
    %v6026 = vor.u32 1.1754944e-38, %v6025
    %v6027 = vsel %vm6024, %v6026, %v6022
    %v6028 = vmul.f32 1.0, %v6027
    %v6029 = vmul.f32 %v5389, %v5563
    %v6030 = vmul.f32 %v5390, %v5578
    %v6031 = vmul.f32 %v5391, %v5593
    %v6032 = vmul.f32 %v5392, %v5608
    %v6033 = vmul.f32 %v5393, %v5623
    %v6034 = vmul.f32 %v5394, %v5638
    %v6035 = vmul.f32 %v5395, %v5653
    %v6036 = vmul.f32 %v5396, %v5668
    %v6037 = vmul.f32 %v5397, %v5683
    %v6038 = vmul.f32 %v5398, %v5698
    %v6039 = vmul.f32 %v5399, %v5713
    %v6040 = vmul.f32 %v5400, %v5728
    %v6041 = vmul.f32 %v5401, %v5743
    %v6042 = vmul.f32 %v5402, %v5758
    %v6043 = vmul.f32 %v5403, %v5773
    %v6044 = vmul.f32 %v5404, %v5788
    %v6045 = vmul.f32 %v5405, %v5803
    %v6046 = vmul.f32 %v5406, %v5818
    %v6047 = vmul.f32 %v5407, %v5833
    %v6048 = vmul.f32 %v5408, %v5848
    %v6049 = vmul.f32 %v5409, %v5863
    %v6050 = vmul.f32 %v5410, %v5878
    %v6051 = vmul.f32 %v5411, %v5893
    %v6052 = vmul.f32 %v5412, %v5908
    %v6053 = vmul.f32 %v5413, %v5923
    %v6054 = vmul.f32 %v5414, %v5938
    %v6055 = vmul.f32 %v5415, %v5953
    %v6056 = vmul.f32 %v5416, %v5968
    %v6057 = vmul.f32 %v5417, %v5983
    %v6058 = vmul.f32 %v5418, %v5998
    %v6059 = vmul.f32 %v5419, %v6013
    %v6060 = vmul.f32 %v5420, %v6028
    %v6061 = vpack.c.bf16 %v6031, %v6029
    %v6062 = vpack.c.bf16 %v6032, %v6030
    %v6063 = vpack.c.bf16 %v6035, %v6033
    %v6064 = vpack.c.bf16 %v6036, %v6034
    %v6065 = vpack.c.bf16 %v6039, %v6037
    %v6066 = vpack.c.bf16 %v6040, %v6038
    %v6067 = vpack.c.bf16 %v6043, %v6041
    %v6068 = vpack.c.bf16 %v6044, %v6042
    %v6069 = vpack.c.bf16 %v6047, %v6045
    %v6070 = vpack.c.bf16 %v6048, %v6046
    %v6071 = vpack.c.bf16 %v6051, %v6049
    %v6072 = vpack.c.bf16 %v6052, %v6050
    %v6073 = vpack.c.bf16 %v6055, %v6053
    %v6074 = vpack.c.bf16 %v6056, %v6054
    %v6075 = vpack.c.bf16 %v6059, %v6057
    %v6076 = vpack.c.bf16 %v6060, %v6058
    %v6077 = vld [vmem:[%s5] sm:$0x3]
    %v6078 = vld [vmem:[#allocation5] sm:$0x1]
    %6080 = vset.pattern.permute.xlu0 0
    %6081 = vperm.xlu0 %6080, %v6078
    %v6082 = vpop.permute.xlu0 %6081
    %v6084 = vperm.slane %v6082, 0
    %6086 = vst [vmem:[#allocation1] ss:$9 sm:$0xff] %v6077
    %v6087 = vld [vmem:[#allocation1] sm:$0xff]
    %v6088 = vld [vmem:[#allocation1 + $0x9] sm:$0xff]
    %6091 = vmatpush.bf16.xpose.msra.mxu0 %v6075
    %6092 = vmatpush.bf16.xpose.msra.mxu0 %v6073
    %6093 = vmatpush.bf16.xpose.msra.mxu0 %v6071
    %6094 = vmatpush.bf16.xpose.msra.mxu0 %v6069
    %6095 = vmatpush.bf16.xpose.msra.mxu0 %v6067
    %6096 = vmatpush.bf16.xpose.msra.mxu0 %v6065
    %6097 = vmatpush.bf16.xpose.msra.mxu0 %v6063
    %6098 = vmatpush.bf16.xpose.msra.mxu0 %v6061
    %6099 = vmatmul.bf16.gmra.mxu0 %v6087
    %v6100 = vpop.f32.mrf.mxu0
    %v6101 = vadd.f32 %v6084, %v6100
    %v6102 = vpop.f32.mrf.mxu0
    %6103 = vdwg.mxu0
    %6104 = vmatpush.bf16.xpose.msra.mxu0 %v6076
    %6105 = vmatpush.bf16.xpose.msra.mxu0 %v6074
    %6106 = vmatpush.bf16.xpose.msra.mxu0 %v6072
    %6107 = vmatpush.bf16.xpose.msra.mxu0 %v6070
    %6108 = vmatpush.bf16.xpose.msra.mxu0 %v6068
    %6109 = vmatpush.bf16.xpose.msra.mxu0 %v6066
    %6110 = vmatpush.bf16.xpose.msra.mxu0 %v6064
    %6111 = vmatpush.bf16.xpose.msra.mxu0 %v6062
    %6112 = vmatmul.bf16.gmra.mxu0 %v6088
    %v6113 = vpop.f32.mrf.mxu0
    %v6114 = vadd.f32 %v6101, %v6113
    %v6115 = vpop.f32.mrf.mxu0
    %6116 = vdwg.mxu0
    %6117 = vst [vmem:[#allocation15] sm:$0x1] %v6114
    %v6118 = vlaneseq
    %v6119 = vand.u32 %v6118, 127
    %v6120 = vadd.s32 %v3666, %v6119
    %vm6121 = vcmp.lt.s32.totalorder %v6120, 8
    %v6122 = vsel %vm6121, %v6114, -inf
    %v6123 = vld [vmem:[#allocation2] sm:$0x1]
    %vm6124 = vcmask 1040384
    %v6125 = vsel %vm6124, %v6122, -inf
    %6126 = vmax.xlane.f32.xlu0 %v6125
    %v6127 = vpop.xlane.xlu0 %6126
    %v6128 = vmax.f32 %v6123, %v6127
    %v6129 = vsub.f32 %v6123, %v6128
    %v6130 = vmul.f32 %v6129, 1.442695
    %v6131 = vpow.pop %v6130
    %6133 = vset.pattern.permute.xlu0 0
    %6134 = vperm.xlu0 %6133, %v6128
    %v6135 = vpop.permute.xlu0 %6134
    %v6137 = vperm.slane %v6135, 0
    %v6138 = vsub.f32 %v6122, %v6137
    %v6139 = vmul.f32 %v6138, 1.442695
    %v6140 = vpow.pop %v6139
    %v6141 = vld [vmem:[#allocation3] sm:$0x1]
    %v6142 = vmul.f32 %v6131, %v6141
    %v6143 = vsel %vm6124, %v6140, 0.0
    %6144 = vadd.xlane.f32.xlu0 %v6143
    %v6145 = vpop.xlane.xlu0 %6144
    %v6146 = vadd.f32 %v6142, %v6145
    %vm6147 = vcmask 0
    %6148 = vst.msk [vmem:[#allocation3] sm:$0x1] %vm6147, %v6146
    %v6149 = vld [vmem:[#allocation4] sm:$0xf]
    %6151 = vset.pattern.permute.xlu0 0
    %6152 = vperm.xlu0 %6151, %v6131
    %v6153 = vpop.permute.xlu0 %6152
    %v6155 = vperm.slane %v6153, 0
    %v6156 = vmul.f32 %v6155, %v6149
    %v6157 = vpack.c.bf16 %v6140, %v6140
    %6158 = vmatpush.bf16.msra.mxu0 %v3823
    %6159 = vmatpush.bf16.msra.mxu0 %v3819
    %6160 = vmatpush.bf16.msra.mxu0 %v3815
    %6161 = vmatpush.bf16.msra.mxu0 %v3811
    %6162 = vmatpush.bf16.msra.mxu0 %v3807
    %6163 = vmatpush.bf16.msra.mxu0 %v3803
    %6164 = vmatpush.bf16.msra.mxu0 %v3799
    %6165 = vmatpush.bf16.msra.mxu0 %v3795
    %6166 = vmatmul.bf16.gmra.mxu0 %v6157
    %v6167 = vpop.f32.mrf.mxu0
    %v6168 = vadd.f32 0.0, %v6167
    %v6169 = vpop.f32.mrf.mxu0
    %6170 = vdwg.mxu0
    %6171 = vmatpush.bf16.msra.mxu0 %v3824
    %6172 = vmatpush.bf16.msra.mxu0 %v3820
    %6173 = vmatpush.bf16.msra.mxu0 %v3816
    %6174 = vmatpush.bf16.msra.mxu0 %v3812
    %6175 = vmatpush.bf16.msra.mxu0 %v3808
    %6176 = vmatpush.bf16.msra.mxu0 %v3804
    %6177 = vmatpush.bf16.msra.mxu0 %v3800
    %6178 = vmatpush.bf16.msra.mxu0 %v3796
    %6179 = vmatmul.bf16.gmra.mxu0 %v6157
    %v6180 = vpop.f32.mrf.mxu0
    %v6181 = vadd.f32 0.0, %v6180
    %v6182 = vpop.f32.mrf.mxu0
    %6183 = vdwg.mxu0
    %6184 = vmatpush.bf16.msra.mxu0 %v3825
    %6185 = vmatpush.bf16.msra.mxu0 %v3821
    %6186 = vmatpush.bf16.msra.mxu0 %v3817
    %6187 = vmatpush.bf16.msra.mxu0 %v3813
    %6188 = vmatpush.bf16.msra.mxu0 %v3809
    %6189 = vmatpush.bf16.msra.mxu0 %v3805
    %6190 = vmatpush.bf16.msra.mxu0 %v3801
    %6191 = vmatpush.bf16.msra.mxu0 %v3797
    %6192 = vmatmul.bf16.gmra.mxu0 %v6157
    %v6193 = vpop.f32.mrf.mxu0
    %v6194 = vadd.f32 0.0, %v6193
    %v6195 = vpop.f32.mrf.mxu0
    %6196 = vdwg.mxu0
    %6197 = vmatpush.bf16.msra.mxu0 %v3826
    %6198 = vmatpush.bf16.msra.mxu0 %v3822
    %6199 = vmatpush.bf16.msra.mxu0 %v3818
    %6200 = vmatpush.bf16.msra.mxu0 %v3814
    %6201 = vmatpush.bf16.msra.mxu0 %v3810
    %6202 = vmatpush.bf16.msra.mxu0 %v3806
    %6203 = vmatpush.bf16.msra.mxu0 %v3802
    %6204 = vmatpush.bf16.msra.mxu0 %v3798
    %6205 = vmatmul.bf16.gmra.mxu0 %v6157
    %v6206 = vpop.f32.mrf.mxu0
    %v6207 = vadd.f32 0.0, %v6206
    %v6208 = vpop.f32.mrf.mxu0
    %6209 = vdwg.mxu0
    %v6214 = vrot.slane %v6181, 7
    %v6215 = vrot.slane %v6194, 6
    %v6216 = vrot.slane %v6207, 5
    %v6217 = vsel %vm6124, %v6168, %v6214
    %vm6218 = vcmask 1042434
    %v6219 = vsel %vm6218, %v6215, %v6216
    %vm6220 = vcmask 1041408
    %v6221 = vsel %vm6220, %v6217, %v6219
    %v6223 = vadd.f32 %v6156, %v6221
    %v6224 = vlaneseq
    %vm6225 = vcmp.ge.s32.totalorder %v6224, 0
    %vm6226 = vcmp.lt.s32.totalorder %v6224, 512
    %vm6227 = vmand %vm6225, %vm6226
    %6228 = vst.msk [vmem:[#allocation4] sm:$0xf] %vm6227, %v6223
    %6229 = vst.msk [vmem:[#allocation2] sm:$0x1] %vm6147, %v6128
    // Predicated region
    $region50: #{edg_sb_forward.1} parent=1 // pred_check
      %p6230 = pneg %p74
    $region51: #{edg_sb_forward.1} parent=1 // pred_check_branch
      %6232 = sbr.rel (%p6230) target = $region53
    $region52: #{edg_sb_forward.1} parent=1 // pred_region
      %v6233 = vld [vmem:[#allocation4] sm:$0xf]
      %v6234 = vld [vmem:[#allocation3] sm:$0x1]
      %6236 = vset.pattern.permute.xlu0 0
      %6237 = vperm.xlu0 %6236, %v6234
      %v6238 = vpop.permute.xlu0 %6237
      %v6240 = vperm.slane %v6238, 0
      %v6241 = vrcp.pop %v6240
      %v6242 = vmul.f32 %v6240, %v6241
      %v6243 = vsub.f32 1.0, %v6242
      %v6244 = vmul.f32 %v6241, %v6243
      %v6245 = vadd.f32 %v6241, %v6244
      %vm6246 = vweird.f32 %v6240
      %vm6247 = vweird.f32 %v6241
      %vm6248 = vmor %vm6246, %vm6247
      %v6249 = vsel %vm6248, %v6241, %v6245
      %v6250 = vand.u32 2147483647, %v6240
      %vm6251 = vcmp.eq.f32.partialorder %v6250, 8.507059e+37
      %v6252 = vand.u32 %v6240, 2147483648
      %v6253 = vor.u32 1.1754944e-38, %v6252
      %v6254 = vsel %vm6251, %v6253, %v6249
      %v6255 = vmul.f32 %v6233, %v6254
      %6256 = vst.msk [vmem:[#allocation17] sm:$0xf] %vm6227, %v6255
      %v6257 = vld [vmem:[%s7] sm:$0xff]
      %v6258 = vld [vmem:[%s7 + $0x8] sm:$0xff]
      %v6259 = vld [vmem:[%s7 + $0x10] sm:$0xff]
      %v6260 = vld [vmem:[%s7 + $0x18] sm:$0xff]
      %v6261 = vld [vmem:[%s7 + $0x20] sm:$0xff]
      %v6262 = vld [vmem:[%s7 + $0x28] sm:$0xff]
      %v6263 = vld [vmem:[%s7 + $0x30] sm:$0xff]
      %v6264 = vld [vmem:[%s7 + $0x38] sm:$0xff]
      %v6265 = vld [vmem:[%s7 + $0x40] sm:$0xff]
      %v6266 = vld [vmem:[%s7 + $0x48] sm:$0xff]
      %v6267 = vld [vmem:[%s7 + $0x50] sm:$0xff]
      %v6268 = vld [vmem:[%s7 + $0x58] sm:$0xff]
      %v6269 = vld [vmem:[%s7 + $0x60] sm:$0xff]
      %v6270 = vld [vmem:[%s7 + $0x68] sm:$0xff]
      %v6271 = vld [vmem:[%s7 + $0x70] sm:$0xff]
      %v6272 = vld [vmem:[%s7 + $0x78] sm:$0xff]
      %v6273 = vld [vmem:[%s7 + $0x80] sm:$0xff]
      %v6274 = vld [vmem:[%s7 + $0x88] sm:$0xff]
      %v6275 = vld [vmem:[%s7 + $0x90] sm:$0xff]
      %v6276 = vld [vmem:[%s7 + $0x98] sm:$0xff]
      %v6277 = vld [vmem:[%s7 + $0xa0] sm:$0xff]
      %v6278 = vld [vmem:[%s7 + $0xa8] sm:$0xff]
      %v6279 = vld [vmem:[%s7 + $0xb0] sm:$0xff]
      %v6280 = vld [vmem:[%s7 + $0xb8] sm:$0xff]
      %v6281 = vld [vmem:[%s7 + $0xc0] sm:$0xff]
      %v6282 = vld [vmem:[%s7 + $0xc8] sm:$0xff]
      %v6283 = vld [vmem:[%s7 + $0xd0] sm:$0xff]
      %v6284 = vld [vmem:[%s7 + $0xd8] sm:$0xff]
      %v6285 = vld [vmem:[%s7 + $0xe0] sm:$0xff]
      %v6286 = vld [vmem:[%s7 + $0xe8] sm:$0xff]
      %v6287 = vld [vmem:[%s7 + $0xf0] sm:$0xff]
      %v6288 = vld [vmem:[%s7 + $0xf8] sm:$0xff]
      %v6289 = vld [vmem:[%s7 + $0x100] sm:$0xff]
      %v6290 = vld [vmem:[%s7 + $0x108] sm:$0xff]
      %v6291 = vld [vmem:[%s7 + $0x110] sm:$0xff]
      %v6292 = vld [vmem:[%s7 + $0x118] sm:$0xff]
      %v6293 = vld [vmem:[%s7 + $0x120] sm:$0xff]
      %v6294 = vld [vmem:[%s7 + $0x128] sm:$0xff]
      %v6295 = vld [vmem:[%s7 + $0x130] sm:$0xff]
      %v6296 = vld [vmem:[%s7 + $0x138] sm:$0xff]
      %v6297 = vld [vmem:[%s7 + $0x140] sm:$0xff]
      %v6298 = vld [vmem:[%s7 + $0x148] sm:$0xff]
      %v6299 = vld [vmem:[%s7 + $0x150] sm:$0xff]
      %v6300 = vld [vmem:[%s7 + $0x158] sm:$0xff]
      %v6301 = vld [vmem:[%s7 + $0x160] sm:$0xff]
      %v6302 = vld [vmem:[%s7 + $0x168] sm:$0xff]
      %v6303 = vld [vmem:[%s7 + $0x170] sm:$0xff]
      %v6304 = vld [vmem:[%s7 + $0x178] sm:$0xff]
      %v6305 = vld [vmem:[%s7 + $0x180] sm:$0xff]
      %v6306 = vld [vmem:[%s7 + $0x188] sm:$0xff]
      %v6307 = vld [vmem:[%s7 + $0x190] sm:$0xff]
      %v6308 = vld [vmem:[%s7 + $0x198] sm:$0xff]
      %v6309 = vld [vmem:[%s7 + $0x1a0] sm:$0xff]
      %v6310 = vld [vmem:[%s7 + $0x1a8] sm:$0xff]
      %v6311 = vld [vmem:[%s7 + $0x1b0] sm:$0xff]
      %v6312 = vld [vmem:[%s7 + $0x1b8] sm:$0xff]
      %v6313 = vld [vmem:[%s7 + $0x1c0] sm:$0xff]
      %v6314 = vld [vmem:[%s7 + $0x1c8] sm:$0xff]
      %v6315 = vld [vmem:[%s7 + $0x1d0] sm:$0xff]
      %v6316 = vld [vmem:[%s7 + $0x1d8] sm:$0xff]
      %v6317 = vld [vmem:[%s7 + $0x1e0] sm:$0xff]
      %v6318 = vld [vmem:[%s7 + $0x1e8] sm:$0xff]
      %v6319 = vld [vmem:[%s7 + $0x1f0] sm:$0xff]
      %v6320 = vld [vmem:[%s7 + $0x1f8] sm:$0xff]
      %v6321 = vld [vmem:[%s8] sm:$0x1]
      %v6323 = vperm.slane %v6255, 0
      %v6324 = vperm.slane %v6255, 1
      %v6325 = vperm.slane %v6255, 2
      %v6326 = vperm.slane %v6255, 3
      %6331 = vmatpush.msra.mxu0 %v6272
      %6332 = vmatpush.msra.mxu0 %v6271
      %6333 = vmatpush.msra.mxu0 %v6270
      %6334 = vmatpush.msra.mxu0 %v6269
      %6335 = vmatpush.msra.mxu0 %v6268
      %6336 = vmatpush.msra.mxu0 %v6267
      %6337 = vmatpush.msra.mxu0 %v6266
      %6338 = vmatpush.msra.mxu0 %v6265
      %6339 = vmatpush.msra.mxu0 %v6264
      %6340 = vmatpush.msra.mxu0 %v6263
      %6341 = vmatpush.msra.mxu0 %v6262
      %6342 = vmatpush.msra.mxu0 %v6261
      %6343 = vmatpush.msra.mxu0 %v6260
      %6344 = vmatpush.msra.mxu0 %v6259
      %6345 = vmatpush.msra.mxu0 %v6258
      %6346 = vmatpush.msra.mxu0 %v6257
      %6347 = vmatmul.f32.gmra.mxu0 %v6323
      %v6348 = vpop.f32.mrf.mxu0
      %v6349 = vadd.f32 %v6321, %v6348
      %6350 = vdwg.mxu0
      %6351 = vmatpush.msra.mxu0 %v6288
      %6352 = vmatpush.msra.mxu0 %v6287
      %6353 = vmatpush.msra.mxu0 %v6286
      %6354 = vmatpush.msra.mxu0 %v6285
      %6355 = vmatpush.msra.mxu0 %v6284
      %6356 = vmatpush.msra.mxu0 %v6283
      %6357 = vmatpush.msra.mxu0 %v6282
      %6358 = vmatpush.msra.mxu0 %v6281
      %6359 = vmatpush.msra.mxu0 %v6280
      %6360 = vmatpush.msra.mxu0 %v6279
      %6361 = vmatpush.msra.mxu0 %v6278
      %6362 = vmatpush.msra.mxu0 %v6277
      %6363 = vmatpush.msra.mxu0 %v6276
      %6364 = vmatpush.msra.mxu0 %v6275
      %6365 = vmatpush.msra.mxu0 %v6274
      %6366 = vmatpush.msra.mxu0 %v6273
      %6367 = vmatmul.f32.gmra.mxu0 %v6324
      %v6368 = vpop.f32.mrf.mxu0
      %v6369 = vadd.f32 %v6349, %v6368
      %6370 = vdwg.mxu0
      %6371 = vmatpush.msra.mxu0 %v6304
      %6372 = vmatpush.msra.mxu0 %v6303
      %6373 = vmatpush.msra.mxu0 %v6302
      %6374 = vmatpush.msra.mxu0 %v6301
      %6375 = vmatpush.msra.mxu0 %v6300
      %6376 = vmatpush.msra.mxu0 %v6299
      %6377 = vmatpush.msra.mxu0 %v6298
      %6378 = vmatpush.msra.mxu0 %v6297
      %6379 = vmatpush.msra.mxu0 %v6296
      %6380 = vmatpush.msra.mxu0 %v6295
      %6381 = vmatpush.msra.mxu0 %v6294
      %6382 = vmatpush.msra.mxu0 %v6293
      %6383 = vmatpush.msra.mxu0 %v6292
      %6384 = vmatpush.msra.mxu0 %v6291
      %6385 = vmatpush.msra.mxu0 %v6290
      %6386 = vmatpush.msra.mxu0 %v6289
      %6387 = vmatmul.f32.gmra.mxu0 %v6325
      %v6388 = vpop.f32.mrf.mxu0
      %v6389 = vadd.f32 %v6369, %v6388
      %6390 = vdwg.mxu0
      %6391 = vmatpush.msra.mxu0 %v6320
      %6392 = vmatpush.msra.mxu0 %v6319
      %6393 = vmatpush.msra.mxu0 %v6318
      %6394 = vmatpush.msra.mxu0 %v6317
      %6395 = vmatpush.msra.mxu0 %v6316
      %6396 = vmatpush.msra.mxu0 %v6315
      %6397 = vmatpush.msra.mxu0 %v6314
      %6398 = vmatpush.msra.mxu0 %v6313
      %6399 = vmatpush.msra.mxu0 %v6312
      %6400 = vmatpush.msra.mxu0 %v6311
      %6401 = vmatpush.msra.mxu0 %v6310
      %6402 = vmatpush.msra.mxu0 %v6309
      %6403 = vmatpush.msra.mxu0 %v6308
      %6404 = vmatpush.msra.mxu0 %v6307
      %6405 = vmatpush.msra.mxu0 %v6306
      %6406 = vmatpush.msra.mxu0 %v6305
      %6407 = vmatmul.f32.gmra.mxu0 %v6326
      %v6408 = vpop.f32.mrf.mxu0
      %v6409 = vadd.f32 %v6389, %v6408
      %6410 = vdwg.mxu0
      %vm6411 = vcmask 24576
      %6412 = vst.msk [vmem:[#allocation11] sm:$0x1] %vm6411, %v6409
      %v6413 = vsel %vm6411, %v6409, -inf
      %6414 = vmax.xlane.f32.xlu0 %v6413
      %v6415 = vpop.xlane.xlu0 %6414
      %v6416 = vsub.f32 %v6409, %v6415
      %v6417 = vmul.f32 %v6416, 1.442695
      %v6418 = vpow.pop %v6417
      %v6419 = vsel %vm6411, %v6418, 0.0
      %6420 = vadd.xlane.f32.xlu0 %v6419
      %v6421 = vpop.xlane.xlu0 %6420
      %v6422 = vrcp.pop %v6421
      %v6423 = vmul.f32 %v6421, %v6422
      %v6424 = vsub.f32 1.0, %v6423
      %v6425 = vmul.f32 %v6422, %v6424
      %v6426 = vadd.f32 %v6422, %v6425
      %vm6427 = vweird.f32 %v6421
      %vm6428 = vweird.f32 %v6422
      %vm6429 = vmor %vm6427, %vm6428
      %v6430 = vsel %vm6429, %v6422, %v6426
      %v6431 = vand.u32 2147483647, %v6421
      %vm6432 = vcmp.eq.f32.partialorder %v6431, 8.507059e+37
      %v6433 = vand.u32 %v6421, 2147483648
      %v6434 = vor.u32 1.1754944e-38, %v6433
      %v6435 = vsel %vm6432, %v6434, %v6430
      %v6436 = vmul.f32 %v6418, %v6435
      %6437 = vst.msk [vmem:[#allocation12] sm:$0x1] %vm6411, %v6436
      %vm6438 = vcmp.ge.f32.partialorder %v6409, %v6415
      %v6439 = vsel %vm6438, %v6119, 4
      %v6440 = vsel %vm6411, %v6439, 2147483647
      %v6441 = vand.u32 %v6440, 65535
      %v6442 = vshra.s32 %v6440, 16
      %v6443 = vcvt.s32.f32 %v6441
      %v6444 = vcvt.s32.f32 %v6442
      %6445 = vmin.xlane.f32.xlu0 %v6444
      %v6446 = vpop.xlane.xlu0 %6445
      %vm6447 = vcmp.eq.f32.partialorder %v6444, %v6446
      %v6448 = vsel %vm6447, %v6443, inf
      %6449 = vmin.xlane.f32.xlu0 %v6448
      %v6450 = vpop.xlane.xlu0 %6449
      %v6451 = vcvt.f32.s32 %v6450
      %v6452 = vcvt.f32.s32 %v6446
      %v6453 = vshll.u32 %v6452, 16
      %v6454 = vadd.s32 %v6453, %v6451
      %6455 = vst.msk [vmem:[#allocation14] sm:$0x1] %vm6147, %v6454
    $region53: #{edg_sb_forward.1} parent=1 // pred_fallthru
      _
    // Predicated region
    $region54: #{edg_sb_forward.1} parent=1 // pred_check
      _
    $region55: #{edg_sb_forward.1} parent=1 // pred_check_branch
      %6457 = sbr.rel (0) target = $region57
    $region56: #{edg_sb_forward.1} parent=1 // pred_region
      %6459 = vsyncadd [#allocation8], 0
      %s6461 = sshll.u32 [#allocation11], 4
      %s6462 = int_to_ptr.vmem [resolvable:$true] %s6461
      %s6463 = sshll.u32 %s9, 4
      %s6464 = int_to_ptr.hbm [resolvable:$true] %s6463
      %6466 = dma.vmem_to_hbm [thread:$0]  %s6462, 16, %s6464, [#allocation8]
    $region57: #{edg_sb_forward.1} parent=1 // pred_fallthru
      _
    // Predicated region
    $region58: #{edg_sb_forward.1} parent=1 // pred_check
      _
    $region59: #{edg_sb_forward.1} parent=1 // pred_check_branch
      %6468 = sbr.rel (0) target = $region61
    $region60: #{edg_sb_forward.1} parent=1 // pred_region
      %6470 = vsyncadd [#allocation13], 0
      %s6472 = sshll.u32 [#allocation12], 4
      %s6473 = int_to_ptr.vmem [resolvable:$true] %s6472
      %s6474 = sshll.u32 %s10, 4
      %s6475 = int_to_ptr.hbm [resolvable:$true] %s6474
      %6477 = dma.vmem_to_hbm [thread:$0]  %s6473, 16, %s6475, [#allocation13]
    $region61: #{edg_sb_forward.1} parent=1 // pred_fallthru
      _
    // Predicated region
    $region62: #{edg_sb_forward.1} parent=1 // pred_check
      _
    $region63: #{edg_sb_forward.1} parent=1 // pred_check_branch
      %6479 = sbr.rel (0) target = $region65
    $region64: #{edg_sb_forward.1} parent=1 // pred_region
      %6481 = vsyncadd [#allocation13], 0
      %s6483 = sshll.u32 [#allocation14], 4
      %s6484 = int_to_ptr.vmem [resolvable:$true] %s6483
      %s6485 = sshll.u32 %s11, 4
      %s6486 = int_to_ptr.hbm [resolvable:$true] %s6485
      %6488 = dma.vmem_to_hbm [thread:$0]  %s6484, 16, %s6486, [#allocation13]
    $region65: #{edg_sb_forward.1} parent=1 // pred_fallthru
      _
    // Predicated region
    $region66: #{edg_sb_forward.1} parent=1 // pred_check
      _
    $region67: #{edg_sb_forward.1} parent=1 // pred_check_branch
      %6490 = sbr.rel (0) target = $region69
    $region68: #{edg_sb_forward.1} parent=1 // pred_region
      %6492 = vsyncadd [#allocation16], 0
      %s6494 = sshll.u32 [#allocation15], 4
      %s6495 = int_to_ptr.vmem [resolvable:$true] %s6494
      %s6496 = sshll.u32 %s12, 4
      %s6497 = int_to_ptr.hbm [resolvable:$true] %s6496
      %6499 = dma.vmem_to_hbm [thread:$0]  %s6495, 16, %s6497, [#allocation16]
    $region69: #{edg_sb_forward.1} parent=1 // pred_fallthru
      _
    // Predicated region
    $region70: #{edg_sb_forward.1} parent=1 // pred_check
      _
    $region71: #{edg_sb_forward.1} parent=1 // pred_check_branch
      %6501 = sbr.rel (0) target = $region73
    $region72: #{edg_sb_forward.1} parent=1 // pred_region
      %6503 = vsyncadd [#allocation16], 0
      %s6505 = sshll.u32 [#allocation17], 4
      %s6506 = int_to_ptr.vmem [resolvable:$true] %s6505
      %s6507 = sshll.u32 %s13, 4
      %s6508 = int_to_ptr.hbm [resolvable:$true] %s6507
      %6510 = dma.vmem_to_hbm [thread:$0]  %s6506, 64, %s6508, [#allocation16]
    $region73: #{edg_sb_forward.1} parent=1 // pred_fallthru
      _
    // Predicated region
    $region74: #{edg_sb_forward.1} parent=1 // pred_check
      _
    $region75: #{edg_sb_forward.1} parent=1 // pred_check_branch
      %6512 = sbr.rel (0) target = $region77
    $region76: #{edg_sb_forward.1} parent=1 // pred_region
      %6514 = dma.done [#allocation8], 16
    $region77: #{edg_sb_forward.1} parent=1 // pred_fallthru
      _
    // Predicated region
    $region78: #{edg_sb_forward.1} parent=1 // pred_check
      _
    $region79: #{edg_sb_forward.1} parent=1 // pred_check_branch
      %6516 = sbr.rel (0) target = $region81
    $region80: #{edg_sb_forward.1} parent=1 // pred_region
      %6518 = dma.done [#allocation13], 16
    $region81: #{edg_sb_forward.1} parent=1 // pred_fallthru
      _
    // Predicated region
    $region82: #{edg_sb_forward.1} parent=1 // pred_check
      _
    $region83: #{edg_sb_forward.1} parent=1 // pred_check_branch
      %6520 = sbr.rel (0) target = $region85
    $region84: #{edg_sb_forward.1} parent=1 // pred_region
      %6522 = dma.done [#allocation13], 16
    $region85: #{edg_sb_forward.1} parent=1 // pred_fallthru
      _
    // Predicated region
    $region86: #{edg_sb_forward.1} parent=1 // pred_check
      _
    $region87: #{edg_sb_forward.1} parent=1 // pred_check_branch
      %6524 = sbr.rel (0) target = $region89
    $region88: #{edg_sb_forward.1} parent=1 // pred_region
      %6526 = dma.done [#allocation16], 16
    $region89: #{edg_sb_forward.1} parent=1 // pred_fallthru
      _
    // Predicated region
    $region90: #{edg_sb_forward.1} parent=1 // pred_check
      _
    $region91: #{edg_sb_forward.1} parent=1 // pred_check_branch
      %6528 = sbr.rel (0) target = $region93
    $region92: #{edg_sb_forward.1} parent=1 // pred_region
      %6530 = dma.done [#allocation16], 64
    $region93: #{edg_sb_forward.1} parent=1 // pred_fallthru
      _
    %6531 = vsyncpa [#allocation7], 1
    %6532 = vsyncpa [#allocation10], 1
    %6533 = vsyncpa [#allocation8], 1
    %6534 = vsyncpa [#allocation13], 1
    %6535 = vsyncpa [#allocation16], 1

</llo_original>
